<compile_context>
chip_gen: v7x
topology: tpu7x:2x2x1
jax: 0.10.0
libtpu: 0.0.40
codegen_flags: <defaults>
</compile_context>

<pallas_src>
import functools

import jax
import jax.numpy as jnp
import numpy as np
from jax.experimental import pallas as pl
from jax.experimental.pallas import tpu as pltpu


# ---------------------------------------------------------------------------
# small helpers
# ---------------------------------------------------------------------------
def _cdiv(a, b):
    return -(-a // b)


def _round_up(a, b):
    return _cdiv(a, b) * b


def _vmem_limit_bytes():
    """3/4 of physical VMEM, capped at 96 MiB (v5e/v6e: 96 MiB, v7x: 48 MiB)."""
    cap = 128 * 1024 * 1024
    try:
        info_cap = int(pltpu.get_tpu_info().vmem_capacity_bytes)
        if info_cap > 0:
            cap = info_cap
    except Exception:
        pass
    return int(min(96 * 1024 * 1024, cap * 3 // 4))


def _compiler_params(n_grid_axes):
    return pltpu.CompilerParams(
        dimension_semantics=("parallel",) * n_grid_axes,
        vmem_limit_bytes=_vmem_limit_bytes())


# Per-grid-step working-set target: stays well under 48 MiB even with
# double-buffered I/O, so the same tiling also fits v7x's 64 MiB VMEM.
_TILE_BUDGET_BYTES = 24 * 1024 * 1024


def _pick_tile_rows(total_rows, per_row_bytes, cap=128):
    r = max(1, min(cap, _TILE_BUDGET_BYTES // max(per_row_bytes, 1)))
    if r >= total_rows:
        return total_rows
    return max(8, (r // 8) * 8)


def _apply_act(y, act):
    if act == "relu":
        return jnp.maximum(y, 0.0)
    if act == "leaky_relu":
        # nn.LeakyReLU(0.2): max(y, 0.2*y) == where(y>=0, y, 0.2*y), one VPU op less
        return jnp.maximum(y, 0.2 * y)
    return y


# ---------------------------------------------------------------------------
# host-side space-to-depth + banding (3x3/stride-2 conv -> 2x2 phase conv)
# ---------------------------------------------------------------------------
def _space_to_depth_phase(x_nhwc, out_rows, out_cols):
    """Zero-pad (pad=1 for a 3x3 stride-2 conv) and space-to-depth by 2.

    x: (B, Hc, Wc, C)  ->  (B, out_rows+1, out_cols+1, 4*C)
    phase[b, p, q, (2*rp+cp)*C + c] == x_padded[b, 2p+rp, 2q+cp, c]
    """
    B, Hc, Wc, C = x_nhwc.shape
    R, Q = out_rows + 1, out_cols + 1
    xp = jnp.pad(x_nhwc,
                 ((0, 0), (1, 2 * R - 1 - Hc), (1, 2 * Q - 1 - Wc), (0, 0)))
    xp = xp.reshape(B, R, 2, Q, 2, C)
    return jnp.transpose(xp, (0, 1, 3, 2, 4, 5)).reshape(B, R, Q, 4 * C)


def _band_rows(x, tr, n_tiles):
    """(B, n*tr+1, Q, C) -> (B, n, tr+1, Q, C); each band carries its own +1
    halo row so the kernel needs a single non-overlapping BlockSpec."""
    return jnp.stack([x[:, t * tr: t * tr + tr + 1] for t in range(n_tiles)],
                     axis=1)


def _fold_3x3_s2_weight(w, scale=1.0):
    """torch (Cout, Cin, 3, 3) -> (16*Cin, Cout) for the 4-tap phase conv,
    taps concatenated along K in the same order as the kernel builds them."""
    cout, cin = int(w.shape[0]), int(w.shape[1])
    w_np = np.asarray(w, np.float32)
    wcat = np.zeros((16 * cin, cout), np.float32)
    for dy in range(3):
        a, rp = dy // 2, dy % 2
        for dx in range(3):
            b, cp = dx // 2, dx % 2
            k0 = ((2 * a + b) * 4 + 2 * rp + cp) * cin
            wcat[k0:k0 + cin, :] = w_np[:, :, dy, dx].T * scale
    return jnp.asarray(wcat)


# ---------------------------------------------------------------------------
# Pallas kernels: fused conv1+conv2 and conv3 (2x2 conv over phase layout)
# ---------------------------------------------------------------------------
def _phase_conv_body(band, w_ref, b_ref, o_ref, act):
    """2x2 stride-1 conv over a phase band.

    band:  (tr+1, wo+1, C4) bf16 (includes the +1 halo row / col)
    w_ref: (4*C4, Cout)  - the four shifted taps concatenated along K
    writes o_ref[0] <- (tr, wo, Cout)
    """
    tr, wo, cout = o_ref.shape[1], o_ref.shape[2], o_ref.shape[3]
    c4 = band.shape[-1]
    # single K = 4*C4 (= 256) MXU matmul instead of 4 dots + 3 f32 adds
    taps = jnp.concatenate(
        [band[a:a + tr, b:b + wo, :] for a in (0, 1) for b in (0, 1)], axis=-1)
    y = jnp.dot(taps.reshape(tr * wo, 4 * c4), w_ref[...],
                preferred_element_type=jnp.float32)
    y = _apply_act(y + b_ref[...], act)
    o_ref[0] = y.reshape(tr, wo, cout).astype(o_ref.dtype)


def _conv12_kernel(band_ref, w1_ref, w2_ref, b2_ref, o_ref, *, act):
    """Fused Conv1x1(coord->16)+act followed by Conv3x3/stride-2 (+act).

    The conv1 bias is folded into an extra ones-channel of the input so that
    zero padding stays exactly zero after the pointwise conv + activation."""
    band = band_ref[0, 0]                                   # (tr+1, wp, 4*3) bf16
    rows, wp, cin = band.shape
    h = jnp.dot(band.reshape(rows * wp, cin), w1_ref[...],
                preferred_element_type=jnp.float32)
    h = _apply_act(h, act).astype(jnp.bfloat16)
    h = h.reshape(rows, wp, w1_ref.shape[1])                 # (tr+1, wp, 64)
    _phase_conv_body(h, w2_ref, b2_ref, o_ref, act)


def _conv3_kernel(band_ref, w_ref, b_ref, o_ref, *, act):
    _phase_conv_body(band_ref[0, 0], w_ref, b_ref, o_ref, act)


def _phase_conv_call(kernel, bands, weights, out_cout, n_tiles, tr, wo):
    B, _, trp1, wp, c = bands.shape
    weight_specs = [pl.BlockSpec(w.shape, lambda b, t: (0, 0)) for w in weights]
    return pl.pallas_call(
        kernel,
        out_shape=jax.ShapeDtypeStruct((B, n_tiles * tr, wo, out_cout),
                                       jnp.bfloat16),
        grid=(B, n_tiles),
        in_specs=[pl.BlockSpec((1, 1, trp1, wp, c),
                               lambda b, t: (b, t, 0, 0, 0))] + weight_specs,
        out_specs=pl.BlockSpec((1, tr, wo, out_cout), lambda b, t: (b, t, 0, 0)),
        compiler_params=_compiler_params(2),
    )(bands, *weights)


# ---------------------------------------------------------------------------
# Pallas kernel: fused surrogate head (Cout=1) + bilinear upsample
# (align_corners=True) + batch_normalize_map
# ---------------------------------------------------------------------------
def _interp_matrix(out_size, in_size):
    """Row-stochastic bilinear interpolation matrix (align_corners=True)."""
    if in_size == 1:
        return jnp.ones((out_size, 1), jnp.float32)
    idx = jnp.arange(out_size, dtype=jnp.float32)
    src = jnp.zeros_like(idx) if out_size == 1 else idx * (in_size - 1) / (out_size - 1)
    lo = jnp.clip(jnp.floor(src).astype(jnp.int32), 0, in_size - 2)
    frac = src - lo.astype(jnp.float32)
    rows = jnp.arange(out_size)
    m = jnp.zeros((out_size, in_size), jnp.float32)
    m = m.at[rows, lo].add(1.0 - frac)
    m = m.at[rows, lo + 1].add(frac)
    return m


def _head_upsample_norm_kernel(img_ref, x_ref, wi_ref, wx_ref, bh_ref,
                               ry_ref, rxt_ref, o_ref):
    ci = img_ref.shape[3]
    c0 = x_ref.shape[3]
    img = img_ref[0].astype(jnp.float32)             # (h4, w4, Ci)
    xf = x_ref[0].astype(jnp.float32)                # (h4, w4, C0)
    wi = wi_ref[...].reshape(1, 1, ci)
    wx = wx_ref[...].reshape(1, 1, c0)
    logits = jnp.sum(img * wi, axis=-1) + jnp.sum(xf * wx, axis=-1) + bh_ref[...]
    # bilinear upsample (align_corners=True) as two matmuls
    y = jnp.dot(ry_ref[...], logits, preferred_element_type=jnp.float32)
    y = jnp.dot(y, rxt_ref[...], preferred_element_type=jnp.float32)
    # batch_normalize_map: per-sample min/max, eps=1e-9; one scalar reciprocal
    mn = jnp.min(y, keepdims=True)
    mx = jnp.max(y, keepdims=True)
    inv = pl.reciprocal(mx - mn + 1e-9, approx=True)
    o_ref[0] = (y - mn) * inv


def pallas_head_upsample_norm(img_ds, x3, w_img, w_x, b_h, out_hw):
    B, h4, w4, ci = img_ds.shape
    c0 = x3.shape[-1]
    H, W = out_hw
    ry = _interp_matrix(H, h4)            # (H, h4)
    rxt = _interp_matrix(W, w4).T         # (w4, W)
    # TODO(synk): for very large H*W on v7x (64 MiB VMEM) the per-sample block
    # should be row-tiled with a separate min/max reduction pass.
    out = pl.pallas_call(
        _head_upsample_norm_kernel,
        out_shape=jax.ShapeDtypeStruct((B, H, W), jnp.float32),
        grid=(B,),
        in_specs=[
            pl.BlockSpec((1, h4, w4, ci), lambda b: (b, 0, 0, 0)),
            pl.BlockSpec((1, h4, w4, c0), lambda b: (b, 0, 0, 0)),
            pl.BlockSpec((1, ci), lambda b: (0, 0)),
            pl.BlockSpec((1, c0), lambda b: (0, 0)),
            pl.BlockSpec((1, 1), lambda b: (0, 0)),
            pl.BlockSpec((H, h4), lambda b: (0, 0)),
            pl.BlockSpec((w4, W), lambda b: (0, 0)),
        ],
        out_specs=pl.BlockSpec((1, H, W), lambda b: (b, 0, 0)),
        compiler_params=_compiler_params(1),
    )(img_ds.astype(jnp.bfloat16), x3,
      w_img.reshape(1, ci).astype(jnp.float32),
      w_x.reshape(1, c0).astype(jnp.float32),
      jnp.reshape(b_h, (1, 1)).astype(jnp.float32), ry, rxt)
    return out.reshape(B, 1, H, W)


# ---------------------------------------------------------------------------
# Model
# ---------------------------------------------------------------------------
class SegNeXtSaliencyPallas:
    def __init__(self, arch_type="b", coord_feature_ch=2, use_leaky_relu=False,
                 seed=0):
        embed_dim0 = {"t": 32, "s": 64, "b": 64, "l": 64}[arch_type]
        self.embed_dim0 = embed_dim0
        self.act = "leaky_relu" if use_leaky_relu else "relu"
        key = jax.random.PRNGKey(seed)
        ks = jax.random.split(key, 4)

        def conv_init(k, cout, cin, kh, kw):
            fan_in = cin * kh * kw
            std = (2.0 / fan_in) ** 0.5
            kw_, kb_ = jax.random.split(k)
            w = jax.random.normal(kw_, (cout, cin, kh, kw), jnp.float32) * std
            b = jax.random.normal(kb_, (cout,), jnp.float32) * 0.01
            return w, b

        # maps_transform: Conv1x1(2->16) act, Conv3x3s2(16->16) act,
        #                 Conv3x3s2(16->embed_dims[0]), ScaleLayer(0.05)
        self.w1, self.b1 = conv_init(ks[0], 16, coord_feature_ch, 1, 1)
        self.w2, self.b2 = conv_init(ks[1], 16, 16, 3, 3)
        self.w3, self.b3 = conv_init(ks[2], embed_dim0, 16, 3, 3)
        # ScaleLayer: abs((0.05 / lr_mult) * lr_mult) with lr_mult = 1
        self.scale = 0.05

        # --- kernel-layout weights -----------------------------------------
        # conv1 bias rides an extra ones-channel (zero padding stays zero after
        # the pointwise conv + activation); block-diag over the 4 phase blocks.
        w1a = np.concatenate(
            [np.asarray(self.w1[:, :, 0, 0], np.float32).T,
             np.asarray(self.b1, np.float32)[None, :]], axis=0)      # (Cin+1, 16)
        self.w1blk = jnp.asarray(np.kron(np.eye(4, dtype=np.float32), w1a),
                                 jnp.bfloat16)                       # (12, 64)
        self.w2cat = _fold_3x3_s2_weight(self.w2).astype(jnp.bfloat16)       # (256,16)
        self.b2f = jnp.asarray(self.b2, jnp.float32).reshape(1, -1)
        self.w3cat = _fold_3x3_s2_weight(self.w3, scale=self.scale
                                         ).astype(jnp.bfloat16)              # (256,64)
        self.b3f = (jnp.asarray(self.b3, jnp.float32) * self.scale).reshape(1, -1)

        # TODO(synk): minimal deterministic surrogate for the mmsegmentation
        # ISCascadeEncoderDecoder (MSCAN-b + LightHamHead): a 1x1 head over the
        # 4x4 avg-pooled image + maps_transform features -> 1 logit at stride 4.
        wh, bh = conv_init(ks[3], 1, 3 + embed_dim0, 1, 1)
        self.w_img = wh[0, :3, 0, 0]          # (3,)
        self.w_x = wh[0, 3:, 0, 0]            # (embed_dim0,)
        self.b_h = bh                         # (1,)

    def __call__(self, image_nchw, coord_features_nchw):
        B, _, H, W = image_nchw.shape
        assert H % 4 == 0 and W % 4 == 0, "surrogate head assumes H, W % 4 == 0"
        img = jnp.transpose(image_nchw, (0, 2, 3, 1))           # NHWC
        cf = jnp.transpose(coord_features_nchw, (0, 2, 3, 1))   # NHWC

        ho1, wo1 = H // 2, W // 2
        ho2, wo2 = H // 4, W // 4
        wo1p, wo2p = _round_up(wo1, 8), _round_up(wo2, 8)

        # --- fused conv1(1x1)+act + conv2(3x3,s2)+act ------------------------
        ones = jnp.ones(cf.shape[:-1] + (1,), cf.dtype)
        cf_aug = jnp.concatenate([cf, ones], axis=-1).astype(jnp.bfloat16)
        per_row1 = (wo1p + 1) * 1280 + wo1p * 1536          # rough VMEM bytes/row
        tr1 = _pick_tile_rows(ho1, per_row1)
        n1 = _cdiv(ho1, tr1)
        phase1 = _space_to_depth_phase(cf_aug, n1 * tr1, wo1p)   # (B,n1*tr1+1,wo1p+1,12)
        bands1 = _band_rows(phase1, tr1, n1)
        conv12 = functools.partial(_conv12_kernel, act=self.act)
        c2 = _phase_conv_call(conv12, bands1,
                              (self.w1blk, self.w2cat, self.b2f),
                              out_cout=16, n_tiles=n1, tr=tr1, wo=wo1p)
        c2 = c2[:, :ho1, :wo1, :]

        # --- conv3(3x3,s2) + folded ScaleLayer(0.05) --------------------------
        # TODO(synk): this host space-to-depth of the 16-channel conv2 output is
        # the one remaining non-kernel rearrangement; writing the phase layout
        # from inside the conv12 kernel needs an in-kernel even/odd column
        # interleave whose tiny-trailing-dim relayout costs more VMEM than it saves.
        per_row2 = (wo2p + 1) * 512 + wo2p * 1536
        tr2 = _pick_tile_rows(ho2, per_row2)
        n2 = _cdiv(ho2, tr2)
        phase2 = _space_to_depth_phase(c2, n2 * tr2, wo2p)       # (B,n2*tr2+1,wo2p+1,64)
        bands2 = _band_rows(phase2, tr2, n2)
        conv3 = functools.partial(_conv3_kernel, act=None)
        x3 = _phase_conv_call(conv3, bands2, (self.w3cat, self.b3f),
                              out_cout=self.embed_dim0, n_tiles=n2, tr=tr2, wo=wo2p)
        x3 = x3[:, :ho2, :wo2, :]

        # --- surrogate encoder_decoder input: 4x4 avg-pooled image ------------
        img_ds = img.reshape(B, ho2, 4, wo2, 4, img.shape[-1]).mean(axis=(2, 4))

        # --- fused head + F.interpolate(bilinear, align_corners=True)
        #     + batch_normalize_map -----------------------------------------
        instances = pallas_head_upsample_norm(img_ds, x3, self.w_img, self.w_x,
                                              self.b_h, (H, W))
        return {"instances": instances}


# ---------------------------------------------------------------------------
# pure-JAX f32 reference of the same forward (correctness check)
# ---------------------------------------------------------------------------
def _ref_forward(model, image_nchw, cf_nchw):
    img = jnp.transpose(image_nchw, (0, 2, 3, 1))
    cf = jnp.transpose(cf_nchw, (0, 2, 3, 1))

    def conv(x, w, b, stride, pad):
        y = jax.lax.conv_general_dilated(
            x, jnp.transpose(w, (2, 3, 1, 0)), (stride, stride),
            [(pad, pad), (pad, pad)],
            dimension_numbers=("NHWC", "HWIO", "NHWC"))
        return y + b

    def act(y):
        if model.act == "leaky_relu":
            return jnp.where(y >= 0, y, 0.2 * y)
        return jnp.maximum(y, 0.0)

    x = act(conv(cf, model.w1, model.b1, 1, 0))
    x = act(conv(x, model.w2, model.b2, 2, 1))
    x = conv(x, model.w3, model.b3, 2, 1) * model.scale

    B, H, W, _ = img.shape
    h4, w4 = x.shape[1], x.shape[2]
    img_ds = img.reshape(B, h4, H // h4, w4, W // w4, 3).mean(axis=(2, 4))
    logits = (jnp.einsum("bhwc,c->bhw", img_ds, model.w_img)
              + jnp.einsum("bhwc,c->bhw", x, model.w_x) + model.b_h[0])
    ry = _interp_matrix(H, h4)
    rx = _interp_matrix(W, w4)
    up = jnp.einsum("Hh,bhw,Ww->bHW", ry, logits, rx)
    mn = up.min(axis=(1, 2), keepdims=True)
    mx = up.max(axis=(1, 2), keepdims=True)
    return ((up - mn) / (mx - mn + 1e-9))[:, None]


if __name__ == "__main__":
    key = jax.random.PRNGKey(0)
    k_img, k_cf = jax.random.split(key)
    B, H, W = 2, 16, 16
    image = jax.random.uniform(k_img, (B, 3, H, W), jnp.float32)
    coord_features = jax.random.normal(k_cf, (B, 2, H, W), jnp.float32)

    model = SegNeXtSaliencyPallas(arch_type="b", coord_feature_ch=2, seed=0)
    fwd = jax.jit(lambda im, cf: model(im, cf)["instances"])
    inst = jax.block_until_ready(fwd(image, coord_features))

    assert inst.shape == (B, 1, H, W), inst.shape
    assert bool(jnp.all(jnp.isfinite(inst)))
    assert float(jnp.min(inst)) >= -1e-2 and float(jnp.max(inst)) <= 1.0 + 5e-2

    # bf16-tolerance check against the pure-JAX f32 reference of the same model
    ref = np.asarray(_ref_forward(model, image, coord_features))
    err = float(np.max(np.abs(ref - np.asarray(inst, np.float32))))
    assert err < 0.1, f"max |pallas - ref| = {err}"
    print("KERNEL_OK")
</pallas_src>

<mosaic_0001>
module attributes {stable_mosaic.version = 11 : i64} {
  func.func private @main(%arg0: i32) attributes {dimension_semantics = [#tpu.dimension_semantics<core_parallel>], iteration_bounds = array<i64: 2>, tpu.core_type = #tpu.core_type<sc_scalar_subcore>, window_params = []} {
    return
  }
}

module attributes {stable_mosaic.version = 11 : i64} {
  func.func private @main(%arg0: i32) attributes {dimension_semantics = [#tpu.dimension_semantics<core_parallel>], iteration_bounds = array<i64: 2>, tpu.core_type = #tpu.core_type<sc_scalar_subcore>, window_params = []} {
    return
  }
}

module attributes {stable_mosaic.version = 11 : i64} {
  func.func @_conv12_kernel(%arg0: i32, %arg1: i32, %arg2: memref<1x1x9x9x12xbf16, #tpu.memory_space<vmem>>, %arg3: memref<12x64xbf16, #tpu.memory_space<vmem>>, %arg4: memref<256x16xbf16, #tpu.memory_space<vmem>>, %arg5: memref<1x16xf32, #tpu.memory_space<vmem>>, %arg6: memref<1x8x8x16xbf16, #tpu.memory_space<vmem>>) attributes {dimension_semantics = [#tpu.dimension_semantics<parallel>, #tpu.dimension_semantics<parallel>], iteration_bounds = array<i64: 2, 1>, scalar_prefetch = 0 : i64, scratch_operands = 0 : i64, tpu.core_type = #tpu.core_type<tc>, window_params = [{transform_indices = @transform_0, window_bounds = array<i64: 1, 1, 9, 9, 12>}, {pipeline_mode = #tpu.pipeline_mode<synchronous>, transform_indices = @transform_1, window_bounds = array<i64: 12, 64>}, {pipeline_mode = #tpu.pipeline_mode<synchronous>, transform_indices = @transform_2, window_bounds = array<i64: 256, 16>}, {pipeline_mode = #tpu.pipeline_mode<synchronous>, transform_indices = @transform_3, window_bounds = array<i64: 1, 16>}, {transform_indices = @transform_4, window_bounds = array<i64: 1, 8, 8, 16>}]} {
    %c0 = arith.constant 0 : index
    %c0_0 = arith.constant 0 : index
    %c0_1 = arith.constant 0 : index
    %c0_2 = arith.constant 0 : index
    %c0_3 = arith.constant 0 : index
    %0 = vector.load %arg2[%c0, %c0_0, %c0_1, %c0_2, %c0_3] : memref<1x1x9x9x12xbf16, #tpu.memory_space<vmem>>, vector<1x1x9x9x12xbf16>
    %1 = vector.shape_cast %0 : vector<1x1x9x9x12xbf16> to vector<9x9x12xbf16>
    %2 = vector.shape_cast %1 : vector<9x9x12xbf16> to vector<81x12xbf16>
    %c0_4 = arith.constant 0 : index
    %c0_5 = arith.constant 0 : index
    %3 = vector.load %arg3[%c0_4, %c0_5] : memref<12x64xbf16, #tpu.memory_space<vmem>>, vector<12x64xbf16>
    %cst = arith.constant dense<0.000000e+00> : vector<81x64xf32>
    %4 = tpu.matmul %2, %3, %cst {dimension_numbers = #tpu.dot_dimension_numbers<[1], [0], [0], [1], [0, 0, 1, 1], [], []>} : vector<81x12xbf16>, vector<12x64xbf16>, vector<81x64xf32> -> vector<81x64xf32>
    %cst_6 = arith.constant 0.000000e+00 : f32
    %5 = vector.broadcast %cst_6 : f32 to vector<81x64xf32>
    %6 = arith.maximumf %4, %5 : vector<81x64xf32>
    %7 = arith.truncf %6 : vector<81x64xf32> to vector<81x64xbf16>
    %8 = vector.shape_cast %7 : vector<81x64xbf16> to vector<9x9x64xbf16>
    %9 = vector.extract_strided_slice %8 {offsets = [0, 0, 0], sizes = [8, 8, 64], strides = [1, 1, 1]} : vector<9x9x64xbf16> to vector<8x8x64xbf16>
    %10 = vector.extract_strided_slice %8 {offsets = [0, 1, 0], sizes = [8, 8, 64], strides = [1, 1, 1]} : vector<9x9x64xbf16> to vector<8x8x64xbf16>
    %11 = vector.extract_strided_slice %8 {offsets = [1, 0, 0], sizes = [8, 8, 64], strides = [1, 1, 1]} : vector<9x9x64xbf16> to vector<8x8x64xbf16>
    %12 = vector.extract_strided_slice %8 {offsets = [1, 1, 0], sizes = [8, 8, 64], strides = [1, 1, 1]} : vector<9x9x64xbf16> to vector<8x8x64xbf16>
    %13 = tpu.concatenate %9, %10, %11, %12 in 2 : vector<8x8x64xbf16>, vector<8x8x64xbf16>, vector<8x8x64xbf16>, vector<8x8x64xbf16> -> vector<8x8x256xbf16>
    %14 = vector.shape_cast %13 : vector<8x8x256xbf16> to vector<64x256xbf16>
    %c0_7 = arith.constant 0 : index
    %c0_8 = arith.constant 0 : index
    %15 = vector.load %arg4[%c0_7, %c0_8] : memref<256x16xbf16, #tpu.memory_space<vmem>>, vector<256x16xbf16>
    %cst_9 = arith.constant dense<0.000000e+00> : vector<64x16xf32>
    %16 = tpu.matmul %14, %15, %cst_9 {dimension_numbers = #tpu.dot_dimension_numbers<[1], [0], [0], [1], [0, 0, 1, 1], [], []>} : vector<64x256xbf16>, vector<256x16xbf16>, vector<64x16xf32> -> vector<64x16xf32>
    %c0_10 = arith.constant 0 : index
    %c0_11 = arith.constant 0 : index
    %17 = vector.load %arg5[%c0_10, %c0_11] : memref<1x16xf32, #tpu.memory_space<vmem>>, vector<1x16xf32>
    %18 = vector.broadcast %17 : vector<1x16xf32> to vector<64x16xf32>
    %19 = arith.addf %16, %18 : vector<64x16xf32>
    %cst_12 = arith.constant 0.000000e+00 : f32
    %20 = vector.broadcast %cst_12 : f32 to vector<64x16xf32>
    %21 = arith.maximumf %19, %20 : vector<64x16xf32>
    %22 = vector.shape_cast %21 : vector<64x16xf32> to vector<8x8x16xf32>
    %23 = arith.truncf %22 : vector<8x8x16xf32> to vector<8x8x16xbf16>
    %c0_13 = arith.constant 0 : index
    %c0_14 = arith.constant 0 : index
    %c0_15 = arith.constant 0 : index
    %c0_16 = arith.constant 0 : index
    %24 = vector.load %arg6[%c0_13, %c0_14, %c0_15, %c0_16] : memref<1x8x8x16xbf16, #tpu.memory_space<vmem>>, vector<1x8x8x16xbf16>
    %25 = vector.shape_cast %24 : vector<1x8x8x16xbf16> to vector<8x8x16xbf16>
    %26 = vector.shape_cast %23 : vector<8x8x16xbf16> to vector<1x8x8x16xbf16>
    tpu.vector_store %arg6[%c0_13, %c0_14, %c0_15, %c0_16], %26 {strides = array<i32>} : memref<1x8x8x16xbf16, #tpu.memory_space<vmem>>, vector<1x8x8x16xbf16>,
    return
  }
  func.func @transform_0(%arg0: i32, %arg1: i32) -> (i32, i32, i32, i32, i32) {
    %c0_i32 = arith.constant 0 : i32
    %c0_i32_0 = arith.constant 0 : i32
    %c0_i32_1 = arith.constant 0 : i32
    %c0_i32_2 = arith.constant 0 : i32
    return %arg0, %arg1, %c0_i32, %c0_i32_0, %c0_i32_1 : i32, i32, i32, i32, i32
  }
  func.func @transform_1(%arg0: i32, %arg1: i32) -> (i32, i32) {
    %c0_i32 = arith.constant 0 : i32
    %c0_i32_0 = arith.constant 0 : i32
    %c0_i32_1 = arith.constant 0 : i32
    return %c0_i32, %c0_i32_0 : i32, i32
  }
  func.func @transform_2(%arg0: i32, %arg1: i32) -> (i32, i32) {
    %c0_i32 = arith.constant 0 : i32
    %c0_i32_0 = arith.constant 0 : i32
    %c0_i32_1 = arith.constant 0 : i32
    return %c0_i32, %c0_i32_0 : i32, i32
  }
  func.func @transform_3(%arg0: i32, %arg1: i32) -> (i32, i32) {
    %c0_i32 = arith.constant 0 : i32
    %c0_i32_0 = arith.constant 0 : i32
    %c0_i32_1 = arith.constant 0 : i32
    return %c0_i32, %c0_i32_0 : i32, i32
  }
  func.func @transform_4(%arg0: i32, %arg1: i32) -> (i32, i32, i32, i32) {
    %c0_i32 = arith.constant 0 : i32
    %c0_i32_0 = arith.constant 0 : i32
    %c0_i32_1 = arith.constant 0 : i32
    return %arg0, %arg1, %c0_i32, %c0_i32_0 : i32, i32, i32, i32
  }
}

module attributes {stable_mosaic.version = 11 : i64} {
  func.func @_conv3_kernel(%arg0: i32, %arg1: i32, %arg2: memref<1x1x5x9x64xbf16, #tpu.memory_space<vmem>>, %arg3: memref<256x64xbf16, #tpu.memory_space<vmem>>, %arg4: memref<1x64xf32, #tpu.memory_space<vmem>>, %arg5: memref<1x4x8x64xbf16, #tpu.memory_space<vmem>>) attributes {dimension_semantics = [#tpu.dimension_semantics<parallel>, #tpu.dimension_semantics<parallel>], iteration_bounds = array<i64: 2, 1>, scalar_prefetch = 0 : i64, scratch_operands = 0 : i64, tpu.core_type = #tpu.core_type<tc>, window_params = [{transform_indices = @transform_0, window_bounds = array<i64: 1, 1, 5, 9, 64>}, {pipeline_mode = #tpu.pipeline_mode<synchronous>, transform_indices = @transform_1, window_bounds = array<i64: 256, 64>}, {pipeline_mode = #tpu.pipeline_mode<synchronous>, transform_indices = @transform_2, window_bounds = array<i64: 1, 64>}, {transform_indices = @transform_3, window_bounds = array<i64: 1, 4, 8, 64>}]} {
    %c0 = arith.constant 0 : index
    %c0_0 = arith.constant 0 : index
    %c0_1 = arith.constant 0 : index
    %c0_2 = arith.constant 0 : index
    %c0_3 = arith.constant 0 : index
    %0 = vector.load %arg2[%c0, %c0_0, %c0_1, %c0_2, %c0_3] : memref<1x1x5x9x64xbf16, #tpu.memory_space<vmem>>, vector<1x1x5x9x64xbf16>
    %1 = vector.shape_cast %0 : vector<1x1x5x9x64xbf16> to vector<5x9x64xbf16>
    %2 = vector.extract_strided_slice %1 {offsets = [0, 0, 0], sizes = [4, 8, 64], strides = [1, 1, 1]} : vector<5x9x64xbf16> to vector<4x8x64xbf16>
    %3 = vector.extract_strided_slice %1 {offsets = [0, 1, 0], sizes = [4, 8, 64], strides = [1, 1, 1]} : vector<5x9x64xbf16> to vector<4x8x64xbf16>
    %4 = vector.extract_strided_slice %1 {offsets = [1, 0, 0], sizes = [4, 8, 64], strides = [1, 1, 1]} : vector<5x9x64xbf16> to vector<4x8x64xbf16>
    %5 = vector.extract_strided_slice %1 {offsets = [1, 1, 0], sizes = [4, 8, 64], strides = [1, 1, 1]} : vector<5x9x64xbf16> to vector<4x8x64xbf16>
    %6 = tpu.concatenate %2, %3, %4, %5 in 2 : vector<4x8x64xbf16>, vector<4x8x64xbf16>, vector<4x8x64xbf16>, vector<4x8x64xbf16> -> vector<4x8x256xbf16>
    %7 = vector.shape_cast %6 : vector<4x8x256xbf16> to vector<32x256xbf16>
    %c0_4 = arith.constant 0 : index
    %c0_5 = arith.constant 0 : index
    %8 = vector.load %arg3[%c0_4, %c0_5] : memref<256x64xbf16, #tpu.memory_space<vmem>>, vector<256x64xbf16>
    %cst = arith.constant dense<0.000000e+00> : vector<32x64xf32>
    %9 = tpu.matmul %7, %8, %cst {dimension_numbers = #tpu.dot_dimension_numbers<[1], [0], [0], [1], [0, 0, 1, 1], [], []>} : vector<32x256xbf16>, vector<256x64xbf16>, vector<32x64xf32> -> vector<32x64xf32>
    %c0_6 = arith.constant 0 : index
    %c0_7 = arith.constant 0 : index
    %10 = vector.load %arg4[%c0_6, %c0_7] : memref<1x64xf32, #tpu.memory_space<vmem>>, vector<1x64xf32>
    %11 = vector.broadcast %10 : vector<1x64xf32> to vector<32x64xf32>
    %12 = arith.addf %9, %11 : vector<32x64xf32>
    %13 = vector.shape_cast %12 : vector<32x64xf32> to vector<4x8x64xf32>
    %14 = arith.truncf %13 : vector<4x8x64xf32> to vector<4x8x64xbf16>
    %c0_8 = arith.constant 0 : index
    %c0_9 = arith.constant 0 : index
    %c0_10 = arith.constant 0 : index
    %c0_11 = arith.constant 0 : index
    %15 = vector.load %arg5[%c0_8, %c0_9, %c0_10, %c0_11] : memref<1x4x8x64xbf16, #tpu.memory_space<vmem>>, vector<1x4x8x64xbf16>
    %16 = vector.shape_cast %15 : vector<1x4x8x64xbf16> to vector<4x8x64xbf16>
    %17 = vector.shape_cast %14 : vector<4x8x64xbf16> to vector<1x4x8x64xbf16>
    tpu.vector_store %arg5[%c0_8, %c0_9, %c0_10, %c0_11], %17 {strides = array<i32>} : memref<1x4x8x64xbf16, #tpu.memory_space<vmem>>, vector<1x4x8x64xbf16>,
    return
  }
  func.func @transform_0(%arg0: i32, %arg1: i32) -> (i32, i32, i32, i32, i32) {
    %c0_i32 = arith.constant 0 : i32
    %c0_i32_0 = arith.constant 0 : i32
    %c0_i32_1 = arith.constant 0 : i32
    %c0_i32_2 = arith.constant 0 : i32
    return %arg0, %arg1, %c0_i32, %c0_i32_0, %c0_i32_1 : i32, i32, i32, i32, i32
  }
  func.func @transform_1(%arg0: i32, %arg1: i32) -> (i32, i32) {
    %c0_i32 = arith.constant 0 : i32
    %c0_i32_0 = arith.constant 0 : i32
    %c0_i32_1 = arith.constant 0 : i32
    return %c0_i32, %c0_i32_0 : i32, i32
  }
  func.func @transform_2(%arg0: i32, %arg1: i32) -> (i32, i32) {
    %c0_i32 = arith.constant 0 : i32
    %c0_i32_0 = arith.constant 0 : i32
    %c0_i32_1 = arith.constant 0 : i32
    return %c0_i32, %c0_i32_0 : i32, i32
  }
  func.func @transform_3(%arg0: i32, %arg1: i32) -> (i32, i32, i32, i32) {
    %c0_i32 = arith.constant 0 : i32
    %c0_i32_0 = arith.constant 0 : i32
    %c0_i32_1 = arith.constant 0 : i32
    return %arg0, %arg1, %c0_i32, %c0_i32_0 : i32, i32, i32, i32
  }
}

module attributes {stable_mosaic.version = 11 : i64} {
  func.func @_head_upsample_norm_kernel(%arg0: i32, %arg1: memref<1x4x4x3xbf16, #tpu.memory_space<vmem>>, %arg2: memref<1x4x4x64xbf16, #tpu.memory_space<vmem>>, %arg3: memref<1x3xf32, #tpu.memory_space<vmem>>, %arg4: memref<1x64xf32, #tpu.memory_space<vmem>>, %arg5: memref<1x1xf32, #tpu.memory_space<vmem>>, %arg6: memref<16x4xf32, #tpu.memory_space<vmem>>, %arg7: memref<4x16xf32, #tpu.memory_space<vmem>>, %arg8: memref<1x16x16xf32, #tpu.memory_space<vmem>>) attributes {dimension_semantics = [#tpu.dimension_semantics<parallel>], iteration_bounds = array<i64: 2>, scalar_prefetch = 0 : i64, scratch_operands = 0 : i64, tpu.core_type = #tpu.core_type<tc>, window_params = [{transform_indices = @transform_0, window_bounds = array<i64: 1, 4, 4, 3>}, {transform_indices = @transform_1, window_bounds = array<i64: 1, 4, 4, 64>}, {pipeline_mode = #tpu.pipeline_mode<synchronous>, transform_indices = @transform_2, window_bounds = array<i64: 1, 3>}, {pipeline_mode = #tpu.pipeline_mode<synchronous>, transform_indices = @transform_3, window_bounds = array<i64: 1, 64>}, {pipeline_mode = #tpu.pipeline_mode<synchronous>, transform_indices = @transform_4, window_bounds = array<i64: 1, 1>}, {pipeline_mode = #tpu.pipeline_mode<synchronous>, transform_indices = @transform_5, window_bounds = array<i64: 16, 4>}, {pipeline_mode = #tpu.pipeline_mode<synchronous>, transform_indices = @transform_6, window_bounds = array<i64: 4, 16>}, {transform_indices = @transform_7, window_bounds = array<i64: 1, 16, 16>}]} {
    %c0 = arith.constant 0 : index
    %c0_0 = arith.constant 0 : index
    %c0_1 = arith.constant 0 : index
    %c0_2 = arith.constant 0 : index
    %0 = vector.load %arg1[%c0, %c0_0, %c0_1, %c0_2] : memref<1x4x4x3xbf16, #tpu.memory_space<vmem>>, vector<1x4x4x3xbf16>
    %1 = vector.shape_cast %0 : vector<1x4x4x3xbf16> to vector<4x4x3xbf16>
    %2 = arith.extf %1 : vector<4x4x3xbf16> to vector<4x4x3xf32>
    %c0_3 = arith.constant 0 : index
    %c0_4 = arith.constant 0 : index
    %c0_5 = arith.constant 0 : index
    %c0_6 = arith.constant 0 : index
    %3 = vector.load %arg2[%c0_3, %c0_4, %c0_5, %c0_6] : memref<1x4x4x64xbf16, #tpu.memory_space<vmem>>, vector<1x4x4x64xbf16>
    %4 = vector.shape_cast %3 : vector<1x4x4x64xbf16> to vector<4x4x64xbf16>
    %5 = arith.extf %4 : vector<4x4x64xbf16> to vector<4x4x64xf32>
    %c0_7 = arith.constant 0 : index
    %c0_8 = arith.constant 0 : index
    %6 = vector.load %arg3[%c0_7, %c0_8] : memref<1x3xf32, #tpu.memory_space<vmem>>, vector<1x3xf32>
    %7 = vector.shape_cast %6 : vector<1x3xf32> to vector<1x1x3xf32>
    %c0_9 = arith.constant 0 : index
    %c0_10 = arith.constant 0 : index
    %8 = vector.load %arg4[%c0_9, %c0_10] : memref<1x64xf32, #tpu.memory_space<vmem>>, vector<1x64xf32>
    %9 = vector.shape_cast %8 : vector<1x64xf32> to vector<1x1x64xf32>
    %10 = vector.broadcast %7 : vector<1x1x3xf32> to vector<4x4x3xf32>
    %11 = arith.mulf %2, %10 : vector<4x4x3xf32>
    %cst = arith.constant dense<0.000000e+00> : vector<4x4xf32>
    %12 = vector.multi_reduction <add>, %11, %cst [2] : vector<4x4x3xf32> to vector<4x4xf32>
    %13 = vector.broadcast %9 : vector<1x1x64xf32> to vector<4x4x64xf32>
    %14 = arith.mulf %5, %13 : vector<4x4x64xf32>
    %cst_11 = arith.constant dense<0.000000e+00> : vector<4x4xf32>
    %15 = vector.multi_reduction <add>, %14, %cst_11 [2] : vector<4x4x64xf32> to vector<4x4xf32>
    %16 = arith.addf %12, %15 : vector<4x4xf32>
    %c0_12 = arith.constant 0 : index
    %c0_13 = arith.constant 0 : index
    %17 = vector.load %arg5[%c0_12, %c0_13] : memref<1x1xf32, #tpu.memory_space<vmem>>, vector<1x1xf32>
    %18 = vector.broadcast %17 : vector<1x1xf32> to vector<4x4xf32>
    %19 = arith.addf %16, %18 : vector<4x4xf32>
    %c0_14 = arith.constant 0 : index
    %c0_15 = arith.constant 0 : index
    %20 = vector.load %arg6[%c0_14, %c0_15] : memref<16x4xf32, #tpu.memory_space<vmem>>, vector<16x4xf32>
    %cst_16 = arith.constant dense<0.000000e+00> : vector<16x4xf32>
    %21 = tpu.matmul %20, %19, %cst_16 {dimension_numbers = #tpu.dot_dimension_numbers<[1], [0], [0], [1], [0, 0, 1, 1], [], []>} : vector<16x4xf32>, vector<4x4xf32>, vector<16x4xf32> -> vector<16x4xf32>
    %c0_17 = arith.constant 0 : index
    %c0_18 = arith.constant 0 : index
    %22 = vector.load %arg7[%c0_17, %c0_18] : memref<4x16xf32, #tpu.memory_space<vmem>>, vector<4x16xf32>
    %cst_19 = arith.constant dense<0.000000e+00> : vector<16x16xf32>
    %23 = tpu.matmul %21, %22, %cst_19 {dimension_numbers = #tpu.dot_dimension_numbers<[1], [0], [0], [1], [0, 0, 1, 1], [], []>} : vector<16x4xf32>, vector<4x16xf32>, vector<16x16xf32> -> vector<16x16xf32>
    %24 = vector.shape_cast %23 : vector<16x16xf32> to vector<1x16x16xf32>
    %cst_20 = arith.constant dense<0x7F800000> : vector<1xf32>
    %25 = vector.multi_reduction <minimumf>, %24, %cst_20 [1, 2] : vector<1x16x16xf32> to vector<1xf32>
    %26 = vector.shape_cast %25 : vector<1xf32> to vector<1x1x1xf32>
    %27 = vector.extract %26[0, 0, 0] : f32 from vector<1x1x1xf32>
    %28 = vector.broadcast %27 : f32 to vector<1x1xf32>
    %29 = vector.shape_cast %23 : vector<16x16xf32> to vector<1x16x16xf32>
    %cst_21 = arith.constant dense<0xFF800000> : vector<1xf32>
    %30 = vector.multi_reduction <maximumf>, %29, %cst_21 [1, 2] : vector<1x16x16xf32> to vector<1xf32>
    %31 = vector.shape_cast %30 : vector<1xf32> to vector<1x1x1xf32>
    %32 = vector.extract %31[0, 0, 0] : f32 from vector<1x1x1xf32>
    %33 = vector.broadcast %32 : f32 to vector<1x1xf32>
    %34 = arith.subf %33, %28 : vector<1x1xf32>
    %cst_22 = arith.constant 9.99999971E-10 : f32
    %35 = vector.broadcast %cst_22 : f32 to vector<1x1xf32>
    %36 = arith.addf %34, %35 : vector<1x1xf32>
    %37 = tpu.reciprocal %36 {approx = true} : vector<1x1xf32> -> vector<1x1xf32>
    %38 = vector.broadcast %28 : vector<1x1xf32> to vector<16x16xf32>
    %39 = arith.subf %23, %38 : vector<16x16xf32>
    %40 = vector.broadcast %37 : vector<1x1xf32> to vector<16x16xf32>
    %41 = arith.mulf %39, %40 : vector<16x16xf32>
    %c0_23 = arith.constant 0 : index
    %c0_24 = arith.constant 0 : index
    %c0_25 = arith.constant 0 : index
    %42 = vector.load %arg8[%c0_23, %c0_24, %c0_25] : memref<1x16x16xf32, #tpu.memory_space<vmem>>, vector<1x16x16xf32>
    %43 = vector.shape_cast %42 : vector<1x16x16xf32> to vector<16x16xf32>
    %44 = vector.shape_cast %41 : vector<16x16xf32> to vector<1x16x16xf32>
    tpu.vector_store %arg8[%c0_23, %c0_24, %c0_25], %44 {strides = array<i32>} : memref<1x16x16xf32, #tpu.memory_space<vmem>>, vector<1x16x16xf32>,
    return
  }
  func.func @transform_0(%arg0: i32) -> (i32, i32, i32, i32) {
    %c0_i32 = arith.constant 0 : i32
    %c0_i32_0 = arith.constant 0 : i32
    %c0_i32_1 = arith.constant 0 : i32
    %c0_i32_2 = arith.constant 0 : i32
    return %arg0, %c0_i32, %c0_i32_0, %c0_i32_1 : i32, i32, i32, i32
  }
  func.func @transform_1(%arg0: i32) -> (i32, i32, i32, i32) {
    %c0_i32 = arith.constant 0 : i32
    %c0_i32_0 = arith.constant 0 : i32
    %c0_i32_1 = arith.constant 0 : i32
    %c0_i32_2 = arith.constant 0 : i32
    return %arg0, %c0_i32, %c0_i32_0, %c0_i32_1 : i32, i32, i32, i32
  }
  func.func @transform_2(%arg0: i32) -> (i32, i32) {
    %c0_i32 = arith.constant 0 : i32
    %c0_i32_0 = arith.constant 0 : i32
    %c0_i32_1 = arith.constant 0 : i32
    return %c0_i32, %c0_i32_0 : i32, i32
  }
  func.func @transform_3(%arg0: i32) -> (i32, i32) {
    %c0_i32 = arith.constant 0 : i32
    %c0_i32_0 = arith.constant 0 : i32
    %c0_i32_1 = arith.constant 0 : i32
    return %c0_i32, %c0_i32_0 : i32, i32
  }
  func.func @transform_4(%arg0: i32) -> (i32, i32) {
    %c0_i32 = arith.constant 0 : i32
    %c0_i32_0 = arith.constant 0 : i32
    %c0_i32_1 = arith.constant 0 : i32
    return %c0_i32, %c0_i32_0 : i32, i32
  }
  func.func @transform_5(%arg0: i32) -> (i32, i32) {
    %c0_i32 = arith.constant 0 : i32
    %c0_i32_0 = arith.constant 0 : i32
    %c0_i32_1 = arith.constant 0 : i32
    return %c0_i32, %c0_i32_0 : i32, i32
  }
  func.func @transform_6(%arg0: i32) -> (i32, i32) {
    %c0_i32 = arith.constant 0 : i32
    %c0_i32_0 = arith.constant 0 : i32
    %c0_i32_1 = arith.constant 0 : i32
    return %c0_i32, %c0_i32_0 : i32, i32
  }
  func.func @transform_7(%arg0: i32) -> (i32, i32, i32) {
    %c0_i32 = arith.constant 0 : i32
    %c0_i32_0 = arith.constant 0 : i32
    %c0_i32_1 = arith.constant 0 : i32
    return %arg0, %c0_i32, %c0_i32_0 : i32, i32, i32
  }
}

</mosaic_0001>

<llo_original>
// kernel: _lambda_.4
$region0: #{_lambda_.4}
  #allocation0 [shape = 'u32[]', space=smem, size = 0x4, offset = 0x4, fixed_abs, tag = 'smem constant byte address 0x4 - core index']
  #allocation1 [shape = 'u32[144,128]{1,0:T(1,128)}', space=vmem, size = 0x12000, scoped, tag = 'internal scratch']
  %s0 = inlined_call_operand.hbm [shape: bf16[2,1,5,9,64], index: 0, kind: input, shape index: {}]
  %s1 = inlined_call_operand.hbm [shape: bf16[256,64], index: 1, kind: input, shape index: {}]
  %s2 = inlined_call_operand.hbm [shape: f32[1,64], index: 2, kind: input, shape index: {}]
  %s3 = inlined_call_operand.hbm [shape: bf16[2,4,8,64], index: 3, kind: output, shape index: {}]
  %s4 = sld [smem:[#allocation0]]
  $region57: #{_lambda_.4} parent=0
    _
  %s6 = ssub.s32 1, %s4
  %s7 = scalar_select 0, %s6, %s4
  $region1: #{_lambda_.4} parent=0
    #allocation2 [shape = 'u8[40960]{0}', space=vmem, size = 0xa000, scoped, tag = 'input window, operand 0']
    #allocation3 [shape = 's32[2]{0}', space=sflag, size = 0x8, scoped, tag = 'scoped memory for _lambda_.4']
    #allocation4 [shape = 's32[2]{0}', space=sflag, size = 0x8, scoped, tag = 'scoped memory for _lambda_.4']
    #allocation5 [shape = 'u8[65536]{0}', space=vmem, size = 0x10000, scoped, tag = 'input window, operand 1, single buffered']
    #allocation6 [shape = 's32[1]{0}', space=sflag, size = 0x4, scoped, tag = 'scoped memory for _lambda_.4']
    #allocation7 [shape = 'u8[512]{0}', space=vmem, size = 0x400, scoped, tag = 'input window, operand 2, single buffered']
    #allocation8 [shape = 'u8[16384]{0}', space=vmem, size = 0x4000, scoped, tag = 'output window, operand 0']
    %8 = vsyncpa [#allocation3], 0
    %s9 = scalar_lea.sflag [#allocation3], 1
    %10 = vsyncpa %s9, 0
    %11 = vsyncpa [#allocation6], 0
    %12 = vsyncpa [#allocation4], 0
    %s13 = scalar_lea.sflag [#allocation4], 1
    %14 = vsyncpa %s13, 0
    loop: start=0, step=1, limit=4
    $region2: #{_lambda_.4} parent=1 // loop_pre_header
      _
    $region3: #{_lambda_.4} parent=1 // loop_header
      %s16 = sphi 0, %s20
      %p17 = scmp.ge.s32.totalorder %s16, 4
      %s23 = sphi 0, %s35
      %s24 = sphi 0, %s31
      %s25 = sphi 0, %s23
      %s26 = sphi 0, %s24
      %s27 = sphi 0, %s25
      %s28 = sphi 0, %s26
      %s40 = sphi 0, %s42
      %s43 = sphi 0, %s40
      %s44 = sphi 0, %s43
      %s60 = sphi 0, %s44
      %s64 = sphi 0, %s64
      %s66 = sphi 0, %s64
      %s67 = sphi 0, %s66
      %s81 = sphi 0, %s67
      %s85 = sphi 0, %s85
      %s87 = sphi 0, %s85
      %s88 = sphi 0, %s87
      %s102 = sphi 0, %s88
      %s110 = sphi 0, %s112
      %s113 = sphi 0, %s110
      %s114 = sphi 0, %s113
      %s130 = sphi 0, %s114
    $region4: #{_lambda_.4} parent=1 // loop_header_branch
      %19 = sbr.rel (%p17) target = $region8
    $region5: #{_lambda_.4} parent=1 // loop_body
      %s21 = ssub.s32 %s16, 1
      %s22 = ssub.s32 %s16, 2
      %s29 = sadd.s32 1, %s24
      %p30 = scmp.ge.s32.totalorder %s29, 1
      %s31 = scalar_select %p30, 0, %s29
      %s32 = sadd.s32 1, %s23
      %s33 = scalar_select %p30, %s32, %s23
      %p34 = scmp.ge.s32.totalorder %s33, 2
      %s35 = scalar_select %p34, 0, %s33
      %s36 = ssub.s32 %s23, %s35
      %s37 = ssub.s32 %s24, %s31
      %s38 = sor.u32 %s36, %s37
      %p39 = scmp.eq.s32.totalorder %s38, 0
      %s41 = sadd.s32 %s40, 1
      %s42 = scalar_select %p39, %s40, %s41
      %p45 = pneg %p39
      %p46 = scmp.eq.s32.totalorder %s16, 1
      %p47 = por %p45, %p46
      %p48 = scmp.ne.s32.totalorder %s40, %s43
      %p49 = scmp.eq.s32.totalorder %s16, 0
      %p50 = por %p48, %p49
      %p51 = scmp.ne.s32.totalorder %s40, %s43
      %p52 = scmp.eq.s32.totalorder %s21, 1
      %p53 = por %p51, %p52
      %p54 = scmp.ne.s32.totalorder %s43, %s44
      %p55 = scmp.eq.s32.totalorder %s21, 0
      %p56 = por %p54, %p55
      %p57 = scmp.ne.s32.totalorder %s43, %s44
      %p58 = scmp.eq.s32.totalorder %s22, 1
      %p59 = por %p57, %p58
      %p61 = scmp.ne.s32.totalorder %s44, %s60
      %p62 = scmp.eq.s32.totalorder %s22, 0
      %p63 = por %p61, %p62
      %s65 = sadd.s32 %s64, 1
      %p68 = scmp.eq.s32.totalorder %s16, 1
      %p69 = scmp.ne.s32.totalorder %s64, %s66
      %p70 = scmp.eq.s32.totalorder %s16, 0
      %p71 = por %p69, %p70
      %p72 = scmp.ne.s32.totalorder %s64, %s66
      %p73 = scmp.eq.s32.totalorder %s21, 1
      %p74 = por %p72, %p73
      %p75 = scmp.ne.s32.totalorder %s66, %s67
      %p76 = scmp.eq.s32.totalorder %s21, 0
      %p77 = por %p75, %p76
      %p78 = scmp.ne.s32.totalorder %s66, %s67
      %p79 = scmp.eq.s32.totalorder %s22, 1
      %p80 = por %p78, %p79
      %p82 = scmp.ne.s32.totalorder %s67, %s81
      %p83 = scmp.eq.s32.totalorder %s22, 0
      %p84 = por %p82, %p83
      %s86 = sadd.s32 %s85, 1
      %p89 = scmp.eq.s32.totalorder %s16, 1
      %p90 = scmp.ne.s32.totalorder %s85, %s87
      %p91 = scmp.eq.s32.totalorder %s16, 0
      %p92 = por %p90, %p91
      %p93 = scmp.ne.s32.totalorder %s85, %s87
      %p94 = scmp.eq.s32.totalorder %s21, 1
      %p95 = por %p93, %p94
      %p96 = scmp.ne.s32.totalorder %s87, %s88
      %p97 = scmp.eq.s32.totalorder %s21, 0
      %p98 = por %p96, %p97
      %p99 = scmp.ne.s32.totalorder %s87, %s88
      %p100 = scmp.eq.s32.totalorder %s22, 1
      %p101 = por %p99, %p100
      %p103 = scmp.ne.s32.totalorder %s88, %s102
      %p104 = scmp.eq.s32.totalorder %s22, 0
      %p105 = por %p103, %p104
      %s106 = ssub.s32 %s23, %s35
      %s107 = ssub.s32 %s24, %s31
      %s108 = sor.u32 %s106, %s107
      %p109 = scmp.eq.s32.totalorder %s108, 0
      %s111 = sadd.s32 %s110, 1
      %s112 = scalar_select %p109, %s110, %s111
      %p115 = pneg %p109
      %p116 = scmp.eq.s32.totalorder %s16, 1
      %p117 = por %p115, %p116
      %p118 = scmp.ne.s32.totalorder %s110, %s113
      %p119 = scmp.eq.s32.totalorder %s16, 0
      %p120 = por %p118, %p119
      %p121 = scmp.ne.s32.totalorder %s110, %s113
      %p122 = scmp.eq.s32.totalorder %s21, 1
      %p123 = por %p121, %p122
      %p124 = scmp.ne.s32.totalorder %s113, %s114
      %p125 = scmp.eq.s32.totalorder %s21, 0
      %p126 = por %p124, %p125
      %p127 = scmp.ne.s32.totalorder %s113, %s114
      %p128 = scmp.eq.s32.totalorder %s22, 1
      %p129 = por %p127, %p128
      %p131 = scmp.ne.s32.totalorder %s114, %s130
      %p132 = scmp.eq.s32.totalorder %s22, 0
      %p133 = por %p131, %p132
      %p134 = scmp.le.s32.totalorder 1, %s16
      %p135 = scmp.lt.s32.totalorder %s16, 3
      %p136 = pnand %p134, %p135
      %p137 = pneg %p136
      // Predicated region
      $region9: #{_lambda_.4} parent=5 // pred_check
        _
      $region10: #{_lambda_.4} parent=5 // pred_check_branch
        %139 = sbr.rel (%p136) target = $region12
      $region11: #{_lambda_.4} parent=5 // pred_region
        %s140 = ssub.s32 %s16, 1
        // Predicated region
        $region13: #{_lambda_.4} parent=11 // pred_check
          %p141 = pneg %p77
        $region14: #{_lambda_.4} parent=11 // pred_check_branch
          %143 = sbr.rel (%p141) target = $region16
        $region15: #{_lambda_.4} parent=11 // pred_region
          %s145 = ssub.s32 2048, 2048
          %146 = vsyncadd [#allocation6], %s145
          %s147 = sshll.u32 [#allocation5], 4
          %s148 = int_to_ptr.vmem [resolvable:$true] %s147
          %153 = dma.hbm_to_vmem [thread:$0]  %s1, 2048, %s148, [#allocation6], 64, 64, 4
        $region16: #{_lambda_.4} parent=11 // pred_fallthru
          _
        // Predicated region
        $region17: #{_lambda_.4} parent=11 // pred_check
          %p154 = pneg %p98
        $region18: #{_lambda_.4} parent=11 // pred_check_branch
          %156 = sbr.rel (%p154) target = $region20
        $region19: #{_lambda_.4} parent=11 // pred_region
          %s158 = ssub.s32 16, 16
          %159 = vsyncadd [#allocation6], %s158
          %s161 = sshll.u32 [#allocation7], 4
          %s162 = int_to_ptr.vmem [resolvable:$true] %s161
          %164 = dma.hbm_to_vmem [thread:$0]  %s2, 16, %s162, [#allocation6]
        $region20: #{_lambda_.4} parent=11 // pred_fallthru
          _
      $region12: #{_lambda_.4} parent=5 // pred_fallthru
        _
      %p165 = scmp.lt.s32.totalorder %s16, 2
      // Predicated region
      $region21: #{_lambda_.4} parent=5 // pred_check
        %p166 = pneg %p165
      $region22: #{_lambda_.4} parent=5 // pred_check_branch
        %168 = sbr.rel (%p166) target = $region24
      $region23: #{_lambda_.4} parent=5 // pred_region
        // Predicated region
        $region25: #{_lambda_.4} parent=23 // pred_check
          %p169 = pneg %p50
        $region26: #{_lambda_.4} parent=23 // pred_check_branch
          %171 = sbr.rel (%p169) target = $region28
        $region27: #{_lambda_.4} parent=23 // pred_region
          %s172 = sand.u32 %s40, 1
          %s173 = scalar_lea.sflag [#allocation3], %s172
          %s174 = sand.u32 %s40, 1
          %s175 = smul.addr %s174, 40
          %s176 = scalar_lea.vmem [#allocation2], %s175
          %s178 = ssub.s32 640, 640
          %179 = vsyncadd %s173, %s178
          %s180 = smul.addr %s24, 10
          %s181 = smul.addr %s23, 10
          %s182 = sadd.s32 %s180, %s181
          %s183 = smul.addr %s182, 64
          %s184 = scalar_lea.hbm %s0, %s183
          %s185 = sshll.u32 %s176, 4
          %s186 = int_to_ptr.vmem [resolvable:$true] %s185
          %191 = dma.hbm_to_vmem [thread:$0]  %s184, 640, %s186, %s173, 64, 64, 4
        $region28: #{_lambda_.4} parent=23 // pred_fallthru
          _
      $region24: #{_lambda_.4} parent=5 // pred_fallthru
        _
      %p192 = scmp.le.s32.totalorder 1, %s16
      %p193 = scmp.lt.s32.totalorder %s16, 3
      %p194 = pnand %p192, %p193
      %p195 = pneg %p194
      // Predicated region
      $region29: #{_lambda_.4} parent=5 // pred_check
        _
      $region30: #{_lambda_.4} parent=5 // pred_check_branch
        %197 = sbr.rel (%p194) target = $region32
      $region31: #{_lambda_.4} parent=5 // pred_region
        %s198 = ssub.s32 %s16, 1
        %s199 = sand.u32 %s43, 1
        %s200 = scalar_lea.sflag [#allocation3], %s199
        %s201 = sand.u32 %s43, 1
        %s202 = smul.addr %s201, 40
        %s203 = scalar_lea.vmem [#allocation2], %s202
        // Predicated region
        $region33: #{_lambda_.4} parent=31 // pred_check
          %p204 = pneg %p56
        $region34: #{_lambda_.4} parent=31 // pred_check_branch
          %206 = sbr.rel (%p204) target = $region36
        $region35: #{_lambda_.4} parent=31 // pred_region
          %207 = dma.done %s200, 640
        $region36: #{_lambda_.4} parent=31 // pred_fallthru
          _
        // Predicated region
        $region37: #{_lambda_.4} parent=31 // pred_check
          %p208 = pneg %p77
        $region38: #{_lambda_.4} parent=31 // pred_check_branch
          %210 = sbr.rel (%p208) target = $region40
        $region39: #{_lambda_.4} parent=31 // pred_region
          %211 = dma.done [#allocation6], 2048
        $region40: #{_lambda_.4} parent=31 // pred_fallthru
          _
        // Predicated region
        $region41: #{_lambda_.4} parent=31 // pred_check
          %p212 = pneg %p98
        $region42: #{_lambda_.4} parent=31 // pred_check_branch
          %214 = sbr.rel (%p212) target = $region44
        $region43: #{_lambda_.4} parent=31 // pred_region
          %215 = dma.done [#allocation6], 16
        $region44: #{_lambda_.4} parent=31 // pred_fallthru
          _
        %s216 = sand.u32 %s43, 1
        %s217 = scalar_lea.sflag [#allocation3], %s216
        %s218 = sand.u32 %s43, 1
        %s219 = smul.addr %s218, 40
        %s220 = scalar_lea.vmem [#allocation2], %s219
        %p221 = pneg %p56
        %p222 = pneg %p53
        %p223 = pneg %p77
        %p224 = pneg %p74
        %p225 = pneg %p98
        %p226 = pneg %p95
        %p227 = pneg %p126
        %p228 = pneg %p123
        %s229 = sand.u32 %s113, 1
        %s230 = scalar_lea.sflag [#allocation4], %s229
        %s231 = sand.u32 %s113, 1
        %s232 = smul.addr %s231, 16
        %s233 = scalar_lea.vmem [#allocation8], %s232
        %s234 = smul.u32 4, %s26
        %v236 = vld [vmem:[%s203] sm:$0xf]
        %v237 = vld [vmem:[%s203 + $0x4] sm:$0x1]
        %v238 = vld [vmem:[%s203 + $0x8] sm:$0xf]
        %v239 = vld [vmem:[%s203 + $0xc] sm:$0x1]
        %v240 = vld [vmem:[%s203 + $0x10] sm:$0xf]
        %v241 = vld [vmem:[%s203 + $0x14] sm:$0x1]
        %v242 = vld [vmem:[%s203 + $0x18] sm:$0xf]
        %v243 = vld [vmem:[%s203 + $0x1c] sm:$0x1]
        %v244 = vld [vmem:[%s203 + $0x20] sm:$0xf]
        %v245 = vld [vmem:[%s203 + $0x24] sm:$0x1]
        %v254 = vunpack.c.l.b16 %v236
        %v255 = vunpack.c.l.b16 %v237
        %v256 = vunpack.c.l.b16 %v238
        %v257 = vunpack.c.l.b16 %v239
        %v258 = vunpack.c.l.b16 %v240
        %v259 = vunpack.c.l.b16 %v241
        %v260 = vunpack.c.l.b16 %v242
        %v261 = vunpack.c.l.b16 %v243
        %v262 = vpack.c.b16 %v255, %v254
        %v263 = vpack.c.b16 %v257, %v256
        %v264 = vpack.c.b16 %v259, %v258
        %v265 = vpack.c.b16 %v261, %v260
        %v267 = vshrl.u32 %v262, 16
        %v269 = vshll.u32 %v262, 16
        %v271 = vrot.slane %v269, 1
        %v272 = vor.u32 %v267, %v271
        %v274 = vshrl.u32 %v263, 16
        %v276 = vshll.u32 %v263, 16
        %v278 = vrot.slane %v276, 1
        %v279 = vor.u32 %v274, %v278
        %v281 = vshrl.u32 %v264, 16
        %v283 = vshll.u32 %v264, 16
        %v285 = vrot.slane %v283, 1
        %v286 = vor.u32 %v281, %v285
        %v288 = vshrl.u32 %v265, 16
        %v290 = vshll.u32 %v265, 16
        %v292 = vrot.slane %v290, 1
        %v293 = vor.u32 %v288, %v292
        %294 = vrot.lane.b32.xlu0 %v272, 64
        %v295 = vpop.permute.xlu0 %294
        %296 = vrot.lane.b32.xlu0 %v279, 64
        %v297 = vpop.permute.xlu0 %296
        %298 = vrot.lane.b32.xlu0 %v286, 64
        %v299 = vpop.permute.xlu0 %298
        %300 = vrot.lane.b32.xlu0 %v293, 64
        %v301 = vpop.permute.xlu0 %300
        %v304 = vunpack.c.l.b16 %v244
        %v305 = vunpack.c.l.b16 %v245
        %v306 = vpack.c.b16 %v305, %v304
        %v308 = vshrl.u32 %v306, 16
        %v310 = vshll.u32 %v306, 16
        %v312 = vrot.slane %v310, 1
        %v313 = vor.u32 %v308, %v312
        %314 = vrot.lane.b32.xlu0 %v313, 64
        %v315 = vpop.permute.xlu0 %314
        %vm316 = vcmask 523264
        %v319 = vsel %vm316, %v236, %v295
        %v322 = vsel %vm316, %v238, %v297
        %v325 = vsel %vm316, %v240, %v299
        %v328 = vsel %vm316, %v242, %v301
        %v331 = vsel %vm316, %v244, %v315
        %v337 = vunpack.c.l.b16 %v319
        %v338 = vunpack.c.l.b16 %v322
        %v339 = vunpack.c.l.b16 %v325
        %v340 = vunpack.c.l.b16 %v328
        %v341 = vunpack.c.l.b16 %v331
        %v342 = vld [vmem:[#allocation5] sm:$0xf]
        %v343 = vld [vmem:[#allocation5 + $0x4] sm:$0xf]
        %v344 = vld [vmem:[#allocation5 + $0x8] sm:$0xf]
        %v345 = vld [vmem:[#allocation5 + $0xc] sm:$0xf]
        %v346 = vld [vmem:[#allocation5 + $0x10] sm:$0xf]
        %v347 = vld [vmem:[#allocation5 + $0x14] sm:$0xf]
        %v348 = vld [vmem:[#allocation5 + $0x18] sm:$0xf]
        %v349 = vld [vmem:[#allocation5 + $0x1c] sm:$0xf]
        %v350 = vld [vmem:[#allocation5 + $0x20] sm:$0xf]
        %v351 = vld [vmem:[#allocation5 + $0x24] sm:$0xf]
        %v352 = vld [vmem:[#allocation5 + $0x28] sm:$0xf]
        %v353 = vld [vmem:[#allocation5 + $0x2c] sm:$0xf]
        %v354 = vld [vmem:[#allocation5 + $0x30] sm:$0xf]
        %v355 = vld [vmem:[#allocation5 + $0x34] sm:$0xf]
        %v356 = vld [vmem:[#allocation5 + $0x38] sm:$0xf]
        %v357 = vld [vmem:[#allocation5 + $0x3c] sm:$0xf]
        %v358 = vld [vmem:[#allocation5 + $0x40] sm:$0xf]
        %v359 = vld [vmem:[#allocation5 + $0x44] sm:$0xf]
        %v360 = vld [vmem:[#allocation5 + $0x48] sm:$0xf]
        %v361 = vld [vmem:[#allocation5 + $0x4c] sm:$0xf]
        %v362 = vld [vmem:[#allocation5 + $0x50] sm:$0xf]
        %v363 = vld [vmem:[#allocation5 + $0x54] sm:$0xf]
        %v364 = vld [vmem:[#allocation5 + $0x58] sm:$0xf]
        %v365 = vld [vmem:[#allocation5 + $0x5c] sm:$0xf]
        %v366 = vld [vmem:[#allocation5 + $0x60] sm:$0xf]
        %v367 = vld [vmem:[#allocation5 + $0x64] sm:$0xf]
        %v368 = vld [vmem:[#allocation5 + $0x68] sm:$0xf]
        %v369 = vld [vmem:[#allocation5 + $0x6c] sm:$0xf]
        %v370 = vld [vmem:[#allocation5 + $0x70] sm:$0xf]
        %v371 = vld [vmem:[#allocation5 + $0x74] sm:$0xf]
        %v372 = vld [vmem:[#allocation5 + $0x78] sm:$0xf]
        %v373 = vld [vmem:[#allocation5 + $0x7c] sm:$0xf]
        %v374 = vld [vmem:[#allocation7] sm:$0x1]
        %v376 = vlaneseq
        %v377 = vshrl.u32 %v376, 7
        %v378 = vsub.s32 0, %v377
        %v379 = vrot.slane %v374, %v378
        %v381 = vpack.c.b16 %v338, %v337
        %v382 = vpack.c.b16 %v339, %v338
        %v383 = vpack.c.b16 %v340, %v339
        %v384 = vpack.c.b16 %v341, %v340
        %v421 = vunpack.c.l.b16 %v342
        %v422 = vunpack.c.l.b16 %v343
        %v423 = vunpack.c.l.b16 %v344
        %v424 = vunpack.c.l.b16 %v345
        %v425 = vunpack.c.l.b16 %v346
        %v426 = vunpack.c.l.b16 %v347
        %v427 = vunpack.c.l.b16 %v348
        %v428 = vunpack.c.l.b16 %v349
        %v429 = vunpack.c.l.b16 %v350
        %v430 = vunpack.c.l.b16 %v351
        %v431 = vunpack.c.l.b16 %v352
        %v432 = vunpack.c.l.b16 %v353
        %v433 = vunpack.c.l.b16 %v354
        %v434 = vunpack.c.l.b16 %v355
        %v435 = vunpack.c.l.b16 %v356
        %v436 = vunpack.c.l.b16 %v357
        %v437 = vunpack.c.l.b16 %v358
        %v438 = vunpack.c.l.b16 %v359
        %v439 = vunpack.c.l.b16 %v360
        %v440 = vunpack.c.l.b16 %v361
        %v441 = vunpack.c.l.b16 %v362
        %v442 = vunpack.c.l.b16 %v363
        %v443 = vunpack.c.l.b16 %v364
        %v444 = vunpack.c.l.b16 %v365
        %v445 = vunpack.c.l.b16 %v366
        %v446 = vunpack.c.l.b16 %v367
        %v447 = vunpack.c.l.b16 %v368
        %v448 = vunpack.c.l.b16 %v369
        %v449 = vunpack.c.l.b16 %v370
        %v450 = vunpack.c.l.b16 %v371
        %v451 = vunpack.c.l.b16 %v372
        %v452 = vunpack.c.l.b16 %v373
        %v453 = vpack.c.b16 %v422, %v421
        %v454 = vpack.c.b16 %v424, %v423
        %v455 = vpack.c.b16 %v426, %v425
        %v456 = vpack.c.b16 %v428, %v427
        %v457 = vpack.c.b16 %v430, %v429
        %v458 = vpack.c.b16 %v432, %v431
        %v459 = vpack.c.b16 %v434, %v433
        %v460 = vpack.c.b16 %v436, %v435
        %v461 = vpack.c.b16 %v438, %v437
        %v462 = vpack.c.b16 %v440, %v439
        %v463 = vpack.c.b16 %v442, %v441
        %v464 = vpack.c.b16 %v444, %v443
        %v465 = vpack.c.b16 %v446, %v445
        %v466 = vpack.c.b16 %v448, %v447
        %v467 = vpack.c.b16 %v450, %v449
        %v468 = vpack.c.b16 %v452, %v451
        %485 = vmatprep.subr.bf16.mxu0 0
        %486 = vmatpush1.bf16.msra.mxu0 %v453
        %487 = vmatprep.subr.bf16.mxu0 0
        %488 = vmatpush1.bf16.msra.mxu0 %v454
        %489 = vmatprep.subr.bf16.mxu0 0
        %490 = vmatpush1.bf16.msra.mxu0 %v455
        %491 = vmatprep.subr.bf16.mxu0 0
        %492 = vmatpush1.bf16.msra.mxu0 %v456
        %493 = vmatprep.subr.bf16.mxu0 0
        %494 = vmatpush1.bf16.msra.mxu0 %v457
        %495 = vmatprep.subr.bf16.mxu0 0
        %496 = vmatpush1.bf16.msra.mxu0 %v458
        %497 = vmatprep.subr.bf16.mxu0 0
        %498 = vmatpush1.bf16.msra.mxu0 %v459
        %499 = vmatprep.subr.bf16.mxu0 0
        %500 = vmatpush1.bf16.msra.mxu0 %v460
        %501 = vmatprep.subr.bf16.mxu0 0
        %502 = vmatpush1.bf16.msra.mxu0 %v461
        %503 = vmatprep.subr.bf16.mxu0 0
        %504 = vmatpush1.bf16.msra.mxu0 %v462
        %505 = vmatprep.subr.bf16.mxu0 0
        %506 = vmatpush1.bf16.msra.mxu0 %v463
        %507 = vmatprep.subr.bf16.mxu0 0
        %508 = vmatpush1.bf16.msra.mxu0 %v464
        %509 = vmatprep.subr.bf16.mxu0 0
        %510 = vmatpush1.bf16.msra.mxu0 %v465
        %511 = vmatprep.subr.bf16.mxu0 0
        %512 = vmatpush1.bf16.msra.mxu0 %v466
        %513 = vmatprep.subr.bf16.mxu0 0
        %514 = vmatpush1.bf16.msra.mxu0 %v467
        %515 = vmatprep.subr.bf16.mxu0 0
        %516 = vmatpush1.bf16.msra.mxu0 %v468
        %517 = vmatprep.mubr.bf16.mxu0 %v382
        %518 = vmatmul.mubr.bf16.gmra.mrb[0].mxu0 %v381
        %v519 = vpop.f32.mrb[0].mxu0
        %v520 = vadd.f32 %v379, %v519
        %v521 = vpop.f32.mrb[0].mxu0
        %v522 = vpop.f32.mrb[0].mxu0
        %v523 = vadd.f32 %v379, %v522
        %v524 = vpop.f32.mrb[0].mxu0
        %525 = vmatprep.mubr.bf16.mxu0 %v384
        %526 = vmatmul.mubr.bf16.gmra.mrb[0].mxu0 %v383
        %v527 = vpop.f32.mrb[0].mxu0
        %v528 = vadd.f32 %v379, %v527
        %v529 = vpop.f32.mrb[0].mxu0
        %v530 = vpop.f32.mrb[0].mxu0
        %v531 = vadd.f32 %v379, %v530
        %v532 = vpop.f32.mrb[0].mxu0
        %533 = vdwg.mxu0
        %v534 = vpack.c.bf16 %v520, %v520
        %v535 = vpack.c.bf16 %v523, %v523
        %v536 = vpack.c.bf16 %v528, %v528
        %v537 = vpack.c.bf16 %v531, %v531
        %vm538 = vcmask 519168
        %539 = vst.msk [vmem:[%s233] sm:$0xf] %vm538, %v534
        %540 = vst.msk [vmem:[%s233 + $0x4] sm:$0xf] %vm538, %v535
        %541 = vst.msk [vmem:[%s233 + $0x8] sm:$0xf] %vm538, %v536
        %542 = vst.msk [vmem:[%s233 + $0xc] sm:$0xf] %vm538, %v537
        %s543 = sand.u32 %s113, 1
        %s544 = scalar_lea.sflag [#allocation4], %s543
        %s545 = sand.u32 %s113, 1
        %s546 = smul.addr %s545, 16
        %s547 = scalar_lea.vmem [#allocation8], %s546
        // Predicated region
        $region45: #{_lambda_.4} parent=31 // pred_check
          %p548 = pneg %p123
        $region46: #{_lambda_.4} parent=31 // pred_check_branch
          %550 = sbr.rel (%p548) target = $region48
        $region47: #{_lambda_.4} parent=31 // pred_region
          %s551 = smul.u32 4, %s26
          %s553 = ssub.s32 256, 256
          %554 = vsyncadd %s544, %s553
          %s555 = smul.addr %s25, 4
          %s556 = sadd.s32 %s551, %s555
          %s557 = smul.addr %s556, 64
          %s558 = scalar_lea.hbm %s3, %s557
          %s559 = sshll.u32 %s547, 4
          %s560 = int_to_ptr.vmem [resolvable:$true] %s559
          %565 = dma.vmem_to_hbm [thread:$0]  %s560, 256, %s558, %s544, 64, 64, 4
        $region48: #{_lambda_.4} parent=31 // pred_fallthru
          _
      $region32: #{_lambda_.4} parent=5 // pred_fallthru
        _
      %p566 = scmp.le.s32.totalorder 2, %s16
      // Predicated region
      $region49: #{_lambda_.4} parent=5 // pred_check
        %p567 = pneg %p566
      $region50: #{_lambda_.4} parent=5 // pred_check_branch
        %569 = sbr.rel (%p567) target = $region52
      $region51: #{_lambda_.4} parent=5 // pred_region
        %s570 = ssub.s32 %s16, 2
        // Predicated region
        $region53: #{_lambda_.4} parent=51 // pred_check
          %p571 = pneg %p129
        $region54: #{_lambda_.4} parent=51 // pred_check_branch
          %573 = sbr.rel (%p571) target = $region56
        $region55: #{_lambda_.4} parent=51 // pred_region
          %s574 = sand.u32 %s114, 1
          %s575 = scalar_lea.sflag [#allocation4], %s574
          %s576 = sand.u32 %s114, 1
          %s577 = smul.addr %s576, 16
          %s578 = scalar_lea.vmem [#allocation8], %s577
          %579 = dma.done %s575, 256
        $region56: #{_lambda_.4} parent=51 // pred_fallthru
          _
      $region52: #{_lambda_.4} parent=5 // pred_fallthru
        _
    $region6: #{_lambda_.4} parent=1 // loop_footer
      %s20 = sadd.s32 1, %s16
    $region7: #{_lambda_.4} parent=1 // loop_footer_branch
      %15 = sbr.rel target = $region3
    $region8: #{_lambda_.4} parent=1 // loop_exit
      _
    %580 = vsyncpa [#allocation3], 1
    %s581 = scalar_lea.sflag [#allocation3], 1
    %582 = vsyncpa %s581, 1
    %583 = vsyncpa [#allocation6], 1
    %584 = vsyncpa [#allocation4], 1
    %s585 = scalar_lea.sflag [#allocation4], 1
    %586 = vsyncpa %s585, 1

// kernel: _lambda_.3
$region0: #{_lambda_.3}
  #allocation0 [shape = 'u32[]', space=smem, size = 0x4, offset = 0x4, fixed_abs, tag = 'smem constant byte address 0x4 - core index']
  #allocation1 [shape = 'u32[144,128]{1,0:T(1,128)}', space=vmem, size = 0x12000, scoped, tag = 'internal scratch']
  %s0 = inlined_call_operand.hbm [shape: bf16[2,1,9,9,12], index: 0, kind: input, shape index: {}]
  %s1 = inlined_call_operand.hbm [shape: bf16[12,64], index: 1, kind: input, shape index: {}]
  %s2 = inlined_call_operand.hbm [shape: bf16[256,16], index: 2, kind: input, shape index: {}]
  %s3 = inlined_call_operand.hbm [shape: f32[1,16], index: 3, kind: input, shape index: {}]
  %s4 = inlined_call_operand.hbm [shape: bf16[2,8,8,16], index: 4, kind: output, shape index: {}]
  %s5 = sld [smem:[#allocation0]]
  $region65: #{_lambda_.3} parent=0
    _
  %s7 = ssub.s32 1, %s5
  %s8 = scalar_select 0, %s7, %s5
  $region1: #{_lambda_.3} parent=0
    #allocation2 [shape = 'u8[73728]{0}', space=vmem, size = 0x12000, scoped, tag = 'input window, operand 0']
    #allocation3 [shape = 's32[2]{0}', space=sflag, size = 0x8, scoped, tag = 'scoped memory for _lambda_.3']
    #allocation4 [shape = 's32[2]{0}', space=sflag, size = 0x8, scoped, tag = 'scoped memory for _lambda_.3']
    #allocation5 [shape = 'u8[4096]{0}', space=vmem, size = 0x1000, scoped, tag = 'input window, operand 1, single buffered']
    #allocation6 [shape = 's32[1]{0}', space=sflag, size = 0x4, scoped, tag = 'scoped memory for _lambda_.3']
    #allocation7 [shape = 'u8[65536]{0}', space=vmem, size = 0x10000, scoped, tag = 'input window, operand 2, single buffered']
    #allocation8 [shape = 'u8[512]{0}', space=vmem, size = 0x400, scoped, tag = 'input window, operand 3, single buffered']
    #allocation9 [shape = 's32[1]{0}', space=sflag, size = 0x4, scoped, tag = 'scoped memory for _lambda_.3']
    #allocation10 [shape = 'u8[32768]{0}', space=vmem, size = 0x8000, scoped, tag = 'output window, operand 0']
    %9 = vsyncpa [#allocation3], 0
    %s10 = scalar_lea.sflag [#allocation3], 1
    %11 = vsyncpa %s10, 0
    %12 = vsyncpa [#allocation6], 0
    %13 = vsyncpa [#allocation9], 0
    %14 = vsyncpa [#allocation4], 0
    %s15 = scalar_lea.sflag [#allocation4], 1
    %16 = vsyncpa %s15, 0
    loop: start=0, step=1, limit=4
    $region2: #{_lambda_.3} parent=1 // loop_pre_header
      _
    $region3: #{_lambda_.3} parent=1 // loop_header
      %s18 = sphi 0, %s22
      %p19 = scmp.ge.s32.totalorder %s18, 4
      %s25 = sphi 0, %s37
      %s26 = sphi 0, %s33
      %s27 = sphi 0, %s25
      %s28 = sphi 0, %s26
      %s29 = sphi 0, %s27
      %s30 = sphi 0, %s28
      %s42 = sphi 0, %s44
      %s45 = sphi 0, %s42
      %s46 = sphi 0, %s45
      %s62 = sphi 0, %s46
      %s66 = sphi 0, %s66
      %s68 = sphi 0, %s66
      %s69 = sphi 0, %s68
      %s83 = sphi 0, %s69
      %s87 = sphi 0, %s87
      %s89 = sphi 0, %s87
      %s90 = sphi 0, %s89
      %s104 = sphi 0, %s90
      %s108 = sphi 0, %s108
      %s110 = sphi 0, %s108
      %s111 = sphi 0, %s110
      %s125 = sphi 0, %s111
      %s133 = sphi 0, %s135
      %s136 = sphi 0, %s133
      %s137 = sphi 0, %s136
      %s153 = sphi 0, %s137
    $region4: #{_lambda_.3} parent=1 // loop_header_branch
      %21 = sbr.rel (%p19) target = $region8
    $region5: #{_lambda_.3} parent=1 // loop_body
      %s23 = ssub.s32 %s18, 1
      %s24 = ssub.s32 %s18, 2
      %s31 = sadd.s32 1, %s26
      %p32 = scmp.ge.s32.totalorder %s31, 1
      %s33 = scalar_select %p32, 0, %s31
      %s34 = sadd.s32 1, %s25
      %s35 = scalar_select %p32, %s34, %s25
      %p36 = scmp.ge.s32.totalorder %s35, 2
      %s37 = scalar_select %p36, 0, %s35
      %s38 = ssub.s32 %s25, %s37
      %s39 = ssub.s32 %s26, %s33
      %s40 = sor.u32 %s38, %s39
      %p41 = scmp.eq.s32.totalorder %s40, 0
      %s43 = sadd.s32 %s42, 1
      %s44 = scalar_select %p41, %s42, %s43
      %p47 = pneg %p41
      %p48 = scmp.eq.s32.totalorder %s18, 1
      %p49 = por %p47, %p48
      %p50 = scmp.ne.s32.totalorder %s42, %s45
      %p51 = scmp.eq.s32.totalorder %s18, 0
      %p52 = por %p50, %p51
      %p53 = scmp.ne.s32.totalorder %s42, %s45
      %p54 = scmp.eq.s32.totalorder %s23, 1
      %p55 = por %p53, %p54
      %p56 = scmp.ne.s32.totalorder %s45, %s46
      %p57 = scmp.eq.s32.totalorder %s23, 0
      %p58 = por %p56, %p57
      %p59 = scmp.ne.s32.totalorder %s45, %s46
      %p60 = scmp.eq.s32.totalorder %s24, 1
      %p61 = por %p59, %p60
      %p63 = scmp.ne.s32.totalorder %s46, %s62
      %p64 = scmp.eq.s32.totalorder %s24, 0
      %p65 = por %p63, %p64
      %s67 = sadd.s32 %s66, 1
      %p70 = scmp.eq.s32.totalorder %s18, 1
      %p71 = scmp.ne.s32.totalorder %s66, %s68
      %p72 = scmp.eq.s32.totalorder %s18, 0
      %p73 = por %p71, %p72
      %p74 = scmp.ne.s32.totalorder %s66, %s68
      %p75 = scmp.eq.s32.totalorder %s23, 1
      %p76 = por %p74, %p75
      %p77 = scmp.ne.s32.totalorder %s68, %s69
      %p78 = scmp.eq.s32.totalorder %s23, 0
      %p79 = por %p77, %p78
      %p80 = scmp.ne.s32.totalorder %s68, %s69
      %p81 = scmp.eq.s32.totalorder %s24, 1
      %p82 = por %p80, %p81
      %p84 = scmp.ne.s32.totalorder %s69, %s83
      %p85 = scmp.eq.s32.totalorder %s24, 0
      %p86 = por %p84, %p85
      %s88 = sadd.s32 %s87, 1
      %p91 = scmp.eq.s32.totalorder %s18, 1
      %p92 = scmp.ne.s32.totalorder %s87, %s89
      %p93 = scmp.eq.s32.totalorder %s18, 0
      %p94 = por %p92, %p93
      %p95 = scmp.ne.s32.totalorder %s87, %s89
      %p96 = scmp.eq.s32.totalorder %s23, 1
      %p97 = por %p95, %p96
      %p98 = scmp.ne.s32.totalorder %s89, %s90
      %p99 = scmp.eq.s32.totalorder %s23, 0
      %p100 = por %p98, %p99
      %p101 = scmp.ne.s32.totalorder %s89, %s90
      %p102 = scmp.eq.s32.totalorder %s24, 1
      %p103 = por %p101, %p102
      %p105 = scmp.ne.s32.totalorder %s90, %s104
      %p106 = scmp.eq.s32.totalorder %s24, 0
      %p107 = por %p105, %p106
      %s109 = sadd.s32 %s108, 1
      %p112 = scmp.eq.s32.totalorder %s18, 1
      %p113 = scmp.ne.s32.totalorder %s108, %s110
      %p114 = scmp.eq.s32.totalorder %s18, 0
      %p115 = por %p113, %p114
      %p116 = scmp.ne.s32.totalorder %s108, %s110
      %p117 = scmp.eq.s32.totalorder %s23, 1
      %p118 = por %p116, %p117
      %p119 = scmp.ne.s32.totalorder %s110, %s111
      %p120 = scmp.eq.s32.totalorder %s23, 0
      %p121 = por %p119, %p120
      %p122 = scmp.ne.s32.totalorder %s110, %s111
      %p123 = scmp.eq.s32.totalorder %s24, 1
      %p124 = por %p122, %p123
      %p126 = scmp.ne.s32.totalorder %s111, %s125
      %p127 = scmp.eq.s32.totalorder %s24, 0
      %p128 = por %p126, %p127
      %s129 = ssub.s32 %s25, %s37
      %s130 = ssub.s32 %s26, %s33
      %s131 = sor.u32 %s129, %s130
      %p132 = scmp.eq.s32.totalorder %s131, 0
      %s134 = sadd.s32 %s133, 1
      %s135 = scalar_select %p132, %s133, %s134
      %p138 = pneg %p132
      %p139 = scmp.eq.s32.totalorder %s18, 1
      %p140 = por %p138, %p139
      %p141 = scmp.ne.s32.totalorder %s133, %s136
      %p142 = scmp.eq.s32.totalorder %s18, 0
      %p143 = por %p141, %p142
      %p144 = scmp.ne.s32.totalorder %s133, %s136
      %p145 = scmp.eq.s32.totalorder %s23, 1
      %p146 = por %p144, %p145
      %p147 = scmp.ne.s32.totalorder %s136, %s137
      %p148 = scmp.eq.s32.totalorder %s23, 0
      %p149 = por %p147, %p148
      %p150 = scmp.ne.s32.totalorder %s136, %s137
      %p151 = scmp.eq.s32.totalorder %s24, 1
      %p152 = por %p150, %p151
      %p154 = scmp.ne.s32.totalorder %s137, %s153
      %p155 = scmp.eq.s32.totalorder %s24, 0
      %p156 = por %p154, %p155
      %p157 = scmp.le.s32.totalorder 1, %s18
      %p158 = scmp.lt.s32.totalorder %s18, 3
      %p159 = pnand %p157, %p158
      %p160 = pneg %p159
      // Predicated region
      $region9: #{_lambda_.3} parent=5 // pred_check
        _
      $region10: #{_lambda_.3} parent=5 // pred_check_branch
        %162 = sbr.rel (%p159) target = $region12
      $region11: #{_lambda_.3} parent=5 // pred_region
        %s163 = ssub.s32 %s18, 1
        // Predicated region
        $region13: #{_lambda_.3} parent=11 // pred_check
          %p164 = pneg %p79
        $region14: #{_lambda_.3} parent=11 // pred_check_branch
          %166 = sbr.rel (%p164) target = $region16
        $region15: #{_lambda_.3} parent=11 // pred_region
          %s168 = ssub.s32 128, 128
          %169 = vsyncadd [#allocation6], %s168
          %s170 = sshll.u32 [#allocation5], 4
          %s171 = int_to_ptr.vmem [resolvable:$true] %s170
          %176 = dma.hbm_to_vmem [thread:$0]  %s1, 128, %s171, [#allocation6], 64, 64, 4
        $region16: #{_lambda_.3} parent=11 // pred_fallthru
          _
        // Predicated region
        $region17: #{_lambda_.3} parent=11 // pred_check
          %p177 = pneg %p100
        $region18: #{_lambda_.3} parent=11 // pred_check_branch
          %179 = sbr.rel (%p177) target = $region20
        $region19: #{_lambda_.3} parent=11 // pred_region
          %s181 = ssub.s32 2048, 2048
          %182 = vsyncadd [#allocation6], %s181
          %s183 = sshll.u32 [#allocation7], 4
          %s184 = int_to_ptr.vmem [resolvable:$true] %s183
          %189 = dma.hbm_to_vmem [thread:$0]  %s2, 2048, %s184, [#allocation6], 64, 64, 4
        $region20: #{_lambda_.3} parent=11 // pred_fallthru
          _
        // Predicated region
        $region21: #{_lambda_.3} parent=11 // pred_check
          %p190 = pneg %p121
        $region22: #{_lambda_.3} parent=11 // pred_check_branch
          %192 = sbr.rel (%p190) target = $region24
        $region23: #{_lambda_.3} parent=11 // pred_region
          %s194 = ssub.s32 16, 16
          %195 = vsyncadd [#allocation9], %s194
          %s197 = sshll.u32 [#allocation8], 4
          %s198 = int_to_ptr.vmem [resolvable:$true] %s197
          %200 = dma.hbm_to_vmem [thread:$0]  %s3, 16, %s198, [#allocation9]
        $region24: #{_lambda_.3} parent=11 // pred_fallthru
          _
      $region12: #{_lambda_.3} parent=5 // pred_fallthru
        _
      %p201 = scmp.lt.s32.totalorder %s18, 2
      // Predicated region
      $region25: #{_lambda_.3} parent=5 // pred_check
        %p202 = pneg %p201
      $region26: #{_lambda_.3} parent=5 // pred_check_branch
        %204 = sbr.rel (%p202) target = $region28
      $region27: #{_lambda_.3} parent=5 // pred_region
        // Predicated region
        $region29: #{_lambda_.3} parent=27 // pred_check
          %p205 = pneg %p52
        $region30: #{_lambda_.3} parent=27 // pred_check_branch
          %207 = sbr.rel (%p205) target = $region32
        $region31: #{_lambda_.3} parent=27 // pred_region
          %s208 = sand.u32 %s42, 1
          %s209 = scalar_lea.sflag [#allocation3], %s208
          %s210 = sand.u32 %s42, 1
          %s211 = smul.addr %s210, 72
          %s212 = scalar_lea.vmem [#allocation2], %s211
          %s214 = ssub.s32 1152, 1152
          %215 = vsyncadd %s209, %s214
          %s216 = smul.addr %s26, 18
          %s217 = smul.addr %s25, 18
          %s218 = sadd.s32 %s216, %s217
          %s219 = smul.addr %s218, 64
          %s220 = scalar_lea.hbm %s0, %s219
          %s221 = sshll.u32 %s212, 4
          %s222 = int_to_ptr.vmem [resolvable:$true] %s221
          %227 = dma.hbm_to_vmem [thread:$0]  %s220, 1152, %s222, %s209, 64, 64, 4
        $region32: #{_lambda_.3} parent=27 // pred_fallthru
          _
      $region28: #{_lambda_.3} parent=5 // pred_fallthru
        _
      %p228 = scmp.le.s32.totalorder 1, %s18
      %p229 = scmp.lt.s32.totalorder %s18, 3
      %p230 = pnand %p228, %p229
      %p231 = pneg %p230
      // Predicated region
      $region33: #{_lambda_.3} parent=5 // pred_check
        _
      $region34: #{_lambda_.3} parent=5 // pred_check_branch
        %233 = sbr.rel (%p230) target = $region36
      $region35: #{_lambda_.3} parent=5 // pred_region
        %s234 = ssub.s32 %s18, 1
        %s235 = sand.u32 %s45, 1
        %s236 = scalar_lea.sflag [#allocation3], %s235
        %s237 = sand.u32 %s45, 1
        %s238 = smul.addr %s237, 72
        %s239 = scalar_lea.vmem [#allocation2], %s238
        // Predicated region
        $region37: #{_lambda_.3} parent=35 // pred_check
          %p240 = pneg %p58
        $region38: #{_lambda_.3} parent=35 // pred_check_branch
          %242 = sbr.rel (%p240) target = $region40
        $region39: #{_lambda_.3} parent=35 // pred_region
          %243 = dma.done %s236, 1152
        $region40: #{_lambda_.3} parent=35 // pred_fallthru
          _
        // Predicated region
        $region41: #{_lambda_.3} parent=35 // pred_check
          %p244 = pneg %p79
        $region42: #{_lambda_.3} parent=35 // pred_check_branch
          %246 = sbr.rel (%p244) target = $region44
        $region43: #{_lambda_.3} parent=35 // pred_region
          %247 = dma.done [#allocation6], 128
        $region44: #{_lambda_.3} parent=35 // pred_fallthru
          _
        // Predicated region
        $region45: #{_lambda_.3} parent=35 // pred_check
          %p248 = pneg %p100
        $region46: #{_lambda_.3} parent=35 // pred_check_branch
          %250 = sbr.rel (%p248) target = $region48
        $region47: #{_lambda_.3} parent=35 // pred_region
          %251 = dma.done [#allocation6], 2048
        $region48: #{_lambda_.3} parent=35 // pred_fallthru
          _
        // Predicated region
        $region49: #{_lambda_.3} parent=35 // pred_check
          %p252 = pneg %p121
        $region50: #{_lambda_.3} parent=35 // pred_check_branch
          %254 = sbr.rel (%p252) target = $region52
        $region51: #{_lambda_.3} parent=35 // pred_region
          %255 = dma.done [#allocation9], 16
        $region52: #{_lambda_.3} parent=35 // pred_fallthru
          _
        %s256 = sand.u32 %s45, 1
        %s257 = scalar_lea.sflag [#allocation3], %s256
        %s258 = sand.u32 %s45, 1
        %s259 = smul.addr %s258, 72
        %s260 = scalar_lea.vmem [#allocation2], %s259
        %p261 = pneg %p58
        %p262 = pneg %p55
        %p263 = pneg %p79
        %p264 = pneg %p76
        %p265 = pneg %p100
        %p266 = pneg %p97
        %p267 = pneg %p121
        %p268 = pneg %p118
        %p269 = pneg %p149
        %p270 = pneg %p146
        %s271 = sand.u32 %s136, 1
        %s272 = scalar_lea.sflag [#allocation4], %s271
        %s273 = sand.u32 %s136, 1
        %s274 = smul.addr %s273, 32
        %s275 = scalar_lea.vmem [#allocation10], %s274
        %s276 = smul.u32 8, %s28
        %v278 = vld [vmem:[%s239] sm:$0xf]
        %v279 = vld [vmem:[%s239 + $0x4] sm:$0x1]
        %v280 = vld [vmem:[%s239 + $0x8] sm:$0xf]
        %v281 = vld [vmem:[%s239 + $0xc] sm:$0x1]
        %v282 = vld [vmem:[%s239 + $0x10] sm:$0xf]
        %v283 = vld [vmem:[%s239 + $0x14] sm:$0x1]
        %v284 = vld [vmem:[%s239 + $0x18] sm:$0xf]
        %v285 = vld [vmem:[%s239 + $0x1c] sm:$0x1]
        %v286 = vld [vmem:[%s239 + $0x20] sm:$0xf]
        %v287 = vld [vmem:[%s239 + $0x24] sm:$0x1]
        %v288 = vld [vmem:[%s239 + $0x28] sm:$0xf]
        %v289 = vld [vmem:[%s239 + $0x2c] sm:$0x1]
        %v290 = vld [vmem:[%s239 + $0x30] sm:$0xf]
        %v291 = vld [vmem:[%s239 + $0x34] sm:$0x1]
        %v292 = vld [vmem:[%s239 + $0x38] sm:$0xf]
        %v293 = vld [vmem:[%s239 + $0x3c] sm:$0x1]
        %v294 = vld [vmem:[%s239 + $0x40] sm:$0xf]
        %v295 = vld [vmem:[%s239 + $0x44] sm:$0x1]
        %v315 = vunpack.c.l.s4 1966171168
        %v316 = vunpack.c.0.s8 %v315
        %v317 = vlaneseq
        %v318 = vshrl.u32 %v317, 7
        %v319 = vsub.s32 %v316, %v318
        %v320 = vrot.slane %v278, %v319
        %v321 = vcombine.high %v320, %v320
        %v323 = vunpack.c.l.s4 1966171168
        %v324 = vunpack.c.0.s8 %v323
        %v325 = vlaneseq
        %v326 = vshrl.u32 %v325, 7
        %v327 = vsub.s32 %v324, %v326
        %v328 = vrot.slane %v320, %v327
        %v330 = vunpack.c.l.s4 1966171168
        %v331 = vunpack.c.0.s8 %v330
        %v332 = vlaneseq
        %v333 = vshrl.u32 %v332, 7
        %v334 = vsub.s32 %v331, %v333
        %v335 = vrot.slane %v321, %v334
        %v336 = vcombine.high %v328, %v328
        %v337 = vcombine.high %v335, %v335
        %v339 = vunpack.c.l.s4 1966171168
        %v340 = vunpack.c.0.s8 %v339
        %v341 = vlaneseq
        %v342 = vshrl.u32 %v341, 7
        %v343 = vsub.s32 %v340, %v342
        %v344 = vrot.slane %v279, %v343
        %v346 = vunpack.c.l.s4 1966171168
        %v347 = vunpack.c.0.s8 %v346
        %v348 = vlaneseq
        %v349 = vshrl.u32 %v348, 7
        %v350 = vsub.s32 %v347, %v349
        %v351 = vrot.slane %v344, %v350
        %v353 = vunpack.c.l.s4 1966171168
        %v354 = vunpack.c.0.s8 %v353
        %v355 = vlaneseq
        %v356 = vshrl.u32 %v355, 7
        %v357 = vsub.s32 %v354, %v356
        %v358 = vrot.slane %v280, %v357
        %v359 = vcombine.high %v358, %v358
        %v361 = vunpack.c.l.s4 1966171168
        %v362 = vunpack.c.0.s8 %v361
        %v363 = vlaneseq
        %v364 = vshrl.u32 %v363, 7
        %v365 = vsub.s32 %v362, %v364
        %v366 = vrot.slane %v358, %v365
        %v368 = vunpack.c.l.s4 1966171168
        %v369 = vunpack.c.0.s8 %v368
        %v370 = vlaneseq
        %v371 = vshrl.u32 %v370, 7
        %v372 = vsub.s32 %v369, %v371
        %v373 = vrot.slane %v359, %v372
        %v374 = vcombine.high %v366, %v366
        %v375 = vcombine.high %v373, %v373
        %v377 = vunpack.c.l.s4 1966171168
        %v378 = vunpack.c.0.s8 %v377
        %v379 = vlaneseq
        %v380 = vshrl.u32 %v379, 7
        %v381 = vsub.s32 %v378, %v380
        %v382 = vrot.slane %v281, %v381
        %v384 = vunpack.c.l.s4 1966171168
        %v385 = vunpack.c.0.s8 %v384
        %v386 = vlaneseq
        %v387 = vshrl.u32 %v386, 7
        %v388 = vsub.s32 %v385, %v387
        %v389 = vrot.slane %v382, %v388
        %v391 = vunpack.c.l.s4 1966171168
        %v392 = vunpack.c.0.s8 %v391
        %v393 = vlaneseq
        %v394 = vshrl.u32 %v393, 7
        %v395 = vsub.s32 %v392, %v394
        %v396 = vrot.slane %v282, %v395
        %v397 = vcombine.high %v396, %v396
        %v399 = vunpack.c.l.s4 1966171168
        %v400 = vunpack.c.0.s8 %v399
        %v401 = vlaneseq
        %v402 = vshrl.u32 %v401, 7
        %v403 = vsub.s32 %v400, %v402
        %v404 = vrot.slane %v396, %v403
        %v406 = vunpack.c.l.s4 1966171168
        %v407 = vunpack.c.0.s8 %v406
        %v408 = vlaneseq
        %v409 = vshrl.u32 %v408, 7
        %v410 = vsub.s32 %v407, %v409
        %v411 = vrot.slane %v397, %v410
        %v412 = vcombine.high %v404, %v404
        %v413 = vcombine.high %v411, %v411
        %v415 = vunpack.c.l.s4 1966171168
        %v416 = vunpack.c.0.s8 %v415
        %v417 = vlaneseq
        %v418 = vshrl.u32 %v417, 7
        %v419 = vsub.s32 %v416, %v418
        %v420 = vrot.slane %v283, %v419
        %v422 = vunpack.c.l.s4 1966171168
        %v423 = vunpack.c.0.s8 %v422
        %v424 = vlaneseq
        %v425 = vshrl.u32 %v424, 7
        %v426 = vsub.s32 %v423, %v425
        %v427 = vrot.slane %v420, %v426
        %v429 = vunpack.c.l.s4 1966171168
        %v430 = vunpack.c.0.s8 %v429
        %v431 = vlaneseq
        %v432 = vshrl.u32 %v431, 7
        %v433 = vsub.s32 %v430, %v432
        %v434 = vrot.slane %v284, %v433
        %v435 = vcombine.high %v434, %v434
        %v437 = vunpack.c.l.s4 1966171168
        %v438 = vunpack.c.0.s8 %v437
        %v439 = vlaneseq
        %v440 = vshrl.u32 %v439, 7
        %v441 = vsub.s32 %v438, %v440
        %v442 = vrot.slane %v434, %v441
        %v444 = vunpack.c.l.s4 1966171168
        %v445 = vunpack.c.0.s8 %v444
        %v446 = vlaneseq
        %v447 = vshrl.u32 %v446, 7
        %v448 = vsub.s32 %v445, %v447
        %v449 = vrot.slane %v435, %v448
        %v450 = vcombine.high %v442, %v442
        %v451 = vcombine.high %v449, %v449
        %v453 = vunpack.c.l.s4 1966171168
        %v454 = vunpack.c.0.s8 %v453
        %v455 = vlaneseq
        %v456 = vshrl.u32 %v455, 7
        %v457 = vsub.s32 %v454, %v456
        %v458 = vrot.slane %v285, %v457
        %v460 = vunpack.c.l.s4 1966171168
        %v461 = vunpack.c.0.s8 %v460
        %v462 = vlaneseq
        %v463 = vshrl.u32 %v462, 7
        %v464 = vsub.s32 %v461, %v463
        %v465 = vrot.slane %v458, %v464
        %v467 = vunpack.c.l.s4 1966171168
        %v468 = vunpack.c.0.s8 %v467
        %v469 = vlaneseq
        %v470 = vshrl.u32 %v469, 7
        %v471 = vsub.s32 %v468, %v470
        %v472 = vrot.slane %v286, %v471
        %v473 = vcombine.high %v472, %v472
        %v475 = vunpack.c.l.s4 1966171168
        %v476 = vunpack.c.0.s8 %v475
        %v477 = vlaneseq
        %v478 = vshrl.u32 %v477, 7
        %v479 = vsub.s32 %v476, %v478
        %v480 = vrot.slane %v472, %v479
        %v482 = vunpack.c.l.s4 1966171168
        %v483 = vunpack.c.0.s8 %v482
        %v484 = vlaneseq
        %v485 = vshrl.u32 %v484, 7
        %v486 = vsub.s32 %v483, %v485
        %v487 = vrot.slane %v473, %v486
        %v488 = vcombine.high %v480, %v480
        %v489 = vcombine.high %v487, %v487
        %v491 = vunpack.c.l.s4 1966171168
        %v492 = vunpack.c.0.s8 %v491
        %v493 = vlaneseq
        %v494 = vshrl.u32 %v493, 7
        %v495 = vsub.s32 %v492, %v494
        %v496 = vrot.slane %v287, %v495
        %v498 = vunpack.c.l.s4 1966171168
        %v499 = vunpack.c.0.s8 %v498
        %v500 = vlaneseq
        %v501 = vshrl.u32 %v500, 7
        %v502 = vsub.s32 %v499, %v501
        %v503 = vrot.slane %v496, %v502
        %v505 = vunpack.c.l.s4 1966171168
        %v506 = vunpack.c.0.s8 %v505
        %v507 = vlaneseq
        %v508 = vshrl.u32 %v507, 7
        %v509 = vsub.s32 %v506, %v508
        %v510 = vrot.slane %v288, %v509
        %v511 = vcombine.high %v510, %v510
        %v513 = vunpack.c.l.s4 1966171168
        %v514 = vunpack.c.0.s8 %v513
        %v515 = vlaneseq
        %v516 = vshrl.u32 %v515, 7
        %v517 = vsub.s32 %v514, %v516
        %v518 = vrot.slane %v510, %v517
        %v520 = vunpack.c.l.s4 1966171168
        %v521 = vunpack.c.0.s8 %v520
        %v522 = vlaneseq
        %v523 = vshrl.u32 %v522, 7
        %v524 = vsub.s32 %v521, %v523
        %v525 = vrot.slane %v511, %v524
        %v526 = vcombine.high %v518, %v518
        %v527 = vcombine.high %v525, %v525
        %v529 = vunpack.c.l.s4 1966171168
        %v530 = vunpack.c.0.s8 %v529
        %v531 = vlaneseq
        %v532 = vshrl.u32 %v531, 7
        %v533 = vsub.s32 %v530, %v532
        %v534 = vrot.slane %v289, %v533
        %v536 = vunpack.c.l.s4 1966171168
        %v537 = vunpack.c.0.s8 %v536
        %v538 = vlaneseq
        %v539 = vshrl.u32 %v538, 7
        %v540 = vsub.s32 %v537, %v539
        %v541 = vrot.slane %v534, %v540
        %v543 = vunpack.c.l.s4 1966171168
        %v544 = vunpack.c.0.s8 %v543
        %v545 = vlaneseq
        %v546 = vshrl.u32 %v545, 7
        %v547 = vsub.s32 %v544, %v546
        %v548 = vrot.slane %v290, %v547
        %v549 = vcombine.high %v548, %v548
        %v551 = vunpack.c.l.s4 1966171168
        %v552 = vunpack.c.0.s8 %v551
        %v553 = vlaneseq
        %v554 = vshrl.u32 %v553, 7
        %v555 = vsub.s32 %v552, %v554
        %v556 = vrot.slane %v548, %v555
        %v558 = vunpack.c.l.s4 1966171168
        %v559 = vunpack.c.0.s8 %v558
        %v560 = vlaneseq
        %v561 = vshrl.u32 %v560, 7
        %v562 = vsub.s32 %v559, %v561
        %v563 = vrot.slane %v549, %v562
        %v564 = vcombine.high %v556, %v556
        %v565 = vcombine.high %v563, %v563
        %v567 = vunpack.c.l.s4 1966171168
        %v568 = vunpack.c.0.s8 %v567
        %v569 = vlaneseq
        %v570 = vshrl.u32 %v569, 7
        %v571 = vsub.s32 %v568, %v570
        %v572 = vrot.slane %v291, %v571
        %v574 = vunpack.c.l.s4 1966171168
        %v575 = vunpack.c.0.s8 %v574
        %v576 = vlaneseq
        %v577 = vshrl.u32 %v576, 7
        %v578 = vsub.s32 %v575, %v577
        %v579 = vrot.slane %v572, %v578
        %v581 = vunpack.c.l.s4 1966171168
        %v582 = vunpack.c.0.s8 %v581
        %v583 = vlaneseq
        %v584 = vshrl.u32 %v583, 7
        %v585 = vsub.s32 %v582, %v584
        %v586 = vrot.slane %v292, %v585
        %v587 = vcombine.high %v586, %v586
        %v589 = vunpack.c.l.s4 1966171168
        %v590 = vunpack.c.0.s8 %v589
        %v591 = vlaneseq
        %v592 = vshrl.u32 %v591, 7
        %v593 = vsub.s32 %v590, %v592
        %v594 = vrot.slane %v586, %v593
        %v596 = vunpack.c.l.s4 1966171168
        %v597 = vunpack.c.0.s8 %v596
        %v598 = vlaneseq
        %v599 = vshrl.u32 %v598, 7
        %v600 = vsub.s32 %v597, %v599
        %v601 = vrot.slane %v587, %v600
        %v602 = vcombine.high %v594, %v594
        %v603 = vcombine.high %v601, %v601
        %v605 = vunpack.c.l.s4 1966171168
        %v606 = vunpack.c.0.s8 %v605
        %v607 = vlaneseq
        %v608 = vshrl.u32 %v607, 7
        %v609 = vsub.s32 %v606, %v608
        %v610 = vrot.slane %v293, %v609
        %v612 = vunpack.c.l.s4 1966171168
        %v613 = vunpack.c.0.s8 %v612
        %v614 = vlaneseq
        %v615 = vshrl.u32 %v614, 7
        %v616 = vsub.s32 %v613, %v615
        %v617 = vrot.slane %v610, %v616
        %v619 = vunpack.c.l.s4 1966171168
        %v620 = vunpack.c.0.s8 %v619
        %v621 = vlaneseq
        %v622 = vshrl.u32 %v621, 7
        %v623 = vsub.s32 %v620, %v622
        %v624 = vrot.slane %v294, %v623
        %v625 = vcombine.high %v624, %v624
        %v627 = vunpack.c.l.s4 1966171168
        %v628 = vunpack.c.0.s8 %v627
        %v629 = vlaneseq
        %v630 = vshrl.u32 %v629, 7
        %v631 = vsub.s32 %v628, %v630
        %v632 = vrot.slane %v624, %v631
        %v634 = vunpack.c.l.s4 1966171168
        %v635 = vunpack.c.0.s8 %v634
        %v636 = vlaneseq
        %v637 = vshrl.u32 %v636, 7
        %v638 = vsub.s32 %v635, %v637
        %v639 = vrot.slane %v625, %v638
        %v640 = vcombine.high %v632, %v632
        %v641 = vcombine.high %v639, %v639
        %v643 = vunpack.c.l.s4 1966171168
        %v644 = vunpack.c.0.s8 %v643
        %v645 = vlaneseq
        %v646 = vshrl.u32 %v645, 7
        %v647 = vsub.s32 %v644, %v646
        %v648 = vrot.slane %v295, %v647
        %v650 = vunpack.c.l.s4 1966171168
        %v651 = vunpack.c.0.s8 %v650
        %v652 = vlaneseq
        %v653 = vshrl.u32 %v652, 7
        %v654 = vsub.s32 %v651, %v653
        %v655 = vrot.slane %v648, %v654
        %v656 = vunpack.i.l.s16 %v328
        %v657 = vunpack.i.h.s16 %v328
        %v658 = vunpack.i.l.s16 %v335
        %v659 = vunpack.i.h.s16 %v335
        %v660 = vunpack.i.l.s16 %v336
        %v661 = vunpack.i.h.s16 %v336
        %v662 = vunpack.i.l.s16 %v337
        %v663 = vunpack.i.h.s16 %v337
        %v664 = vunpack.i.l.s16 %v351
        %v665 = vunpack.i.l.s16 %v366
        %v666 = vunpack.i.h.s16 %v366
        %v667 = vunpack.i.l.s16 %v373
        %v668 = vunpack.i.h.s16 %v373
        %v669 = vunpack.i.l.s16 %v374
        %v670 = vunpack.i.h.s16 %v374
        %v671 = vunpack.i.l.s16 %v375
        %v672 = vunpack.i.h.s16 %v375
        %v673 = vunpack.i.l.s16 %v389
        %v674 = vunpack.i.l.s16 %v404
        %v675 = vunpack.i.h.s16 %v404
        %v676 = vunpack.i.l.s16 %v411
        %v677 = vunpack.i.h.s16 %v411
        %v678 = vunpack.i.l.s16 %v412
        %v679 = vunpack.i.h.s16 %v412
        %v680 = vunpack.i.l.s16 %v413
        %v681 = vunpack.i.h.s16 %v413
        %v682 = vunpack.i.l.s16 %v427
        %v683 = vunpack.i.l.s16 %v442
        %v684 = vunpack.i.h.s16 %v442
        %v685 = vunpack.i.l.s16 %v449
        %v686 = vunpack.i.h.s16 %v449
        %v687 = vunpack.i.l.s16 %v450
        %v688 = vunpack.i.h.s16 %v450
        %v689 = vunpack.i.l.s16 %v451
        %v690 = vunpack.i.h.s16 %v451
        %v691 = vunpack.i.l.s16 %v465
        %v692 = vunpack.i.l.s16 %v480
        %v693 = vunpack.i.h.s16 %v480
        %v694 = vunpack.i.l.s16 %v487
        %v695 = vunpack.i.h.s16 %v487
        %v696 = vunpack.i.l.s16 %v488
        %v697 = vunpack.i.h.s16 %v488
        %v698 = vunpack.i.l.s16 %v489
        %v699 = vunpack.i.h.s16 %v489
        %v700 = vunpack.i.l.s16 %v503
        %v701 = vunpack.i.l.s16 %v518
        %v702 = vunpack.i.h.s16 %v518
        %v703 = vunpack.i.l.s16 %v525
        %v704 = vunpack.i.h.s16 %v525
        %v705 = vunpack.i.l.s16 %v526
        %v706 = vunpack.i.h.s16 %v526
        %v707 = vunpack.i.l.s16 %v527
        %v708 = vunpack.i.h.s16 %v527
        %v709 = vunpack.i.l.s16 %v541
        %v710 = vunpack.i.l.s16 %v556
        %v711 = vunpack.i.h.s16 %v556
        %v712 = vunpack.i.l.s16 %v563
        %v713 = vunpack.i.h.s16 %v563
        %v714 = vunpack.i.l.s16 %v564
        %v715 = vunpack.i.h.s16 %v564
        %v716 = vunpack.i.l.s16 %v565
        %v717 = vunpack.i.h.s16 %v565
        %v718 = vunpack.i.l.s16 %v579
        %v719 = vunpack.i.l.s16 %v594
        %v720 = vunpack.i.h.s16 %v594
        %v721 = vunpack.i.l.s16 %v601
        %v722 = vunpack.i.h.s16 %v601
        %v723 = vunpack.i.l.s16 %v602
        %v724 = vunpack.i.h.s16 %v602
        %v725 = vunpack.i.l.s16 %v603
        %v726 = vunpack.i.h.s16 %v603
        %v727 = vunpack.i.l.s16 %v617
        %v728 = vunpack.i.l.s16 %v632
        %v729 = vunpack.i.h.s16 %v632
        %v730 = vunpack.i.l.s16 %v639
        %v731 = vunpack.i.h.s16 %v639
        %v732 = vunpack.i.l.s16 %v640
        %v733 = vunpack.i.h.s16 %v640
        %v734 = vunpack.i.l.s16 %v641
        %v735 = vunpack.i.h.s16 %v641
        %v736 = vunpack.i.l.s16 %v655
        %v737 = vld [vmem:[#allocation5] sm:$0xf]
        %v738 = vld [vmem:[#allocation5 + $0x4] sm:$0x3]
        %v739 = vpack.i.b16 %v657, %v656
        %v740 = vpack.i.b16 %v659, %v658
        %v741 = vpack.i.b16 %v661, %v660
        %v742 = vpack.i.b16 %v663, %v662
        %v743 = vpack.i.b16 %v665, %v664
        %v744 = vpack.i.b16 %v667, %v666
        %v745 = vpack.i.b16 %v669, %v668
        %v746 = vpack.i.b16 %v671, %v670
        %v747 = vpack.i.b16 %v673, %v672
        %v748 = vpack.i.b16 %v675, %v674
        %v749 = vpack.i.b16 %v677, %v676
        %v750 = vpack.i.b16 %v679, %v678
        %v751 = vpack.i.b16 %v681, %v680
        %v752 = vpack.i.b16 %v683, %v682
        %v753 = vpack.i.b16 %v685, %v684
        %v754 = vpack.i.b16 %v687, %v686
        %v755 = vpack.i.b16 %v689, %v688
        %v756 = vpack.i.b16 %v691, %v690
        %v757 = vpack.i.b16 %v693, %v692
        %v758 = vpack.i.b16 %v695, %v694
        %v759 = vpack.i.b16 %v697, %v696
        %v760 = vpack.i.b16 %v699, %v698
        %v761 = vpack.i.b16 %v701, %v700
        %v762 = vpack.i.b16 %v703, %v702
        %v763 = vpack.i.b16 %v705, %v704
        %v764 = vpack.i.b16 %v707, %v706
        %v765 = vpack.i.b16 %v709, %v708
        %v766 = vpack.i.b16 %v711, %v710
        %v767 = vpack.i.b16 %v713, %v712
        %v768 = vpack.i.b16 %v715, %v714
        %v769 = vpack.i.b16 %v717, %v716
        %v770 = vpack.i.b16 %v719, %v718
        %v771 = vpack.i.b16 %v721, %v720
        %v772 = vpack.i.b16 %v723, %v722
        %v773 = vpack.i.b16 %v725, %v724
        %v774 = vpack.i.b16 %v727, %v726
        %v775 = vpack.i.b16 %v729, %v728
        %v776 = vpack.i.b16 %v731, %v730
        %v777 = vpack.i.b16 %v733, %v732
        %v778 = vpack.i.b16 %v735, %v734
        %v780 = vcombine.low %v739, %v740
        %v781 = vcombine.low %v741, %v742
        %v782 = vcombine.low %v743, %v744
        %v783 = vcombine.low %v745, %v746
        %v785 = vunpack.c.l.s4 1966171168
        %v786 = vunpack.c.0.s8 %v785
        %v787 = vlaneseq
        %v788 = vshrl.u32 %v787, 7
        %v789 = vsub.s32 %v786, %v788
        %v790 = vrot.slane %v780, %v789
        %v792 = vunpack.c.l.s4 1966171168
        %v793 = vunpack.c.0.s8 %v792
        %v794 = vlaneseq
        %v795 = vshrl.u32 %v794, 7
        %v796 = vsub.s32 %v793, %v795
        %v797 = vrot.slane %v781, %v796
        %v799 = vunpack.c.l.s4 1966171168
        %v800 = vunpack.c.0.s8 %v799
        %v801 = vlaneseq
        %v802 = vshrl.u32 %v801, 7
        %v803 = vsub.s32 %v800, %v802
        %v804 = vrot.slane %v782, %v803
        %v806 = vunpack.c.l.s4 1966171168
        %v807 = vunpack.c.0.s8 %v806
        %v808 = vlaneseq
        %v809 = vshrl.u32 %v808, 7
        %v810 = vsub.s32 %v807, %v809
        %v811 = vrot.slane %v783, %v810
        %v812 = vcombine.low %v790, %v797
        %v813 = vcombine.low %v804, %v811
        %v815 = vunpack.c.l.s4 1966171168
        %v816 = vunpack.c.0.s8 %v815
        %v817 = vlaneseq
        %v818 = vshrl.u32 %v817, 7
        %v819 = vsub.s32 %v816, %v818
        %v820 = vrot.slane %v812, %v819
        %v822 = vunpack.c.l.s4 1966171168
        %v823 = vunpack.c.0.s8 %v822
        %v824 = vlaneseq
        %v825 = vshrl.u32 %v824, 7
        %v826 = vsub.s32 %v823, %v825
        %v827 = vrot.slane %v813, %v826
        %v828 = vcombine.low %v820, %v827
        %v829 = vcombine.low %v747, %v748
        %v830 = vcombine.low %v749, %v750
        %v831 = vcombine.low %v751, %v752
        %v832 = vcombine.low %v753, %v754
        %v834 = vunpack.c.l.s4 1966171168
        %v835 = vunpack.c.0.s8 %v834
        %v836 = vlaneseq
        %v837 = vshrl.u32 %v836, 7
        %v838 = vsub.s32 %v835, %v837
        %v839 = vrot.slane %v829, %v838
        %v841 = vunpack.c.l.s4 1966171168
        %v842 = vunpack.c.0.s8 %v841
        %v843 = vlaneseq
        %v844 = vshrl.u32 %v843, 7
        %v845 = vsub.s32 %v842, %v844
        %v846 = vrot.slane %v830, %v845
        %v848 = vunpack.c.l.s4 1966171168
        %v849 = vunpack.c.0.s8 %v848
        %v850 = vlaneseq
        %v851 = vshrl.u32 %v850, 7
        %v852 = vsub.s32 %v849, %v851
        %v853 = vrot.slane %v831, %v852
        %v855 = vunpack.c.l.s4 1966171168
        %v856 = vunpack.c.0.s8 %v855
        %v857 = vlaneseq
        %v858 = vshrl.u32 %v857, 7
        %v859 = vsub.s32 %v856, %v858
        %v860 = vrot.slane %v832, %v859
        %v861 = vcombine.low %v839, %v846
        %v862 = vcombine.low %v853, %v860
        %v864 = vunpack.c.l.s4 1966171168
        %v865 = vunpack.c.0.s8 %v864
        %v866 = vlaneseq
        %v867 = vshrl.u32 %v866, 7
        %v868 = vsub.s32 %v865, %v867
        %v869 = vrot.slane %v861, %v868
        %v871 = vunpack.c.l.s4 1966171168
        %v872 = vunpack.c.0.s8 %v871
        %v873 = vlaneseq
        %v874 = vshrl.u32 %v873, 7
        %v875 = vsub.s32 %v872, %v874
        %v876 = vrot.slane %v862, %v875
        %v877 = vcombine.low %v869, %v876
        %v878 = vcombine.low %v755, %v756
        %v879 = vcombine.low %v757, %v758
        %v880 = vcombine.low %v759, %v760
        %v881 = vcombine.low %v761, %v762
        %v883 = vunpack.c.l.s4 1966171168
        %v884 = vunpack.c.0.s8 %v883
        %v885 = vlaneseq
        %v886 = vshrl.u32 %v885, 7
        %v887 = vsub.s32 %v884, %v886
        %v888 = vrot.slane %v878, %v887
        %v890 = vunpack.c.l.s4 1966171168
        %v891 = vunpack.c.0.s8 %v890
        %v892 = vlaneseq
        %v893 = vshrl.u32 %v892, 7
        %v894 = vsub.s32 %v891, %v893
        %v895 = vrot.slane %v879, %v894
        %v897 = vunpack.c.l.s4 1966171168
        %v898 = vunpack.c.0.s8 %v897
        %v899 = vlaneseq
        %v900 = vshrl.u32 %v899, 7
        %v901 = vsub.s32 %v898, %v900
        %v902 = vrot.slane %v880, %v901
        %v904 = vunpack.c.l.s4 1966171168
        %v905 = vunpack.c.0.s8 %v904
        %v906 = vlaneseq
        %v907 = vshrl.u32 %v906, 7
        %v908 = vsub.s32 %v905, %v907
        %v909 = vrot.slane %v881, %v908
        %v910 = vcombine.low %v888, %v895
        %v911 = vcombine.low %v902, %v909
        %v913 = vunpack.c.l.s4 1966171168
        %v914 = vunpack.c.0.s8 %v913
        %v915 = vlaneseq
        %v916 = vshrl.u32 %v915, 7
        %v917 = vsub.s32 %v914, %v916
        %v918 = vrot.slane %v910, %v917
        %v920 = vunpack.c.l.s4 1966171168
        %v921 = vunpack.c.0.s8 %v920
        %v922 = vlaneseq
        %v923 = vshrl.u32 %v922, 7
        %v924 = vsub.s32 %v921, %v923
        %v925 = vrot.slane %v911, %v924
        %v926 = vcombine.low %v918, %v925
        %v927 = vcombine.low %v763, %v764
        %v928 = vcombine.low %v765, %v766
        %v929 = vcombine.low %v767, %v768
        %v930 = vcombine.low %v769, %v770
        %v932 = vunpack.c.l.s4 1966171168
        %v933 = vunpack.c.0.s8 %v932
        %v934 = vlaneseq
        %v935 = vshrl.u32 %v934, 7
        %v936 = vsub.s32 %v933, %v935
        %v937 = vrot.slane %v927, %v936
        %v939 = vunpack.c.l.s4 1966171168
        %v940 = vunpack.c.0.s8 %v939
        %v941 = vlaneseq
        %v942 = vshrl.u32 %v941, 7
        %v943 = vsub.s32 %v940, %v942
        %v944 = vrot.slane %v928, %v943
        %v946 = vunpack.c.l.s4 1966171168
        %v947 = vunpack.c.0.s8 %v946
        %v948 = vlaneseq
        %v949 = vshrl.u32 %v948, 7
        %v950 = vsub.s32 %v947, %v949
        %v951 = vrot.slane %v929, %v950
        %v953 = vunpack.c.l.s4 1966171168
        %v954 = vunpack.c.0.s8 %v953
        %v955 = vlaneseq
        %v956 = vshrl.u32 %v955, 7
        %v957 = vsub.s32 %v954, %v956
        %v958 = vrot.slane %v930, %v957
        %v959 = vcombine.low %v937, %v944
        %v960 = vcombine.low %v951, %v958
        %v962 = vunpack.c.l.s4 1966171168
        %v963 = vunpack.c.0.s8 %v962
        %v964 = vlaneseq
        %v965 = vshrl.u32 %v964, 7
        %v966 = vsub.s32 %v963, %v965
        %v967 = vrot.slane %v959, %v966
        %v969 = vunpack.c.l.s4 1966171168
        %v970 = vunpack.c.0.s8 %v969
        %v971 = vlaneseq
        %v972 = vshrl.u32 %v971, 7
        %v973 = vsub.s32 %v970, %v972
        %v974 = vrot.slane %v960, %v973
        %v975 = vcombine.low %v967, %v974
        %v976 = vcombine.low %v771, %v772
        %v977 = vcombine.low %v773, %v774
        %v978 = vcombine.low %v775, %v776
        %v979 = vcombine.low %v777, %v778
        %v981 = vunpack.c.l.s4 1966171168
        %v982 = vunpack.c.0.s8 %v981
        %v983 = vlaneseq
        %v984 = vshrl.u32 %v983, 7
        %v985 = vsub.s32 %v982, %v984
        %v986 = vrot.slane %v976, %v985
        %v988 = vunpack.c.l.s4 1966171168
        %v989 = vunpack.c.0.s8 %v988
        %v990 = vlaneseq
        %v991 = vshrl.u32 %v990, 7
        %v992 = vsub.s32 %v989, %v991
        %v993 = vrot.slane %v977, %v992
        %v995 = vunpack.c.l.s4 1966171168
        %v996 = vunpack.c.0.s8 %v995
        %v997 = vlaneseq
        %v998 = vshrl.u32 %v997, 7
        %v999 = vsub.s32 %v996, %v998
        %v1000 = vrot.slane %v978, %v999
        %v1002 = vunpack.c.l.s4 1966171168
        %v1003 = vunpack.c.0.s8 %v1002
        %v1004 = vlaneseq
        %v1005 = vshrl.u32 %v1004, 7
        %v1006 = vsub.s32 %v1003, %v1005
        %v1007 = vrot.slane %v979, %v1006
        %v1008 = vcombine.low %v986, %v993
        %v1009 = vcombine.low %v1000, %v1007
        %v1011 = vunpack.c.l.s4 1966171168
        %v1012 = vunpack.c.0.s8 %v1011
        %v1013 = vlaneseq
        %v1014 = vshrl.u32 %v1013, 7
        %v1015 = vsub.s32 %v1012, %v1014
        %v1016 = vrot.slane %v1008, %v1015
        %v1018 = vunpack.c.l.s4 1966171168
        %v1019 = vunpack.c.0.s8 %v1018
        %v1020 = vlaneseq
        %v1021 = vshrl.u32 %v1020, 7
        %v1022 = vsub.s32 %v1019, %v1021
        %v1023 = vrot.slane %v1009, %v1022
        %v1024 = vcombine.low %v1016, %v1023
        %v1026 = vunpack.c.l.s4 1966171168
        %v1027 = vunpack.c.0.s8 %v1026
        %v1028 = vlaneseq
        %v1029 = vshrl.u32 %v1028, 7
        %v1030 = vsub.s32 %v1027, %v1029
        %v1031 = vrot.slane %v736, %v1030
        %v1033 = vunpack.c.l.s4 1966171168
        %v1034 = vunpack.c.0.s8 %v1033
        %v1035 = vlaneseq
        %v1036 = vshrl.u32 %v1035, 7
        %v1037 = vsub.s32 %v1034, %v1036
        %v1038 = vrot.slane %v1031, %v1037
        %v1041 = vunpack.c.l.b16 %v737
        %v1042 = vunpack.c.l.b16 %v738
        %v1043 = vpack.c.b16 %v1042, %v1041
        %vm1044 = vcmask 97280
        %v1046 = vsel %vm1044, %v828, 0
        %v1049 = vsel %vm1044, %v877, 0
        %v1052 = vsel %vm1044, %v926, 0
        %v1055 = vsel %vm1044, %v975, 0
        %v1058 = vsel %vm1044, %v1024, 0
        %v1061 = vsel %vm1044, %v1038, 0
        %vm1063 = vcmask 1045504
        %v1065 = vsel %vm1063, %v1043, 0
        %1067 = vmatprep.subr.bf16.mxu0 0
        %1068 = vmatpush1.bf16.msra.mxu0 %v1065
        %1069 = vmatprep.subr.bf16.mxu0 0
        %1070 = vmatpush1.bf16.msra.mxu0 0
        %1071 = vmatprep.subr.bf16.mxu0 0
        %1072 = vmatpush1.bf16.msra.mxu0 0
        %1073 = vmatprep.subr.bf16.mxu0 0
        %1074 = vmatpush1.bf16.msra.mxu0 0
        %1075 = vmatprep.subr.bf16.mxu0 0
        %1076 = vmatpush1.bf16.msra.mxu0 0
        %1077 = vmatprep.subr.bf16.mxu0 0
        %1078 = vmatpush1.bf16.msra.mxu0 0
        %1079 = vmatprep.subr.bf16.mxu0 0
        %1080 = vmatpush1.bf16.msra.mxu0 0
        %1081 = vmatprep.subr.bf16.mxu0 0
        %1082 = vmatpush1.bf16.msra.mxu0 0
        %1083 = vmatprep.subr.bf16.mxu0 0
        %1084 = vmatpush1.bf16.msra.mxu0 0
        %1085 = vmatprep.subr.bf16.mxu0 0
        %1086 = vmatpush1.bf16.msra.mxu0 0
        %1087 = vmatprep.subr.bf16.mxu0 0
        %1088 = vmatpush1.bf16.msra.mxu0 0
        %1089 = vmatprep.subr.bf16.mxu0 0
        %1090 = vmatpush1.bf16.msra.mxu0 0
        %1091 = vmatprep.subr.bf16.mxu0 0
        %1092 = vmatpush1.bf16.msra.mxu0 0
        %1093 = vmatprep.subr.bf16.mxu0 0
        %1094 = vmatpush1.bf16.msra.mxu0 0
        %1095 = vmatprep.subr.bf16.mxu0 0
        %1096 = vmatpush1.bf16.msra.mxu0 0
        %1097 = vmatprep.subr.bf16.mxu0 0
        %1098 = vmatpush1.bf16.msra.mxu0 0
        %1099 = vmatprep.mubr.bf16.mxu0 0
        %1100 = vmatmul.mubr.bf16.gmra.mrb[0].mxu0 %v1046
        %v1101 = vpop.f32.mrb[0].mxu0
        %v1102 = vadd.f32 0.0, %v1101
        %v1103 = vpop.f32.mrb[0].mxu0
        %v1104 = vpop.f32.mrb[0].mxu0
        %v1105 = vadd.f32 0.0, %v1104
        %v1106 = vpop.f32.mrb[0].mxu0
        %1107 = vmatprep.mubr.bf16.mxu0 0
        %1108 = vmatmul.mubr.bf16.gmra.mrb[0].mxu0 %v1049
        %v1109 = vpop.f32.mrb[0].mxu0
        %v1110 = vadd.f32 0.0, %v1109
        %v1111 = vpop.f32.mrb[0].mxu0
        %v1112 = vpop.f32.mrb[0].mxu0
        %v1113 = vadd.f32 0.0, %v1112
        %v1114 = vpop.f32.mrb[0].mxu0
        %1115 = vmatprep.mubr.bf16.mxu0 0
        %1116 = vmatmul.mubr.bf16.gmra.mrb[0].mxu0 %v1052
        %v1117 = vpop.f32.mrb[0].mxu0
        %v1118 = vadd.f32 0.0, %v1117
        %v1119 = vpop.f32.mrb[0].mxu0
        %v1120 = vpop.f32.mrb[0].mxu0
        %v1121 = vadd.f32 0.0, %v1120
        %v1122 = vpop.f32.mrb[0].mxu0
        %1123 = vmatprep.mubr.bf16.mxu0 0
        %1124 = vmatmul.mubr.bf16.gmra.mrb[0].mxu0 %v1055
        %v1125 = vpop.f32.mrb[0].mxu0
        %v1126 = vadd.f32 0.0, %v1125
        %v1127 = vpop.f32.mrb[0].mxu0
        %v1128 = vpop.f32.mrb[0].mxu0
        %v1129 = vadd.f32 0.0, %v1128
        %v1130 = vpop.f32.mrb[0].mxu0
        %1131 = vmatprep.mubr.bf16.mxu0 0
        %1132 = vmatmul.mubr.bf16.gmra.mrb[0].mxu0 %v1058
        %v1133 = vpop.f32.mrb[0].mxu0
        %v1134 = vadd.f32 0.0, %v1133
        %v1135 = vpop.f32.mrb[0].mxu0
        %v1136 = vpop.f32.mrb[0].mxu0
        %v1137 = vadd.f32 0.0, %v1136
        %v1138 = vpop.f32.mrb[0].mxu0
        %1139 = vmatprep.mubr.bf16.mxu0 0
        %1140 = vmatmul.mubr.bf16.gmra.mrb[0].mxu0 %v1061
        %v1141 = vpop.f32.mrb[0].mxu0
        %v1142 = vadd.f32 0.0, %v1141
        %v1143 = vpop.f32.mrb[0].mxu0
        %v1144 = vpop.f32.mrb[0].mxu0
        %v1145 = vpop.f32.mrb[0].mxu0
        %1146 = vdwg.mxu0
        %v1147 = vmax.f32 %v1102, 0.0
        %v1148 = vmax.f32 %v1105, 0.0
        %v1149 = vmax.f32 %v1110, 0.0
        %v1150 = vmax.f32 %v1113, 0.0
        %v1151 = vmax.f32 %v1118, 0.0
        %v1152 = vmax.f32 %v1121, 0.0
        %v1153 = vmax.f32 %v1126, 0.0
        %v1154 = vmax.f32 %v1129, 0.0
        %v1155 = vmax.f32 %v1134, 0.0
        %v1156 = vmax.f32 %v1137, 0.0
        %v1157 = vmax.f32 %v1142, 0.0
        %v1158 = vpack.c.bf16 %v1148, %v1147
        %v1159 = vpack.c.bf16 %v1150, %v1149
        %v1160 = vpack.c.bf16 %v1152, %v1151
        %v1161 = vpack.c.bf16 %v1154, %v1153
        %v1162 = vpack.c.bf16 %v1156, %v1155
        %v1163 = vpack.c.bf16 %v1157, %v1157
        %v1170 = vcombine.high %v1158, %v1158
        %v1172 = vunpack.c.l.s4 1966171168
        %v1173 = vunpack.c.0.s8 %v1172
        %v1174 = vlaneseq
        %v1175 = vshrl.u32 %v1174, 7
        %v1176 = vsub.s32 %v1173, %v1175
        %v1177 = vrot.slane %v1158, %v1176
        %v1179 = vunpack.c.l.s4 1966171168
        %v1180 = vunpack.c.0.s8 %v1179
        %v1181 = vlaneseq
        %v1182 = vshrl.u32 %v1181, 7
        %v1183 = vsub.s32 %v1180, %v1182
        %v1184 = vrot.slane %v1170, %v1183
        %v1185 = vcombine.high %v1177, %v1177
        %v1186 = vcombine.high %v1184, %v1184
        %v1188 = vunpack.c.l.s4 1966171168
        %v1189 = vunpack.c.0.s8 %v1188
        %v1190 = vlaneseq
        %v1191 = vshrl.u32 %v1190, 7
        %v1192 = vsub.s32 %v1189, %v1191
        %v1193 = vrot.slane %v1177, %v1192
        %v1195 = vunpack.c.l.s4 1966171168
        %v1196 = vunpack.c.0.s8 %v1195
        %v1197 = vlaneseq
        %v1198 = vshrl.u32 %v1197, 7
        %v1199 = vsub.s32 %v1196, %v1198
        %v1200 = vrot.slane %v1184, %v1199
        %v1202 = vunpack.c.l.s4 1966171168
        %v1203 = vunpack.c.0.s8 %v1202
        %v1204 = vlaneseq
        %v1205 = vshrl.u32 %v1204, 7
        %v1206 = vsub.s32 %v1203, %v1205
        %v1207 = vrot.slane %v1185, %v1206
        %v1209 = vunpack.c.l.s4 1966171168
        %v1210 = vunpack.c.0.s8 %v1209
        %v1211 = vlaneseq
        %v1212 = vshrl.u32 %v1211, 7
        %v1213 = vsub.s32 %v1210, %v1212
        %v1214 = vrot.slane %v1186, %v1213
        %v1215 = vcombine.high %v1193, %v1193
        %v1216 = vcombine.high %v1200, %v1200
        %v1217 = vcombine.high %v1207, %v1207
        %v1218 = vcombine.high %v1214, %v1214
        %v1219 = vcombine.high %v1159, %v1159
        %v1221 = vunpack.c.l.s4 1966171168
        %v1222 = vunpack.c.0.s8 %v1221
        %v1223 = vlaneseq
        %v1224 = vshrl.u32 %v1223, 7
        %v1225 = vsub.s32 %v1222, %v1224
        %v1226 = vrot.slane %v1159, %v1225
        %v1228 = vunpack.c.l.s4 1966171168
        %v1229 = vunpack.c.0.s8 %v1228
        %v1230 = vlaneseq
        %v1231 = vshrl.u32 %v1230, 7
        %v1232 = vsub.s32 %v1229, %v1231
        %v1233 = vrot.slane %v1219, %v1232
        %v1234 = vcombine.high %v1226, %v1226
        %v1235 = vcombine.high %v1233, %v1233
        %v1237 = vunpack.c.l.s4 1966171168
        %v1238 = vunpack.c.0.s8 %v1237
        %v1239 = vlaneseq
        %v1240 = vshrl.u32 %v1239, 7
        %v1241 = vsub.s32 %v1238, %v1240
        %v1242 = vrot.slane %v1226, %v1241
        %v1244 = vunpack.c.l.s4 1966171168
        %v1245 = vunpack.c.0.s8 %v1244
        %v1246 = vlaneseq
        %v1247 = vshrl.u32 %v1246, 7
        %v1248 = vsub.s32 %v1245, %v1247
        %v1249 = vrot.slane %v1233, %v1248
        %v1251 = vunpack.c.l.s4 1966171168
        %v1252 = vunpack.c.0.s8 %v1251
        %v1253 = vlaneseq
        %v1254 = vshrl.u32 %v1253, 7
        %v1255 = vsub.s32 %v1252, %v1254
        %v1256 = vrot.slane %v1234, %v1255
        %v1258 = vunpack.c.l.s4 1966171168
        %v1259 = vunpack.c.0.s8 %v1258
        %v1260 = vlaneseq
        %v1261 = vshrl.u32 %v1260, 7
        %v1262 = vsub.s32 %v1259, %v1261
        %v1263 = vrot.slane %v1235, %v1262
        %v1264 = vcombine.high %v1242, %v1242
        %v1265 = vcombine.high %v1249, %v1249
        %v1266 = vcombine.high %v1256, %v1256
        %v1267 = vcombine.high %v1263, %v1263
        %v1268 = vcombine.high %v1160, %v1160
        %v1270 = vunpack.c.l.s4 1966171168
        %v1271 = vunpack.c.0.s8 %v1270
        %v1272 = vlaneseq
        %v1273 = vshrl.u32 %v1272, 7
        %v1274 = vsub.s32 %v1271, %v1273
        %v1275 = vrot.slane %v1160, %v1274
        %v1277 = vunpack.c.l.s4 1966171168
        %v1278 = vunpack.c.0.s8 %v1277
        %v1279 = vlaneseq
        %v1280 = vshrl.u32 %v1279, 7
        %v1281 = vsub.s32 %v1278, %v1280
        %v1282 = vrot.slane %v1268, %v1281
        %v1283 = vcombine.high %v1275, %v1275
        %v1284 = vcombine.high %v1282, %v1282
        %v1286 = vunpack.c.l.s4 1966171168
        %v1287 = vunpack.c.0.s8 %v1286
        %v1288 = vlaneseq
        %v1289 = vshrl.u32 %v1288, 7
        %v1290 = vsub.s32 %v1287, %v1289
        %v1291 = vrot.slane %v1275, %v1290
        %v1293 = vunpack.c.l.s4 1966171168
        %v1294 = vunpack.c.0.s8 %v1293
        %v1295 = vlaneseq
        %v1296 = vshrl.u32 %v1295, 7
        %v1297 = vsub.s32 %v1294, %v1296
        %v1298 = vrot.slane %v1282, %v1297
        %v1300 = vunpack.c.l.s4 1966171168
        %v1301 = vunpack.c.0.s8 %v1300
        %v1302 = vlaneseq
        %v1303 = vshrl.u32 %v1302, 7
        %v1304 = vsub.s32 %v1301, %v1303
        %v1305 = vrot.slane %v1283, %v1304
        %v1307 = vunpack.c.l.s4 1966171168
        %v1308 = vunpack.c.0.s8 %v1307
        %v1309 = vlaneseq
        %v1310 = vshrl.u32 %v1309, 7
        %v1311 = vsub.s32 %v1308, %v1310
        %v1312 = vrot.slane %v1284, %v1311
        %v1313 = vcombine.high %v1291, %v1291
        %v1314 = vcombine.high %v1298, %v1298
        %v1315 = vcombine.high %v1305, %v1305
        %v1316 = vcombine.high %v1312, %v1312
        %v1317 = vcombine.high %v1161, %v1161
        %v1319 = vunpack.c.l.s4 1966171168
        %v1320 = vunpack.c.0.s8 %v1319
        %v1321 = vlaneseq
        %v1322 = vshrl.u32 %v1321, 7
        %v1323 = vsub.s32 %v1320, %v1322
        %v1324 = vrot.slane %v1161, %v1323
        %v1326 = vunpack.c.l.s4 1966171168
        %v1327 = vunpack.c.0.s8 %v1326
        %v1328 = vlaneseq
        %v1329 = vshrl.u32 %v1328, 7
        %v1330 = vsub.s32 %v1327, %v1329
        %v1331 = vrot.slane %v1317, %v1330
        %v1332 = vcombine.high %v1324, %v1324
        %v1333 = vcombine.high %v1331, %v1331
        %v1335 = vunpack.c.l.s4 1966171168
        %v1336 = vunpack.c.0.s8 %v1335
        %v1337 = vlaneseq
        %v1338 = vshrl.u32 %v1337, 7
        %v1339 = vsub.s32 %v1336, %v1338
        %v1340 = vrot.slane %v1324, %v1339
        %v1342 = vunpack.c.l.s4 1966171168
        %v1343 = vunpack.c.0.s8 %v1342
        %v1344 = vlaneseq
        %v1345 = vshrl.u32 %v1344, 7
        %v1346 = vsub.s32 %v1343, %v1345
        %v1347 = vrot.slane %v1331, %v1346
        %v1349 = vunpack.c.l.s4 1966171168
        %v1350 = vunpack.c.0.s8 %v1349
        %v1351 = vlaneseq
        %v1352 = vshrl.u32 %v1351, 7
        %v1353 = vsub.s32 %v1350, %v1352
        %v1354 = vrot.slane %v1332, %v1353
        %v1356 = vunpack.c.l.s4 1966171168
        %v1357 = vunpack.c.0.s8 %v1356
        %v1358 = vlaneseq
        %v1359 = vshrl.u32 %v1358, 7
        %v1360 = vsub.s32 %v1357, %v1359
        %v1361 = vrot.slane %v1333, %v1360
        %v1362 = vcombine.high %v1340, %v1340
        %v1363 = vcombine.high %v1347, %v1347
        %v1364 = vcombine.high %v1354, %v1354
        %v1365 = vcombine.high %v1361, %v1361
        %v1366 = vcombine.high %v1162, %v1162
        %v1368 = vunpack.c.l.s4 1966171168
        %v1369 = vunpack.c.0.s8 %v1368
        %v1370 = vlaneseq
        %v1371 = vshrl.u32 %v1370, 7
        %v1372 = vsub.s32 %v1369, %v1371
        %v1373 = vrot.slane %v1162, %v1372
        %v1375 = vunpack.c.l.s4 1966171168
        %v1376 = vunpack.c.0.s8 %v1375
        %v1377 = vlaneseq
        %v1378 = vshrl.u32 %v1377, 7
        %v1379 = vsub.s32 %v1376, %v1378
        %v1380 = vrot.slane %v1366, %v1379
        %v1381 = vcombine.high %v1373, %v1373
        %v1382 = vcombine.high %v1380, %v1380
        %v1384 = vunpack.c.l.s4 1966171168
        %v1385 = vunpack.c.0.s8 %v1384
        %v1386 = vlaneseq
        %v1387 = vshrl.u32 %v1386, 7
        %v1388 = vsub.s32 %v1385, %v1387
        %v1389 = vrot.slane %v1373, %v1388
        %v1391 = vunpack.c.l.s4 1966171168
        %v1392 = vunpack.c.0.s8 %v1391
        %v1393 = vlaneseq
        %v1394 = vshrl.u32 %v1393, 7
        %v1395 = vsub.s32 %v1392, %v1394
        %v1396 = vrot.slane %v1380, %v1395
        %v1398 = vunpack.c.l.s4 1966171168
        %v1399 = vunpack.c.0.s8 %v1398
        %v1400 = vlaneseq
        %v1401 = vshrl.u32 %v1400, 7
        %v1402 = vsub.s32 %v1399, %v1401
        %v1403 = vrot.slane %v1381, %v1402
        %v1405 = vunpack.c.l.s4 1966171168
        %v1406 = vunpack.c.0.s8 %v1405
        %v1407 = vlaneseq
        %v1408 = vshrl.u32 %v1407, 7
        %v1409 = vsub.s32 %v1406, %v1408
        %v1410 = vrot.slane %v1382, %v1409
        %v1411 = vcombine.high %v1389, %v1389
        %v1412 = vcombine.high %v1396, %v1396
        %v1413 = vcombine.high %v1403, %v1403
        %v1414 = vcombine.high %v1410, %v1410
        %v1416 = vunpack.c.l.s4 1966171168
        %v1417 = vunpack.c.0.s8 %v1416
        %v1418 = vlaneseq
        %v1419 = vshrl.u32 %v1418, 7
        %v1420 = vsub.s32 %v1417, %v1419
        %v1421 = vrot.slane %v1163, %v1420
        %v1423 = vunpack.c.l.s4 1966171168
        %v1424 = vunpack.c.0.s8 %v1423
        %v1425 = vlaneseq
        %v1426 = vshrl.u32 %v1425, 7
        %v1427 = vsub.s32 %v1424, %v1426
        %v1428 = vrot.slane %v1421, %v1427
        %v1429 = vunpack.i.l.s16 %v1193
        %v1430 = vunpack.i.h.s16 %v1193
        %v1431 = vunpack.i.l.s16 %v1207
        %v1432 = vunpack.i.h.s16 %v1207
        %v1433 = vunpack.i.l.s16 %v1215
        %v1434 = vunpack.i.h.s16 %v1215
        %v1435 = vunpack.i.l.s16 %v1217
        %v1436 = vunpack.i.h.s16 %v1217
        %v1437 = vunpack.i.l.s16 %v1200
        %v1438 = vunpack.i.h.s16 %v1200
        %v1439 = vunpack.i.l.s16 %v1214
        %v1440 = vunpack.i.h.s16 %v1214
        %v1441 = vunpack.i.l.s16 %v1216
        %v1442 = vunpack.i.h.s16 %v1216
        %v1443 = vunpack.i.l.s16 %v1218
        %v1444 = vunpack.i.h.s16 %v1218
        %v1445 = vunpack.i.l.s16 %v1242
        %v1446 = vunpack.i.h.s16 %v1242
        %v1447 = vunpack.i.l.s16 %v1256
        %v1448 = vunpack.i.h.s16 %v1256
        %v1449 = vunpack.i.l.s16 %v1264
        %v1450 = vunpack.i.h.s16 %v1264
        %v1451 = vunpack.i.l.s16 %v1266
        %v1452 = vunpack.i.h.s16 %v1266
        %v1453 = vunpack.i.l.s16 %v1249
        %v1454 = vunpack.i.h.s16 %v1249
        %v1455 = vunpack.i.l.s16 %v1263
        %v1456 = vunpack.i.h.s16 %v1263
        %v1457 = vunpack.i.l.s16 %v1265
        %v1458 = vunpack.i.h.s16 %v1265
        %v1459 = vunpack.i.l.s16 %v1267
        %v1460 = vunpack.i.h.s16 %v1267
        %v1461 = vunpack.i.l.s16 %v1291
        %v1462 = vunpack.i.h.s16 %v1291
        %v1463 = vunpack.i.l.s16 %v1305
        %v1464 = vunpack.i.h.s16 %v1305
        %v1465 = vunpack.i.l.s16 %v1313
        %v1466 = vunpack.i.h.s16 %v1313
        %v1467 = vunpack.i.l.s16 %v1315
        %v1468 = vunpack.i.h.s16 %v1315
        %v1469 = vunpack.i.l.s16 %v1298
        %v1470 = vunpack.i.h.s16 %v1298
        %v1471 = vunpack.i.l.s16 %v1312
        %v1472 = vunpack.i.h.s16 %v1312
        %v1473 = vunpack.i.l.s16 %v1314
        %v1474 = vunpack.i.h.s16 %v1314
        %v1475 = vunpack.i.l.s16 %v1316
        %v1476 = vunpack.i.h.s16 %v1316
        %v1477 = vunpack.i.l.s16 %v1340
        %v1478 = vunpack.i.h.s16 %v1340
        %v1479 = vunpack.i.l.s16 %v1354
        %v1480 = vunpack.i.h.s16 %v1354
        %v1481 = vunpack.i.l.s16 %v1362
        %v1482 = vunpack.i.h.s16 %v1362
        %v1483 = vunpack.i.l.s16 %v1364
        %v1484 = vunpack.i.h.s16 %v1364
        %v1485 = vunpack.i.l.s16 %v1347
        %v1486 = vunpack.i.h.s16 %v1347
        %v1487 = vunpack.i.l.s16 %v1361
        %v1488 = vunpack.i.h.s16 %v1361
        %v1489 = vunpack.i.l.s16 %v1363
        %v1490 = vunpack.i.h.s16 %v1363
        %v1491 = vunpack.i.l.s16 %v1365
        %v1492 = vunpack.i.h.s16 %v1365
        %v1493 = vunpack.i.l.s16 %v1389
        %v1494 = vunpack.i.h.s16 %v1389
        %v1495 = vunpack.i.l.s16 %v1403
        %v1496 = vunpack.i.h.s16 %v1403
        %v1497 = vunpack.i.l.s16 %v1411
        %v1498 = vunpack.i.h.s16 %v1411
        %v1499 = vunpack.i.l.s16 %v1413
        %v1500 = vunpack.i.h.s16 %v1413
        %v1501 = vunpack.i.l.s16 %v1396
        %v1502 = vunpack.i.h.s16 %v1396
        %v1503 = vunpack.i.l.s16 %v1410
        %v1504 = vunpack.i.h.s16 %v1410
        %v1505 = vunpack.i.l.s16 %v1412
        %v1506 = vunpack.i.h.s16 %v1412
        %v1507 = vunpack.i.l.s16 %v1414
        %v1508 = vunpack.i.h.s16 %v1414
        %v1509 = vunpack.i.l.s16 %v1428
        %v1510 = vpack.i.b16 %v1430, %v1429
        %v1511 = vpack.i.b16 %v1432, %v1431
        %v1512 = vpack.i.b16 %v1434, %v1433
        %v1513 = vpack.i.b16 %v1436, %v1435
        %v1514 = vpack.i.b16 %v1439, %v1438
        %v1515 = vpack.i.b16 %v1441, %v1440
        %v1516 = vpack.i.b16 %v1443, %v1442
        %v1517 = vpack.i.b16 %v1445, %v1444
        %v1518 = vpack.i.b16 %v1448, %v1447
        %v1519 = vpack.i.b16 %v1450, %v1449
        %v1520 = vpack.i.b16 %v1452, %v1451
        %v1521 = vpack.i.b16 %v1454, %v1453
        %v1522 = vpack.i.b16 %v1457, %v1456
        %v1523 = vpack.i.b16 %v1459, %v1458
        %v1524 = vpack.i.b16 %v1461, %v1460
        %v1525 = vpack.i.b16 %v1463, %v1462
        %v1526 = vpack.i.b16 %v1466, %v1465
        %v1527 = vpack.i.b16 %v1468, %v1467
        %v1528 = vpack.i.b16 %v1470, %v1469
        %v1529 = vpack.i.b16 %v1472, %v1471
        %v1530 = vpack.i.b16 %v1475, %v1474
        %v1531 = vpack.i.b16 %v1477, %v1476
        %v1532 = vpack.i.b16 %v1479, %v1478
        %v1533 = vpack.i.b16 %v1481, %v1480
        %v1534 = vpack.i.b16 %v1484, %v1483
        %v1535 = vpack.i.b16 %v1486, %v1485
        %v1536 = vpack.i.b16 %v1488, %v1487
        %v1537 = vpack.i.b16 %v1490, %v1489
        %v1538 = vpack.i.b16 %v1493, %v1492
        %v1539 = vpack.i.b16 %v1495, %v1494
        %v1540 = vpack.i.b16 %v1497, %v1496
        %v1541 = vpack.i.b16 %v1499, %v1498
        %v1542 = vcombine.low %v1510, %v1511
        %v1543 = vcombine.low %v1512, %v1513
        %v1545 = vunpack.c.l.s4 1966171168
        %v1546 = vunpack.c.0.s8 %v1545
        %v1547 = vlaneseq
        %v1548 = vshrl.u32 %v1547, 7
        %v1549 = vsub.s32 %v1546, %v1548
        %v1550 = vrot.slane %v1542, %v1549
        %v1552 = vunpack.c.l.s4 1966171168
        %v1553 = vunpack.c.0.s8 %v1552
        %v1554 = vlaneseq
        %v1555 = vshrl.u32 %v1554, 7
        %v1556 = vsub.s32 %v1553, %v1555
        %v1557 = vrot.slane %v1543, %v1556
        %v1558 = vcombine.low %v1550, %v1557
        %v1560 = vunpack.c.l.s4 1966171168
        %v1561 = vunpack.c.0.s8 %v1560
        %v1562 = vlaneseq
        %v1563 = vshrl.u32 %v1562, 7
        %v1564 = vsub.s32 %v1561, %v1563
        %v1565 = vrot.slane %v1558, %v1564
        %v1566 = vcombine.low %v1514, %v1515
        %v1567 = vcombine.low %v1516, %v1517
        %v1569 = vunpack.c.l.s4 1966171168
        %v1570 = vunpack.c.0.s8 %v1569
        %v1571 = vlaneseq
        %v1572 = vshrl.u32 %v1571, 7
        %v1573 = vsub.s32 %v1570, %v1572
        %v1574 = vrot.slane %v1566, %v1573
        %v1576 = vunpack.c.l.s4 1966171168
        %v1577 = vunpack.c.0.s8 %v1576
        %v1578 = vlaneseq
        %v1579 = vshrl.u32 %v1578, 7
        %v1580 = vsub.s32 %v1577, %v1579
        %v1581 = vrot.slane %v1567, %v1580
        %v1582 = vcombine.low %v1574, %v1581
        %v1584 = vunpack.c.l.s4 1966171168
        %v1585 = vunpack.c.0.s8 %v1584
        %v1586 = vlaneseq
        %v1587 = vshrl.u32 %v1586, 7
        %v1588 = vsub.s32 %v1585, %v1587
        %v1589 = vrot.slane %v1582, %v1588
        %v1590 = vcombine.low %v1518, %v1519
        %v1591 = vcombine.low %v1520, %v1521
        %v1593 = vunpack.c.l.s4 1966171168
        %v1594 = vunpack.c.0.s8 %v1593
        %v1595 = vlaneseq
        %v1596 = vshrl.u32 %v1595, 7
        %v1597 = vsub.s32 %v1594, %v1596
        %v1598 = vrot.slane %v1590, %v1597
        %v1600 = vunpack.c.l.s4 1966171168
        %v1601 = vunpack.c.0.s8 %v1600
        %v1602 = vlaneseq
        %v1603 = vshrl.u32 %v1602, 7
        %v1604 = vsub.s32 %v1601, %v1603
        %v1605 = vrot.slane %v1591, %v1604
        %v1606 = vcombine.low %v1598, %v1605
        %v1608 = vunpack.c.l.s4 1966171168
        %v1609 = vunpack.c.0.s8 %v1608
        %v1610 = vlaneseq
        %v1611 = vshrl.u32 %v1610, 7
        %v1612 = vsub.s32 %v1609, %v1611
        %v1613 = vrot.slane %v1606, %v1612
        %v1614 = vcombine.low %v1522, %v1523
        %v1615 = vcombine.low %v1524, %v1525
        %v1617 = vunpack.c.l.s4 1966171168
        %v1618 = vunpack.c.0.s8 %v1617
        %v1619 = vlaneseq
        %v1620 = vshrl.u32 %v1619, 7
        %v1621 = vsub.s32 %v1618, %v1620
        %v1622 = vrot.slane %v1614, %v1621
        %v1624 = vunpack.c.l.s4 1966171168
        %v1625 = vunpack.c.0.s8 %v1624
        %v1626 = vlaneseq
        %v1627 = vshrl.u32 %v1626, 7
        %v1628 = vsub.s32 %v1625, %v1627
        %v1629 = vrot.slane %v1615, %v1628
        %v1630 = vcombine.low %v1622, %v1629
        %v1632 = vunpack.c.l.s4 1966171168
        %v1633 = vunpack.c.0.s8 %v1632
        %v1634 = vlaneseq
        %v1635 = vshrl.u32 %v1634, 7
        %v1636 = vsub.s32 %v1633, %v1635
        %v1637 = vrot.slane %v1630, %v1636
        %v1638 = vcombine.low %v1526, %v1527
        %v1639 = vcombine.low %v1528, %v1529
        %v1641 = vunpack.c.l.s4 1966171168
        %v1642 = vunpack.c.0.s8 %v1641
        %v1643 = vlaneseq
        %v1644 = vshrl.u32 %v1643, 7
        %v1645 = vsub.s32 %v1642, %v1644
        %v1646 = vrot.slane %v1638, %v1645
        %v1648 = vunpack.c.l.s4 1966171168
        %v1649 = vunpack.c.0.s8 %v1648
        %v1650 = vlaneseq
        %v1651 = vshrl.u32 %v1650, 7
        %v1652 = vsub.s32 %v1649, %v1651
        %v1653 = vrot.slane %v1639, %v1652
        %v1654 = vcombine.low %v1646, %v1653
        %v1656 = vunpack.c.l.s4 1966171168
        %v1657 = vunpack.c.0.s8 %v1656
        %v1658 = vlaneseq
        %v1659 = vshrl.u32 %v1658, 7
        %v1660 = vsub.s32 %v1657, %v1659
        %v1661 = vrot.slane %v1654, %v1660
        %v1662 = vcombine.low %v1530, %v1531
        %v1663 = vcombine.low %v1532, %v1533
        %v1665 = vunpack.c.l.s4 1966171168
        %v1666 = vunpack.c.0.s8 %v1665
        %v1667 = vlaneseq
        %v1668 = vshrl.u32 %v1667, 7
        %v1669 = vsub.s32 %v1666, %v1668
        %v1670 = vrot.slane %v1662, %v1669
        %v1672 = vunpack.c.l.s4 1966171168
        %v1673 = vunpack.c.0.s8 %v1672
        %v1674 = vlaneseq
        %v1675 = vshrl.u32 %v1674, 7
        %v1676 = vsub.s32 %v1673, %v1675
        %v1677 = vrot.slane %v1663, %v1676
        %v1678 = vcombine.low %v1670, %v1677
        %v1680 = vunpack.c.l.s4 1966171168
        %v1681 = vunpack.c.0.s8 %v1680
        %v1682 = vlaneseq
        %v1683 = vshrl.u32 %v1682, 7
        %v1684 = vsub.s32 %v1681, %v1683
        %v1685 = vrot.slane %v1678, %v1684
        %v1686 = vcombine.low %v1534, %v1535
        %v1687 = vcombine.low %v1536, %v1537
        %v1689 = vunpack.c.l.s4 1966171168
        %v1690 = vunpack.c.0.s8 %v1689
        %v1691 = vlaneseq
        %v1692 = vshrl.u32 %v1691, 7
        %v1693 = vsub.s32 %v1690, %v1692
        %v1694 = vrot.slane %v1686, %v1693
        %v1696 = vunpack.c.l.s4 1966171168
        %v1697 = vunpack.c.0.s8 %v1696
        %v1698 = vlaneseq
        %v1699 = vshrl.u32 %v1698, 7
        %v1700 = vsub.s32 %v1697, %v1699
        %v1701 = vrot.slane %v1687, %v1700
        %v1702 = vcombine.low %v1694, %v1701
        %v1704 = vunpack.c.l.s4 1966171168
        %v1705 = vunpack.c.0.s8 %v1704
        %v1706 = vlaneseq
        %v1707 = vshrl.u32 %v1706, 7
        %v1708 = vsub.s32 %v1705, %v1707
        %v1709 = vrot.slane %v1702, %v1708
        %v1710 = vcombine.low %v1538, %v1539
        %v1711 = vcombine.low %v1540, %v1541
        %v1713 = vunpack.c.l.s4 1966171168
        %v1714 = vunpack.c.0.s8 %v1713
        %v1715 = vlaneseq
        %v1716 = vshrl.u32 %v1715, 7
        %v1717 = vsub.s32 %v1714, %v1716
        %v1718 = vrot.slane %v1710, %v1717
        %v1720 = vunpack.c.l.s4 1966171168
        %v1721 = vunpack.c.0.s8 %v1720
        %v1722 = vlaneseq
        %v1723 = vshrl.u32 %v1722, 7
        %v1724 = vsub.s32 %v1721, %v1723
        %v1725 = vrot.slane %v1711, %v1724
        %v1726 = vcombine.low %v1718, %v1725
        %v1728 = vunpack.c.l.s4 1966171168
        %v1729 = vunpack.c.0.s8 %v1728
        %v1730 = vlaneseq
        %v1731 = vshrl.u32 %v1730, 7
        %v1732 = vsub.s32 %v1729, %v1731
        %v1733 = vrot.slane %v1726, %v1732
        %v1734 = vpack.i.b16 %v1431, %v1430
        %v1735 = vpack.i.b16 %v1433, %v1432
        %v1736 = vpack.i.b16 %v1435, %v1434
        %v1737 = vpack.i.b16 %v1437, %v1436
        %v1738 = vpack.i.b16 %v1440, %v1439
        %v1739 = vpack.i.b16 %v1442, %v1441
        %v1740 = vpack.i.b16 %v1444, %v1443
        %v1741 = vpack.i.b16 %v1446, %v1445
        %v1742 = vpack.i.b16 %v1449, %v1448
        %v1743 = vpack.i.b16 %v1451, %v1450
        %v1744 = vpack.i.b16 %v1453, %v1452
        %v1745 = vpack.i.b16 %v1455, %v1454
        %v1746 = vpack.i.b16 %v1458, %v1457
        %v1747 = vpack.i.b16 %v1460, %v1459
        %v1748 = vpack.i.b16 %v1462, %v1461
        %v1749 = vpack.i.b16 %v1464, %v1463
        %v1750 = vpack.i.b16 %v1467, %v1466
        %v1751 = vpack.i.b16 %v1469, %v1468
        %v1752 = vpack.i.b16 %v1471, %v1470
        %v1753 = vpack.i.b16 %v1473, %v1472
        %v1754 = vpack.i.b16 %v1476, %v1475
        %v1755 = vpack.i.b16 %v1478, %v1477
        %v1756 = vpack.i.b16 %v1480, %v1479
        %v1757 = vpack.i.b16 %v1482, %v1481
        %v1758 = vpack.i.b16 %v1485, %v1484
        %v1759 = vpack.i.b16 %v1487, %v1486
        %v1760 = vpack.i.b16 %v1489, %v1488
        %v1761 = vpack.i.b16 %v1491, %v1490
        %v1762 = vpack.i.b16 %v1494, %v1493
        %v1763 = vpack.i.b16 %v1496, %v1495
        %v1764 = vpack.i.b16 %v1498, %v1497
        %v1765 = vpack.i.b16 %v1500, %v1499
        %v1766 = vcombine.low %v1734, %v1735
        %v1767 = vcombine.low %v1736, %v1737
        %v1769 = vunpack.c.l.s4 1966171168
        %v1770 = vunpack.c.0.s8 %v1769
        %v1771 = vlaneseq
        %v1772 = vshrl.u32 %v1771, 7
        %v1773 = vsub.s32 %v1770, %v1772
        %v1774 = vrot.slane %v1766, %v1773
        %v1776 = vunpack.c.l.s4 1966171168
        %v1777 = vunpack.c.0.s8 %v1776
        %v1778 = vlaneseq
        %v1779 = vshrl.u32 %v1778, 7
        %v1780 = vsub.s32 %v1777, %v1779
        %v1781 = vrot.slane %v1767, %v1780
        %v1782 = vcombine.low %v1774, %v1781
        %v1784 = vunpack.c.l.s4 1966171168
        %v1785 = vunpack.c.0.s8 %v1784
        %v1786 = vlaneseq
        %v1787 = vshrl.u32 %v1786, 7
        %v1788 = vsub.s32 %v1785, %v1787
        %v1789 = vrot.slane %v1782, %v1788
        %v1790 = vcombine.low %v1738, %v1739
        %v1791 = vcombine.low %v1740, %v1741
        %v1793 = vunpack.c.l.s4 1966171168
        %v1794 = vunpack.c.0.s8 %v1793
        %v1795 = vlaneseq
        %v1796 = vshrl.u32 %v1795, 7
        %v1797 = vsub.s32 %v1794, %v1796
        %v1798 = vrot.slane %v1790, %v1797
        %v1800 = vunpack.c.l.s4 1966171168
        %v1801 = vunpack.c.0.s8 %v1800
        %v1802 = vlaneseq
        %v1803 = vshrl.u32 %v1802, 7
        %v1804 = vsub.s32 %v1801, %v1803
        %v1805 = vrot.slane %v1791, %v1804
        %v1806 = vcombine.low %v1798, %v1805
        %v1808 = vunpack.c.l.s4 1966171168
        %v1809 = vunpack.c.0.s8 %v1808
        %v1810 = vlaneseq
        %v1811 = vshrl.u32 %v1810, 7
        %v1812 = vsub.s32 %v1809, %v1811
        %v1813 = vrot.slane %v1806, %v1812
        %v1814 = vcombine.low %v1742, %v1743
        %v1815 = vcombine.low %v1744, %v1745
        %v1817 = vunpack.c.l.s4 1966171168
        %v1818 = vunpack.c.0.s8 %v1817
        %v1819 = vlaneseq
        %v1820 = vshrl.u32 %v1819, 7
        %v1821 = vsub.s32 %v1818, %v1820
        %v1822 = vrot.slane %v1814, %v1821
        %v1824 = vunpack.c.l.s4 1966171168
        %v1825 = vunpack.c.0.s8 %v1824
        %v1826 = vlaneseq
        %v1827 = vshrl.u32 %v1826, 7
        %v1828 = vsub.s32 %v1825, %v1827
        %v1829 = vrot.slane %v1815, %v1828
        %v1830 = vcombine.low %v1822, %v1829
        %v1832 = vunpack.c.l.s4 1966171168
        %v1833 = vunpack.c.0.s8 %v1832
        %v1834 = vlaneseq
        %v1835 = vshrl.u32 %v1834, 7
        %v1836 = vsub.s32 %v1833, %v1835
        %v1837 = vrot.slane %v1830, %v1836
        %v1838 = vcombine.low %v1746, %v1747
        %v1839 = vcombine.low %v1748, %v1749
        %v1841 = vunpack.c.l.s4 1966171168
        %v1842 = vunpack.c.0.s8 %v1841
        %v1843 = vlaneseq
        %v1844 = vshrl.u32 %v1843, 7
        %v1845 = vsub.s32 %v1842, %v1844
        %v1846 = vrot.slane %v1838, %v1845
        %v1848 = vunpack.c.l.s4 1966171168
        %v1849 = vunpack.c.0.s8 %v1848
        %v1850 = vlaneseq
        %v1851 = vshrl.u32 %v1850, 7
        %v1852 = vsub.s32 %v1849, %v1851
        %v1853 = vrot.slane %v1839, %v1852
        %v1854 = vcombine.low %v1846, %v1853
        %v1856 = vunpack.c.l.s4 1966171168
        %v1857 = vunpack.c.0.s8 %v1856
        %v1858 = vlaneseq
        %v1859 = vshrl.u32 %v1858, 7
        %v1860 = vsub.s32 %v1857, %v1859
        %v1861 = vrot.slane %v1854, %v1860
        %v1862 = vcombine.low %v1750, %v1751
        %v1863 = vcombine.low %v1752, %v1753
        %v1865 = vunpack.c.l.s4 1966171168
        %v1866 = vunpack.c.0.s8 %v1865
        %v1867 = vlaneseq
        %v1868 = vshrl.u32 %v1867, 7
        %v1869 = vsub.s32 %v1866, %v1868
        %v1870 = vrot.slane %v1862, %v1869
        %v1872 = vunpack.c.l.s4 1966171168
        %v1873 = vunpack.c.0.s8 %v1872
        %v1874 = vlaneseq
        %v1875 = vshrl.u32 %v1874, 7
        %v1876 = vsub.s32 %v1873, %v1875
        %v1877 = vrot.slane %v1863, %v1876
        %v1878 = vcombine.low %v1870, %v1877
        %v1880 = vunpack.c.l.s4 1966171168
        %v1881 = vunpack.c.0.s8 %v1880
        %v1882 = vlaneseq
        %v1883 = vshrl.u32 %v1882, 7
        %v1884 = vsub.s32 %v1881, %v1883
        %v1885 = vrot.slane %v1878, %v1884
        %v1886 = vcombine.low %v1754, %v1755
        %v1887 = vcombine.low %v1756, %v1757
        %v1889 = vunpack.c.l.s4 1966171168
        %v1890 = vunpack.c.0.s8 %v1889
        %v1891 = vlaneseq
        %v1892 = vshrl.u32 %v1891, 7
        %v1893 = vsub.s32 %v1890, %v1892
        %v1894 = vrot.slane %v1886, %v1893
        %v1896 = vunpack.c.l.s4 1966171168
        %v1897 = vunpack.c.0.s8 %v1896
        %v1898 = vlaneseq
        %v1899 = vshrl.u32 %v1898, 7
        %v1900 = vsub.s32 %v1897, %v1899
        %v1901 = vrot.slane %v1887, %v1900
        %v1902 = vcombine.low %v1894, %v1901
        %v1904 = vunpack.c.l.s4 1966171168
        %v1905 = vunpack.c.0.s8 %v1904
        %v1906 = vlaneseq
        %v1907 = vshrl.u32 %v1906, 7
        %v1908 = vsub.s32 %v1905, %v1907
        %v1909 = vrot.slane %v1902, %v1908
        %v1910 = vcombine.low %v1758, %v1759
        %v1911 = vcombine.low %v1760, %v1761
        %v1913 = vunpack.c.l.s4 1966171168
        %v1914 = vunpack.c.0.s8 %v1913
        %v1915 = vlaneseq
        %v1916 = vshrl.u32 %v1915, 7
        %v1917 = vsub.s32 %v1914, %v1916
        %v1918 = vrot.slane %v1910, %v1917
        %v1920 = vunpack.c.l.s4 1966171168
        %v1921 = vunpack.c.0.s8 %v1920
        %v1922 = vlaneseq
        %v1923 = vshrl.u32 %v1922, 7
        %v1924 = vsub.s32 %v1921, %v1923
        %v1925 = vrot.slane %v1911, %v1924
        %v1926 = vcombine.low %v1918, %v1925
        %v1928 = vunpack.c.l.s4 1966171168
        %v1929 = vunpack.c.0.s8 %v1928
        %v1930 = vlaneseq
        %v1931 = vshrl.u32 %v1930, 7
        %v1932 = vsub.s32 %v1929, %v1931
        %v1933 = vrot.slane %v1926, %v1932
        %v1934 = vcombine.low %v1762, %v1763
        %v1935 = vcombine.low %v1764, %v1765
        %v1937 = vunpack.c.l.s4 1966171168
        %v1938 = vunpack.c.0.s8 %v1937
        %v1939 = vlaneseq
        %v1940 = vshrl.u32 %v1939, 7
        %v1941 = vsub.s32 %v1938, %v1940
        %v1942 = vrot.slane %v1934, %v1941
        %v1944 = vunpack.c.l.s4 1966171168
        %v1945 = vunpack.c.0.s8 %v1944
        %v1946 = vlaneseq
        %v1947 = vshrl.u32 %v1946, 7
        %v1948 = vsub.s32 %v1945, %v1947
        %v1949 = vrot.slane %v1935, %v1948
        %v1950 = vcombine.low %v1942, %v1949
        %v1952 = vunpack.c.l.s4 1966171168
        %v1953 = vunpack.c.0.s8 %v1952
        %v1954 = vlaneseq
        %v1955 = vshrl.u32 %v1954, 7
        %v1956 = vsub.s32 %v1953, %v1955
        %v1957 = vrot.slane %v1950, %v1956
        %1958 = vrot.lane.b32.xlu0 %v1789, 64
        %v1959 = vpop.permute.xlu0 %1958
        %1960 = vrot.lane.b32.xlu0 %v1813, 64
        %v1961 = vpop.permute.xlu0 %1960
        %1962 = vrot.lane.b32.xlu0 %v1837, 64
        %v1963 = vpop.permute.xlu0 %1962
        %1964 = vrot.lane.b32.xlu0 %v1861, 64
        %v1965 = vpop.permute.xlu0 %1964
        %1966 = vrot.lane.b32.xlu0 %v1885, 64
        %v1967 = vpop.permute.xlu0 %1966
        %1968 = vrot.lane.b32.xlu0 %v1909, 64
        %v1969 = vpop.permute.xlu0 %1968
        %1970 = vrot.lane.b32.xlu0 %v1933, 64
        %v1971 = vpop.permute.xlu0 %1970
        %1972 = vrot.lane.b32.xlu0 %v1957, 64
        %v1973 = vpop.permute.xlu0 %1972
        %v1974 = vpack.i.b16 %v1502, %v1501
        %v1975 = vpack.i.b16 %v1504, %v1503
        %v1976 = vpack.i.b16 %v1506, %v1505
        %v1977 = vpack.i.b16 %v1508, %v1507
        %v1978 = vcombine.low %v1974, %v1975
        %v1979 = vcombine.low %v1976, %v1977
        %v1981 = vunpack.c.l.s4 1966171168
        %v1982 = vunpack.c.0.s8 %v1981
        %v1983 = vlaneseq
        %v1984 = vshrl.u32 %v1983, 7
        %v1985 = vsub.s32 %v1982, %v1984
        %v1986 = vrot.slane %v1978, %v1985
        %v1988 = vunpack.c.l.s4 1966171168
        %v1989 = vunpack.c.0.s8 %v1988
        %v1990 = vlaneseq
        %v1991 = vshrl.u32 %v1990, 7
        %v1992 = vsub.s32 %v1989, %v1991
        %v1993 = vrot.slane %v1979, %v1992
        %v1994 = vcombine.low %v1986, %v1993
        %v1996 = vunpack.c.l.s4 1966171168
        %v1997 = vunpack.c.0.s8 %v1996
        %v1998 = vlaneseq
        %v1999 = vshrl.u32 %v1998, 7
        %v2000 = vsub.s32 %v1997, %v1999
        %v2001 = vrot.slane %v1994, %v2000
        %v2002 = vpack.i.b16 %v1503, %v1502
        %v2003 = vpack.i.b16 %v1505, %v1504
        %v2004 = vpack.i.b16 %v1507, %v1506
        %v2005 = vpack.i.b16 %v1509, %v1508
        %v2006 = vcombine.low %v2002, %v2003
        %v2007 = vcombine.low %v2004, %v2005
        %v2009 = vunpack.c.l.s4 1966171168
        %v2010 = vunpack.c.0.s8 %v2009
        %v2011 = vlaneseq
        %v2012 = vshrl.u32 %v2011, 7
        %v2013 = vsub.s32 %v2010, %v2012
        %v2014 = vrot.slane %v2006, %v2013
        %v2016 = vunpack.c.l.s4 1966171168
        %v2017 = vunpack.c.0.s8 %v2016
        %v2018 = vlaneseq
        %v2019 = vshrl.u32 %v2018, 7
        %v2020 = vsub.s32 %v2017, %v2019
        %v2021 = vrot.slane %v2007, %v2020
        %v2022 = vcombine.low %v2014, %v2021
        %v2024 = vunpack.c.l.s4 1966171168
        %v2025 = vunpack.c.0.s8 %v2024
        %v2026 = vlaneseq
        %v2027 = vshrl.u32 %v2026, 7
        %v2028 = vsub.s32 %v2025, %v2027
        %v2029 = vrot.slane %v2022, %v2028
        %2030 = vrot.lane.b32.xlu0 %v2029, 64
        %v2031 = vpop.permute.xlu0 %2030
        %vm2032 = vcmask 523264
        %v2035 = vsel %vm2032, %v1565, %v1959
        %v2038 = vsel %vm2032, %v1589, %v1961
        %v2041 = vsel %vm2032, %v1613, %v1963
        %v2044 = vsel %vm2032, %v1637, %v1965
        %v2047 = vsel %vm2032, %v1661, %v1967
        %v2050 = vsel %vm2032, %v1685, %v1969
        %v2053 = vsel %vm2032, %v1709, %v1971
        %v2056 = vsel %vm2032, %v1733, %v1973
        %v2059 = vsel %vm2032, %v2001, %v2031
        %v2069 = vunpack.c.l.b16 %v2035
        %v2070 = vunpack.c.l.b16 %v2038
        %v2071 = vunpack.c.l.b16 %v2041
        %v2072 = vunpack.c.l.b16 %v2044
        %v2073 = vunpack.c.l.b16 %v2047
        %v2074 = vunpack.c.l.b16 %v2050
        %v2075 = vunpack.c.l.b16 %v2053
        %v2076 = vunpack.c.l.b16 %v2056
        %v2077 = vunpack.c.l.b16 %v2059
        %v2078 = vld [vmem:[#allocation7] sm:$0xf]
        %v2079 = vld [vmem:[#allocation7 + $0x4] sm:$0xf]
        %v2080 = vld [vmem:[#allocation7 + $0x8] sm:$0xf]
        %v2081 = vld [vmem:[#allocation7 + $0xc] sm:$0xf]
        %v2082 = vld [vmem:[#allocation7 + $0x10] sm:$0xf]
        %v2083 = vld [vmem:[#allocation7 + $0x14] sm:$0xf]
        %v2084 = vld [vmem:[#allocation7 + $0x18] sm:$0xf]
        %v2085 = vld [vmem:[#allocation7 + $0x1c] sm:$0xf]
        %v2086 = vld [vmem:[#allocation7 + $0x20] sm:$0xf]
        %v2087 = vld [vmem:[#allocation7 + $0x24] sm:$0xf]
        %v2088 = vld [vmem:[#allocation7 + $0x28] sm:$0xf]
        %v2089 = vld [vmem:[#allocation7 + $0x2c] sm:$0xf]
        %v2090 = vld [vmem:[#allocation7 + $0x30] sm:$0xf]
        %v2091 = vld [vmem:[#allocation7 + $0x34] sm:$0xf]
        %v2092 = vld [vmem:[#allocation7 + $0x38] sm:$0xf]
        %v2093 = vld [vmem:[#allocation7 + $0x3c] sm:$0xf]
        %v2094 = vld [vmem:[#allocation7 + $0x40] sm:$0xf]
        %v2095 = vld [vmem:[#allocation7 + $0x44] sm:$0xf]
        %v2096 = vld [vmem:[#allocation7 + $0x48] sm:$0xf]
        %v2097 = vld [vmem:[#allocation7 + $0x4c] sm:$0xf]
        %v2098 = vld [vmem:[#allocation7 + $0x50] sm:$0xf]
        %v2099 = vld [vmem:[#allocation7 + $0x54] sm:$0xf]
        %v2100 = vld [vmem:[#allocation7 + $0x58] sm:$0xf]
        %v2101 = vld [vmem:[#allocation7 + $0x5c] sm:$0xf]
        %v2102 = vld [vmem:[#allocation7 + $0x60] sm:$0xf]
        %v2103 = vld [vmem:[#allocation7 + $0x64] sm:$0xf]
        %v2104 = vld [vmem:[#allocation7 + $0x68] sm:$0xf]
        %v2105 = vld [vmem:[#allocation7 + $0x6c] sm:$0xf]
        %v2106 = vld [vmem:[#allocation7 + $0x70] sm:$0xf]
        %v2107 = vld [vmem:[#allocation7 + $0x74] sm:$0xf]
        %v2108 = vld [vmem:[#allocation7 + $0x78] sm:$0xf]
        %v2109 = vld [vmem:[#allocation7 + $0x7c] sm:$0xf]
        %v2110 = vld [vmem:[#allocation8] sm:$0x1]
        %v2112 = vlaneseq
        %v2113 = vshrl.u32 %v2112, 7
        %v2114 = vsub.s32 0, %v2113
        %v2115 = vrot.slane %v2110, %v2114
        %v2117 = vpack.c.b16 %v2070, %v2069
        %v2118 = vpack.c.b16 %v2071, %v2070
        %v2119 = vpack.c.b16 %v2072, %v2071
        %v2120 = vpack.c.b16 %v2073, %v2072
        %v2121 = vpack.c.b16 %v2074, %v2073
        %v2122 = vpack.c.b16 %v2075, %v2074
        %v2123 = vpack.c.b16 %v2076, %v2075
        %v2124 = vpack.c.b16 %v2077, %v2076
        %v2165 = vunpack.c.l.b16 %v2078
        %v2166 = vunpack.c.l.b16 %v2079
        %v2167 = vunpack.c.l.b16 %v2080
        %v2168 = vunpack.c.l.b16 %v2081
        %v2169 = vunpack.c.l.b16 %v2082
        %v2170 = vunpack.c.l.b16 %v2083
        %v2171 = vunpack.c.l.b16 %v2084
        %v2172 = vunpack.c.l.b16 %v2085
        %v2173 = vunpack.c.l.b16 %v2086
        %v2174 = vunpack.c.l.b16 %v2087
        %v2175 = vunpack.c.l.b16 %v2088
        %v2176 = vunpack.c.l.b16 %v2089
        %v2177 = vunpack.c.l.b16 %v2090
        %v2178 = vunpack.c.l.b16 %v2091
        %v2179 = vunpack.c.l.b16 %v2092
        %v2180 = vunpack.c.l.b16 %v2093
        %v2181 = vunpack.c.l.b16 %v2094
        %v2182 = vunpack.c.l.b16 %v2095
        %v2183 = vunpack.c.l.b16 %v2096
        %v2184 = vunpack.c.l.b16 %v2097
        %v2185 = vunpack.c.l.b16 %v2098
        %v2186 = vunpack.c.l.b16 %v2099
        %v2187 = vunpack.c.l.b16 %v2100
        %v2188 = vunpack.c.l.b16 %v2101
        %v2189 = vunpack.c.l.b16 %v2102
        %v2190 = vunpack.c.l.b16 %v2103
        %v2191 = vunpack.c.l.b16 %v2104
        %v2192 = vunpack.c.l.b16 %v2105
        %v2193 = vunpack.c.l.b16 %v2106
        %v2194 = vunpack.c.l.b16 %v2107
        %v2195 = vunpack.c.l.b16 %v2108
        %v2196 = vunpack.c.l.b16 %v2109
        %v2197 = vpack.c.b16 %v2166, %v2165
        %v2198 = vpack.c.b16 %v2168, %v2167
        %v2199 = vpack.c.b16 %v2170, %v2169
        %v2200 = vpack.c.b16 %v2172, %v2171
        %v2201 = vpack.c.b16 %v2174, %v2173
        %v2202 = vpack.c.b16 %v2176, %v2175
        %v2203 = vpack.c.b16 %v2178, %v2177
        %v2204 = vpack.c.b16 %v2180, %v2179
        %v2205 = vpack.c.b16 %v2182, %v2181
        %v2206 = vpack.c.b16 %v2184, %v2183
        %v2207 = vpack.c.b16 %v2186, %v2185
        %v2208 = vpack.c.b16 %v2188, %v2187
        %v2209 = vpack.c.b16 %v2190, %v2189
        %v2210 = vpack.c.b16 %v2192, %v2191
        %v2211 = vpack.c.b16 %v2194, %v2193
        %v2212 = vpack.c.b16 %v2196, %v2195
        %2229 = vmatprep.subr.bf16.mxu0 0
        %2230 = vmatpush1.bf16.msra.mxu0 %v2197
        %2231 = vmatprep.subr.bf16.mxu0 0
        %2232 = vmatpush1.bf16.msra.mxu0 %v2198
        %2233 = vmatprep.subr.bf16.mxu0 0
        %2234 = vmatpush1.bf16.msra.mxu0 %v2199
        %2235 = vmatprep.subr.bf16.mxu0 0
        %2236 = vmatpush1.bf16.msra.mxu0 %v2200
        %2237 = vmatprep.subr.bf16.mxu0 0
        %2238 = vmatpush1.bf16.msra.mxu0 %v2201
        %2239 = vmatprep.subr.bf16.mxu0 0
        %2240 = vmatpush1.bf16.msra.mxu0 %v2202
        %2241 = vmatprep.subr.bf16.mxu0 0
        %2242 = vmatpush1.bf16.msra.mxu0 %v2203
        %2243 = vmatprep.subr.bf16.mxu0 0
        %2244 = vmatpush1.bf16.msra.mxu0 %v2204
        %2245 = vmatprep.subr.bf16.mxu0 0
        %2246 = vmatpush1.bf16.msra.mxu0 %v2205
        %2247 = vmatprep.subr.bf16.mxu0 0
        %2248 = vmatpush1.bf16.msra.mxu0 %v2206
        %2249 = vmatprep.subr.bf16.mxu0 0
        %2250 = vmatpush1.bf16.msra.mxu0 %v2207
        %2251 = vmatprep.subr.bf16.mxu0 0
        %2252 = vmatpush1.bf16.msra.mxu0 %v2208
        %2253 = vmatprep.subr.bf16.mxu0 0
        %2254 = vmatpush1.bf16.msra.mxu0 %v2209
        %2255 = vmatprep.subr.bf16.mxu0 0
        %2256 = vmatpush1.bf16.msra.mxu0 %v2210
        %2257 = vmatprep.subr.bf16.mxu0 0
        %2258 = vmatpush1.bf16.msra.mxu0 %v2211
        %2259 = vmatprep.subr.bf16.mxu0 0
        %2260 = vmatpush1.bf16.msra.mxu0 %v2212
        %2261 = vmatprep.mubr.bf16.mxu0 %v2118
        %2262 = vmatmul.mubr.bf16.gmra.mrb[0].mxu0 %v2117
        %v2263 = vpop.f32.mrb[0].mxu0
        %v2264 = vadd.f32 %v2115, %v2263
        %v2265 = vpop.f32.mrb[0].mxu0
        %v2266 = vpop.f32.mrb[0].mxu0
        %v2267 = vadd.f32 %v2115, %v2266
        %v2268 = vpop.f32.mrb[0].mxu0
        %2269 = vmatprep.mubr.bf16.mxu0 %v2120
        %2270 = vmatmul.mubr.bf16.gmra.mrb[0].mxu0 %v2119
        %v2271 = vpop.f32.mrb[0].mxu0
        %v2272 = vadd.f32 %v2115, %v2271
        %v2273 = vpop.f32.mrb[0].mxu0
        %v2274 = vpop.f32.mrb[0].mxu0
        %v2275 = vadd.f32 %v2115, %v2274
        %v2276 = vpop.f32.mrb[0].mxu0
        %2277 = vmatprep.mubr.bf16.mxu0 %v2122
        %2278 = vmatmul.mubr.bf16.gmra.mrb[0].mxu0 %v2121
        %v2279 = vpop.f32.mrb[0].mxu0
        %v2280 = vadd.f32 %v2115, %v2279
        %v2281 = vpop.f32.mrb[0].mxu0
        %v2282 = vpop.f32.mrb[0].mxu0
        %v2283 = vadd.f32 %v2115, %v2282
        %v2284 = vpop.f32.mrb[0].mxu0
        %2285 = vmatprep.mubr.bf16.mxu0 %v2124
        %2286 = vmatmul.mubr.bf16.gmra.mrb[0].mxu0 %v2123
        %v2287 = vpop.f32.mrb[0].mxu0
        %v2288 = vadd.f32 %v2115, %v2287
        %v2289 = vpop.f32.mrb[0].mxu0
        %v2290 = vpop.f32.mrb[0].mxu0
        %v2291 = vadd.f32 %v2115, %v2290
        %v2292 = vpop.f32.mrb[0].mxu0
        %2293 = vdwg.mxu0
        %v2294 = vmax.f32 %v2264, 0.0
        %v2295 = vmax.f32 %v2267, 0.0
        %v2296 = vmax.f32 %v2272, 0.0
        %v2297 = vmax.f32 %v2275, 0.0
        %v2298 = vmax.f32 %v2280, 0.0
        %v2299 = vmax.f32 %v2283, 0.0
        %v2300 = vmax.f32 %v2288, 0.0
        %v2301 = vmax.f32 %v2291, 0.0
        %v2302 = vpack.c.bf16 %v2294, %v2294
        %v2303 = vpack.c.bf16 %v2295, %v2295
        %v2304 = vpack.c.bf16 %v2296, %v2296
        %v2305 = vpack.c.bf16 %v2297, %v2297
        %v2306 = vpack.c.bf16 %v2298, %v2298
        %v2307 = vpack.c.bf16 %v2299, %v2299
        %v2308 = vpack.c.bf16 %v2300, %v2300
        %v2309 = vpack.c.bf16 %v2301, %v2301
        %vm2310 = vcmask 125952
        %2311 = vst.msk [vmem:[%s275] sm:$0xf] %vm2310, %v2302
        %2312 = vst.msk [vmem:[%s275 + $0x4] sm:$0xf] %vm2310, %v2303
        %2313 = vst.msk [vmem:[%s275 + $0x8] sm:$0xf] %vm2310, %v2304
        %2314 = vst.msk [vmem:[%s275 + $0xc] sm:$0xf] %vm2310, %v2305
        %2315 = vst.msk [vmem:[%s275 + $0x10] sm:$0xf] %vm2310, %v2306
        %2316 = vst.msk [vmem:[%s275 + $0x14] sm:$0xf] %vm2310, %v2307
        %2317 = vst.msk [vmem:[%s275 + $0x18] sm:$0xf] %vm2310, %v2308
        %2318 = vst.msk [vmem:[%s275 + $0x1c] sm:$0xf] %vm2310, %v2309
        %s2319 = sand.u32 %s136, 1
        %s2320 = scalar_lea.sflag [#allocation4], %s2319
        %s2321 = sand.u32 %s136, 1
        %s2322 = smul.addr %s2321, 32
        %s2323 = scalar_lea.vmem [#allocation10], %s2322
        // Predicated region
        $region53: #{_lambda_.3} parent=35 // pred_check
          %p2324 = pneg %p146
        $region54: #{_lambda_.3} parent=35 // pred_check_branch
          %2326 = sbr.rel (%p2324) target = $region56
        $region55: #{_lambda_.3} parent=35 // pred_region
          %s2327 = smul.u32 8, %s28
          %s2329 = ssub.s32 512, 512
          %2330 = vsyncadd %s2320, %s2329
          %s2331 = smul.addr %s27, 8
          %s2332 = sadd.s32 %s2327, %s2331
          %s2333 = smul.addr %s2332, 64
          %s2334 = scalar_lea.hbm %s4, %s2333
          %s2335 = sshll.u32 %s2323, 4
          %s2336 = int_to_ptr.vmem [resolvable:$true] %s2335
          %2341 = dma.vmem_to_hbm [thread:$0]  %s2336, 512, %s2334, %s2320, 64, 64, 4
        $region56: #{_lambda_.3} parent=35 // pred_fallthru
          _
      $region36: #{_lambda_.3} parent=5 // pred_fallthru
        _
      %p2342 = scmp.le.s32.totalorder 2, %s18
      // Predicated region
      $region57: #{_lambda_.3} parent=5 // pred_check
        %p2343 = pneg %p2342
      $region58: #{_lambda_.3} parent=5 // pred_check_branch
        %2345 = sbr.rel (%p2343) target = $region60
      $region59: #{_lambda_.3} parent=5 // pred_region
        %s2346 = ssub.s32 %s18, 2
        // Predicated region
        $region61: #{_lambda_.3} parent=59 // pred_check
          %p2347 = pneg %p152
        $region62: #{_lambda_.3} parent=59 // pred_check_branch
          %2349 = sbr.rel (%p2347) target = $region64
        $region63: #{_lambda_.3} parent=59 // pred_region
          %s2350 = sand.u32 %s137, 1
          %s2351 = scalar_lea.sflag [#allocation4], %s2350
          %s2352 = sand.u32 %s137, 1
          %s2353 = smul.addr %s2352, 32
          %s2354 = scalar_lea.vmem [#allocation10], %s2353
          %2355 = dma.done %s2351, 512
        $region64: #{_lambda_.3} parent=59 // pred_fallthru
          _
      $region60: #{_lambda_.3} parent=5 // pred_fallthru
        _
    $region6: #{_lambda_.3} parent=1 // loop_footer
      %s22 = sadd.s32 1, %s18
    $region7: #{_lambda_.3} parent=1 // loop_footer_branch
      %17 = sbr.rel target = $region3
    $region8: #{_lambda_.3} parent=1 // loop_exit
      _
    %2356 = vsyncpa [#allocation3], 1
    %s2357 = scalar_lea.sflag [#allocation3], 1
    %2358 = vsyncpa %s2357, 1
    %2359 = vsyncpa [#allocation6], 1
    %2360 = vsyncpa [#allocation9], 1
    %2361 = vsyncpa [#allocation4], 1
    %s2362 = scalar_lea.sflag [#allocation4], 1
    %2363 = vsyncpa %s2362, 1

// kernel: _lambda_.5
$region0: #{_lambda_.5}
  #allocation0 [shape = 'u32[]', space=smem, size = 0x4, offset = 0x4, fixed_abs, tag = 'smem constant byte address 0x4 - core index']
  #allocation1 [shape = 'u32[144,128]{1,0:T(1,128)}', space=vmem, size = 0x12000, scoped, tag = 'internal scratch']
  #allocation2 [shape = 'f32[1,1]{1,0:T(1,128)S(1)}', space=vmem, size = 0x200, scoped, tag = 'scoped memory for _lambda_.5']
  %s0 = inlined_call_operand.hbm [shape: bf16[2,4,4,3], index: 0, kind: input, shape index: {}]
  %s1 = inlined_call_operand.hbm [shape: bf16[2,4,4,64], index: 1, kind: input, shape index: {}]
  %s2 = inlined_call_operand.hbm [shape: f32[1,3], index: 2, kind: input, shape index: {}]
  %s3 = inlined_call_operand.hbm [shape: f32[1,64], index: 3, kind: input, shape index: {}]
  %s4 = inlined_call_operand.<no memory space> [shape: f32[1,1], index: 4, kind: input, shape index: {}]
  %s5 = inlined_call_operand.hbm [shape: f32[16,4], index: 5, kind: input, shape index: {}]
  %s6 = inlined_call_operand.hbm [shape: f32[4,16], index: 6, kind: input, shape index: {}]
  %s7 = inlined_call_operand.hbm [shape: f32[2,16,16], index: 7, kind: output, shape index: {}]
  %s8 = sld [smem:[#allocation0]]
  $region85: #{_lambda_.5} parent=0
    _
  %s10 = ssub.s32 1, %s8
  %s11 = scalar_select 0, %s10, %s8
  %v12 = vstv %s4
  %13 = vst [vmem:[#allocation2] sm:$0x1] %v12
  $region1: #{_lambda_.5} parent=0
    #allocation3 [shape = 'u8[8192]{0}', space=vmem, size = 0x2000, scoped, tag = 'input window, operand 0']
    #allocation4 [shape = 's32[2]{0}', space=sflag, size = 0x8, scoped, tag = 'scoped memory for _lambda_.5']
    #allocation5 [shape = 's32[2]{0}', space=sflag, size = 0x8, scoped, tag = 'scoped memory for _lambda_.5']
    #allocation6 [shape = 'u8[8192]{0}', space=vmem, size = 0x2000, scoped, tag = 'input window, operand 1']
    #allocation7 [shape = 's32[2]{0}', space=sflag, size = 0x8, scoped, tag = 'scoped memory for _lambda_.5']
    #allocation8 [shape = 'u8[512]{0}', space=vmem, size = 0x400, scoped, tag = 'input window, operand 2, single buffered']
    #allocation9 [shape = 'u8[512]{0}', space=vmem, size = 0x400, scoped, tag = 'input window, operand 3, single buffered']
    #allocation10 [shape = 's32[1]{0}', space=sflag, size = 0x4, scoped, tag = 'scoped memory for _lambda_.5']
    #allocation11 [shape = 'u8[8192]{0}', space=vmem, size = 0x2000, scoped, tag = 'input window, operand 5, single buffered']
    #allocation12 [shape = 'u8[2048]{0}', space=vmem, size = 0x800, scoped, tag = 'input window, operand 6, single buffered']
    #allocation13 [shape = 's32[1]{0}', space=sflag, size = 0x4, scoped, tag = 'scoped memory for _lambda_.5']
    #allocation14 [shape = 'u8[16384]{0}', space=vmem, size = 0x4000, scoped, tag = 'output window, operand 0']
    %14 = vsyncpa [#allocation4], 0
    %s15 = scalar_lea.sflag [#allocation4], 1
    %16 = vsyncpa %s15, 0
    %17 = vsyncpa [#allocation7], 0
    %s18 = scalar_lea.sflag [#allocation7], 1
    %19 = vsyncpa %s18, 0
    %20 = vsyncpa [#allocation10], 0
    %21 = vsyncpa [#allocation13], 0
    %22 = vsyncpa [#allocation5], 0
    %s23 = scalar_lea.sflag [#allocation5], 1
    %24 = vsyncpa %s23, 0
    loop: start=0, step=1, limit=4
    $region2: #{_lambda_.5} parent=1 // loop_pre_header
      _
    $region3: #{_lambda_.5} parent=1 // loop_header
      %s26 = sphi 0, %s30
      %p27 = scmp.ge.s32.totalorder %s26, 4
      %s36 = sphi 0, %s38
      %s39 = sphi 0, %s36
      %s40 = sphi 0, %s39
      %s56 = sphi 0, %s40
      %s62 = sphi 0, %s64
      %s65 = sphi 0, %s62
      %s66 = sphi 0, %s65
      %s82 = sphi 0, %s66
      %s86 = sphi 0, %s86
      %s88 = sphi 0, %s86
      %s89 = sphi 0, %s88
      %s103 = sphi 0, %s89
      %s107 = sphi 0, %s107
      %s109 = sphi 0, %s107
      %s110 = sphi 0, %s109
      %s124 = sphi 0, %s110
      %s128 = sphi 0, %s128
      %s130 = sphi 0, %s128
      %s131 = sphi 0, %s130
      %s145 = sphi 0, %s131
      %s149 = sphi 0, %s149
      %s151 = sphi 0, %s149
      %s152 = sphi 0, %s151
      %s166 = sphi 0, %s152
      %s170 = sphi 0, %s170
      %s172 = sphi 0, %s170
      %s173 = sphi 0, %s172
      %s187 = sphi 0, %s173
      %s193 = sphi 0, %s195
      %s196 = sphi 0, %s193
      %s197 = sphi 0, %s196
      %s213 = sphi 0, %s197
    $region4: #{_lambda_.5} parent=1 // loop_header_branch
      %29 = sbr.rel (%p27) target = $region8
    $region5: #{_lambda_.5} parent=1 // loop_body
      %s31 = ssub.s32 %s26, 1
      %s32 = ssub.s32 %s26, 2
      %s33 = sadd.s32 %s26, 1
      %s34 = ssub.s32 %s26, %s33
      %p35 = scmp.eq.s32.totalorder %s34, 0
      %s37 = sadd.s32 %s36, 1
      %s38 = scalar_select %p35, %s36, %s37
      %p41 = pneg %p35
      %p42 = scmp.eq.s32.totalorder %s26, 1
      %p43 = por %p41, %p42
      %p44 = scmp.ne.s32.totalorder %s36, %s39
      %p45 = scmp.eq.s32.totalorder %s26, 0
      %p46 = por %p44, %p45
      %p47 = scmp.ne.s32.totalorder %s36, %s39
      %p48 = scmp.eq.s32.totalorder %s31, 1
      %p49 = por %p47, %p48
      %p50 = scmp.ne.s32.totalorder %s39, %s40
      %p51 = scmp.eq.s32.totalorder %s31, 0
      %p52 = por %p50, %p51
      %p53 = scmp.ne.s32.totalorder %s39, %s40
      %p54 = scmp.eq.s32.totalorder %s32, 1
      %p55 = por %p53, %p54
      %p57 = scmp.ne.s32.totalorder %s40, %s56
      %p58 = scmp.eq.s32.totalorder %s32, 0
      %p59 = por %p57, %p58
      %s60 = ssub.s32 %s26, %s33
      %p61 = scmp.eq.s32.totalorder %s60, 0
      %s63 = sadd.s32 %s62, 1
      %s64 = scalar_select %p61, %s62, %s63
      %p67 = pneg %p61
      %p68 = scmp.eq.s32.totalorder %s26, 1
      %p69 = por %p67, %p68
      %p70 = scmp.ne.s32.totalorder %s62, %s65
      %p71 = scmp.eq.s32.totalorder %s26, 0
      %p72 = por %p70, %p71
      %p73 = scmp.ne.s32.totalorder %s62, %s65
      %p74 = scmp.eq.s32.totalorder %s31, 1
      %p75 = por %p73, %p74
      %p76 = scmp.ne.s32.totalorder %s65, %s66
      %p77 = scmp.eq.s32.totalorder %s31, 0
      %p78 = por %p76, %p77
      %p79 = scmp.ne.s32.totalorder %s65, %s66
      %p80 = scmp.eq.s32.totalorder %s32, 1
      %p81 = por %p79, %p80
      %p83 = scmp.ne.s32.totalorder %s66, %s82
      %p84 = scmp.eq.s32.totalorder %s32, 0
      %p85 = por %p83, %p84
      %s87 = sadd.s32 %s86, 1
      %p90 = scmp.eq.s32.totalorder %s26, 1
      %p91 = scmp.ne.s32.totalorder %s86, %s88
      %p92 = scmp.eq.s32.totalorder %s26, 0
      %p93 = por %p91, %p92
      %p94 = scmp.ne.s32.totalorder %s86, %s88
      %p95 = scmp.eq.s32.totalorder %s31, 1
      %p96 = por %p94, %p95
      %p97 = scmp.ne.s32.totalorder %s88, %s89
      %p98 = scmp.eq.s32.totalorder %s31, 0
      %p99 = por %p97, %p98
      %p100 = scmp.ne.s32.totalorder %s88, %s89
      %p101 = scmp.eq.s32.totalorder %s32, 1
      %p102 = por %p100, %p101
      %p104 = scmp.ne.s32.totalorder %s89, %s103
      %p105 = scmp.eq.s32.totalorder %s32, 0
      %p106 = por %p104, %p105
      %s108 = sadd.s32 %s107, 1
      %p111 = scmp.eq.s32.totalorder %s26, 1
      %p112 = scmp.ne.s32.totalorder %s107, %s109
      %p113 = scmp.eq.s32.totalorder %s26, 0
      %p114 = por %p112, %p113
      %p115 = scmp.ne.s32.totalorder %s107, %s109
      %p116 = scmp.eq.s32.totalorder %s31, 1
      %p117 = por %p115, %p116
      %p118 = scmp.ne.s32.totalorder %s109, %s110
      %p119 = scmp.eq.s32.totalorder %s31, 0
      %p120 = por %p118, %p119
      %p121 = scmp.ne.s32.totalorder %s109, %s110
      %p122 = scmp.eq.s32.totalorder %s32, 1
      %p123 = por %p121, %p122
      %p125 = scmp.ne.s32.totalorder %s110, %s124
      %p126 = scmp.eq.s32.totalorder %s32, 0
      %p127 = por %p125, %p126
      %s129 = sadd.s32 %s128, 1
      %p132 = scmp.eq.s32.totalorder %s26, 1
      %p133 = scmp.ne.s32.totalorder %s128, %s130
      %p134 = scmp.eq.s32.totalorder %s26, 0
      %p135 = por %p133, %p134
      %p136 = scmp.ne.s32.totalorder %s128, %s130
      %p137 = scmp.eq.s32.totalorder %s31, 1
      %p138 = por %p136, %p137
      %p139 = scmp.ne.s32.totalorder %s130, %s131
      %p140 = scmp.eq.s32.totalorder %s31, 0
      %p141 = por %p139, %p140
      %p142 = scmp.ne.s32.totalorder %s130, %s131
      %p143 = scmp.eq.s32.totalorder %s32, 1
      %p144 = por %p142, %p143
      %p146 = scmp.ne.s32.totalorder %s131, %s145
      %p147 = scmp.eq.s32.totalorder %s32, 0
      %p148 = por %p146, %p147
      %s150 = sadd.s32 %s149, 1
      %p153 = scmp.eq.s32.totalorder %s26, 1
      %p154 = scmp.ne.s32.totalorder %s149, %s151
      %p155 = scmp.eq.s32.totalorder %s26, 0
      %p156 = por %p154, %p155
      %p157 = scmp.ne.s32.totalorder %s149, %s151
      %p158 = scmp.eq.s32.totalorder %s31, 1
      %p159 = por %p157, %p158
      %p160 = scmp.ne.s32.totalorder %s151, %s152
      %p161 = scmp.eq.s32.totalorder %s31, 0
      %p162 = por %p160, %p161
      %p163 = scmp.ne.s32.totalorder %s151, %s152
      %p164 = scmp.eq.s32.totalorder %s32, 1
      %p165 = por %p163, %p164
      %p167 = scmp.ne.s32.totalorder %s152, %s166
      %p168 = scmp.eq.s32.totalorder %s32, 0
      %p169 = por %p167, %p168
      %s171 = sadd.s32 %s170, 1
      %p174 = scmp.eq.s32.totalorder %s26, 1
      %p175 = scmp.ne.s32.totalorder %s170, %s172
      %p176 = scmp.eq.s32.totalorder %s26, 0
      %p177 = por %p175, %p176
      %p178 = scmp.ne.s32.totalorder %s170, %s172
      %p179 = scmp.eq.s32.totalorder %s31, 1
      %p180 = por %p178, %p179
      %p181 = scmp.ne.s32.totalorder %s172, %s173
      %p182 = scmp.eq.s32.totalorder %s31, 0
      %p183 = por %p181, %p182
      %p184 = scmp.ne.s32.totalorder %s172, %s173
      %p185 = scmp.eq.s32.totalorder %s32, 1
      %p186 = por %p184, %p185
      %p188 = scmp.ne.s32.totalorder %s173, %s187
      %p189 = scmp.eq.s32.totalorder %s32, 0
      %p190 = por %p188, %p189
      %s191 = ssub.s32 %s26, %s33
      %p192 = scmp.eq.s32.totalorder %s191, 0
      %s194 = sadd.s32 %s193, 1
      %s195 = scalar_select %p192, %s193, %s194
      %p198 = pneg %p192
      %p199 = scmp.eq.s32.totalorder %s26, 1
      %p200 = por %p198, %p199
      %p201 = scmp.ne.s32.totalorder %s193, %s196
      %p202 = scmp.eq.s32.totalorder %s26, 0
      %p203 = por %p201, %p202
      %p204 = scmp.ne.s32.totalorder %s193, %s196
      %p205 = scmp.eq.s32.totalorder %s31, 1
      %p206 = por %p204, %p205
      %p207 = scmp.ne.s32.totalorder %s196, %s197
      %p208 = scmp.eq.s32.totalorder %s31, 0
      %p209 = por %p207, %p208
      %p210 = scmp.ne.s32.totalorder %s196, %s197
      %p211 = scmp.eq.s32.totalorder %s32, 1
      %p212 = por %p210, %p211
      %p214 = scmp.ne.s32.totalorder %s197, %s213
      %p215 = scmp.eq.s32.totalorder %s32, 0
      %p216 = por %p214, %p215
      %p217 = scmp.le.s32.totalorder 1, %s26
      %p218 = scmp.lt.s32.totalorder %s26, 3
      %p219 = pnand %p217, %p218
      %p220 = pneg %p219
      // Predicated region
      $region9: #{_lambda_.5} parent=5 // pred_check
        _
      $region10: #{_lambda_.5} parent=5 // pred_check_branch
        %222 = sbr.rel (%p219) target = $region12
      $region11: #{_lambda_.5} parent=5 // pred_region
        %s223 = ssub.s32 %s26, 1
        // Predicated region
        $region13: #{_lambda_.5} parent=11 // pred_check
          %p224 = pneg %p99
        $region14: #{_lambda_.5} parent=11 // pred_check_branch
          %226 = sbr.rel (%p224) target = $region16
        $region15: #{_lambda_.5} parent=11 // pred_region
          %s228 = ssub.s32 16, 16
          %229 = vsyncadd [#allocation7], %s228
          %s231 = sshll.u32 [#allocation8], 4
          %s232 = int_to_ptr.vmem [resolvable:$true] %s231
          %234 = dma.hbm_to_vmem [thread:$0]  %s2, 16, %s232, [#allocation7]
        $region16: #{_lambda_.5} parent=11 // pred_fallthru
          _
        // Predicated region
        $region17: #{_lambda_.5} parent=11 // pred_check
          %p235 = pneg %p120
        $region18: #{_lambda_.5} parent=11 // pred_check_branch
          %237 = sbr.rel (%p235) target = $region20
        $region19: #{_lambda_.5} parent=11 // pred_region
          %s239 = ssub.s32 16, 16
          %240 = vsyncadd [#allocation10], %s239
          %s242 = sshll.u32 [#allocation9], 4
          %s243 = int_to_ptr.vmem [resolvable:$true] %s242
          %245 = dma.hbm_to_vmem [thread:$0]  %s3, 16, %s243, [#allocation10]
        $region20: #{_lambda_.5} parent=11 // pred_fallthru
          _
        // Predicated region
        $region21: #{_lambda_.5} parent=11 // pred_check
          %p246 = pneg %p141
        $region22: #{_lambda_.5} parent=11 // pred_check_branch
          %248 = sbr.rel (%p246) target = $region24
        $region23: #{_lambda_.5} parent=11 // pred_region
          _
        $region24: #{_lambda_.5} parent=11 // pred_fallthru
          _
        // Predicated region
        $region25: #{_lambda_.5} parent=11 // pred_check
          %p249 = pneg %p162
        $region26: #{_lambda_.5} parent=11 // pred_check_branch
          %251 = sbr.rel (%p249) target = $region28
        $region27: #{_lambda_.5} parent=11 // pred_region
          %s253 = ssub.s32 256, 256
          %254 = vsyncadd [#allocation10], %s253
          %s255 = sshll.u32 [#allocation11], 4
          %s256 = int_to_ptr.vmem [resolvable:$true] %s255
          %261 = dma.hbm_to_vmem [thread:$0]  %s5, 256, %s256, [#allocation10], 128, 128, 8
        $region28: #{_lambda_.5} parent=11 // pred_fallthru
          _
        // Predicated region
        $region29: #{_lambda_.5} parent=11 // pred_check
          %p262 = pneg %p183
        $region30: #{_lambda_.5} parent=11 // pred_check_branch
          %264 = sbr.rel (%p262) target = $region32
        $region31: #{_lambda_.5} parent=11 // pred_region
          %s266 = ssub.s32 64, 64
          %267 = vsyncadd [#allocation13], %s266
          %s269 = sshll.u32 [#allocation12], 4
          %s270 = int_to_ptr.vmem [resolvable:$true] %s269
          %272 = dma.hbm_to_vmem [thread:$0]  %s6, 64, %s270, [#allocation13]
        $region32: #{_lambda_.5} parent=11 // pred_fallthru
          _
      $region12: #{_lambda_.5} parent=5 // pred_fallthru
        _
      %p273 = scmp.lt.s32.totalorder %s26, 2
      // Predicated region
      $region33: #{_lambda_.5} parent=5 // pred_check
        %p274 = pneg %p273
      $region34: #{_lambda_.5} parent=5 // pred_check_branch
        %276 = sbr.rel (%p274) target = $region36
      $region35: #{_lambda_.5} parent=5 // pred_region
        // Predicated region
        $region37: #{_lambda_.5} parent=35 // pred_check
          %p277 = pneg %p46
        $region38: #{_lambda_.5} parent=35 // pred_check_branch
          %279 = sbr.rel (%p277) target = $region40
        $region39: #{_lambda_.5} parent=35 // pred_region
          %s280 = sand.u32 %s36, 1
          %s281 = scalar_lea.sflag [#allocation4], %s280
          %s282 = sand.u32 %s36, 1
          %s283 = smul.addr %s282, 8
          %s284 = scalar_lea.vmem [#allocation3], %s283
          %s286 = ssub.s32 128, 128
          %287 = vsyncadd %s281, %s286
          %s288 = smul.addr %s26, 4
          %s289 = smul.addr %s288, 32
          %s290 = scalar_lea.hbm %s0, %s289
          %s291 = sshll.u32 %s284, 4
          %s292 = int_to_ptr.vmem [resolvable:$true] %s291
          %297 = dma.hbm_to_vmem [thread:$0]  %s290, 128, %s292, %s281, 32, 32, 2
        $region40: #{_lambda_.5} parent=35 // pred_fallthru
          _
        // Predicated region
        $region41: #{_lambda_.5} parent=35 // pred_check
          %p298 = pneg %p72
        $region42: #{_lambda_.5} parent=35 // pred_check_branch
          %300 = sbr.rel (%p298) target = $region44
        $region43: #{_lambda_.5} parent=35 // pred_region
          %s301 = sand.u32 %s26, 1
          %s302 = scalar_lea.sflag [#allocation7], %s301
          %s303 = sand.u32 %s62, 1
          %s304 = smul.addr %s303, 8
          %s305 = scalar_lea.vmem [#allocation6], %s304
          %s307 = ssub.s32 128, 128
          %308 = vsyncadd %s302, %s307
          %s309 = smul.addr %s26, 4
          %s310 = smul.addr %s309, 32
          %s311 = scalar_lea.hbm %s1, %s310
          %s312 = sshll.u32 %s305, 4
          %s313 = int_to_ptr.vmem [resolvable:$true] %s312
          %318 = dma.hbm_to_vmem [thread:$0]  %s311, 128, %s313, %s302, 32, 32, 2
        $region44: #{_lambda_.5} parent=35 // pred_fallthru
          _
      $region36: #{_lambda_.5} parent=5 // pred_fallthru
        _
      %p319 = scmp.le.s32.totalorder 1, %s26
      %p320 = scmp.lt.s32.totalorder %s26, 3
      %p321 = pnand %p319, %p320
      %p322 = pneg %p321
      // Predicated region
      $region45: #{_lambda_.5} parent=5 // pred_check
        _
      $region46: #{_lambda_.5} parent=5 // pred_check_branch
        %324 = sbr.rel (%p321) target = $region48
      $region47: #{_lambda_.5} parent=5 // pred_region
        %s325 = ssub.s32 %s26, 1
        %s326 = sand.u32 %s39, 1
        %s327 = scalar_lea.sflag [#allocation4], %s326
        %s328 = sand.u32 %s39, 1
        %s329 = smul.addr %s328, 8
        %s330 = scalar_lea.vmem [#allocation3], %s329
        // Predicated region
        $region49: #{_lambda_.5} parent=47 // pred_check
          %p331 = pneg %p52
        $region50: #{_lambda_.5} parent=47 // pred_check_branch
          %333 = sbr.rel (%p331) target = $region52
        $region51: #{_lambda_.5} parent=47 // pred_region
          %334 = dma.done %s327, 128
        $region52: #{_lambda_.5} parent=47 // pred_fallthru
          _
        %s335 = sand.u32 %s31, 1
        %s336 = scalar_lea.sflag [#allocation7], %s335
        %s337 = sand.u32 %s65, 1
        %s338 = smul.addr %s337, 8
        %s339 = scalar_lea.vmem [#allocation6], %s338
        // Predicated region
        $region53: #{_lambda_.5} parent=47 // pred_check
          %p340 = pneg %p78
        $region54: #{_lambda_.5} parent=47 // pred_check_branch
          %342 = sbr.rel (%p340) target = $region56
        $region55: #{_lambda_.5} parent=47 // pred_region
          %343 = dma.done %s336, 128
        $region56: #{_lambda_.5} parent=47 // pred_fallthru
          _
        // Predicated region
        $region57: #{_lambda_.5} parent=47 // pred_check
          %p344 = pneg %p99
        $region58: #{_lambda_.5} parent=47 // pred_check_branch
          %346 = sbr.rel (%p344) target = $region60
        $region59: #{_lambda_.5} parent=47 // pred_region
          %347 = dma.done [#allocation7], 16
        $region60: #{_lambda_.5} parent=47 // pred_fallthru
          _
        // Predicated region
        $region61: #{_lambda_.5} parent=47 // pred_check
          %p348 = pneg %p120
        $region62: #{_lambda_.5} parent=47 // pred_check_branch
          %350 = sbr.rel (%p348) target = $region64
        $region63: #{_lambda_.5} parent=47 // pred_region
          %351 = dma.done [#allocation10], 16
        $region64: #{_lambda_.5} parent=47 // pred_fallthru
          _
        // Predicated region
        $region65: #{_lambda_.5} parent=47 // pred_check
          %p352 = pneg %p162
        $region66: #{_lambda_.5} parent=47 // pred_check_branch
          %354 = sbr.rel (%p352) target = $region68
        $region67: #{_lambda_.5} parent=47 // pred_region
          %355 = dma.done [#allocation10], 256
        $region68: #{_lambda_.5} parent=47 // pred_fallthru
          _
        // Predicated region
        $region69: #{_lambda_.5} parent=47 // pred_check
          %p356 = pneg %p183
        $region70: #{_lambda_.5} parent=47 // pred_check_branch
          %358 = sbr.rel (%p356) target = $region72
        $region71: #{_lambda_.5} parent=47 // pred_region
          %359 = dma.done [#allocation13], 64
        $region72: #{_lambda_.5} parent=47 // pred_fallthru
          _
        %s360 = sand.u32 %s39, 1
        %s361 = scalar_lea.sflag [#allocation4], %s360
        %s362 = sand.u32 %s39, 1
        %s363 = smul.addr %s362, 8
        %s364 = scalar_lea.vmem [#allocation3], %s363
        %p365 = pneg %p52
        %p366 = pneg %p49
        %s367 = sand.u32 %s31, 1
        %s368 = scalar_lea.sflag [#allocation7], %s367
        %s369 = sand.u32 %s65, 1
        %s370 = smul.addr %s369, 8
        %s371 = scalar_lea.vmem [#allocation6], %s370
        %p372 = pneg %p78
        %p373 = pneg %p75
        %p374 = pneg %p99
        %p375 = pneg %p96
        %p376 = pneg %p120
        %p377 = pneg %p117
        %p378 = pneg %p141
        %p379 = pneg %p138
        %p380 = pneg %p162
        %p381 = pneg %p159
        %p382 = pneg %p183
        %p383 = pneg %p180
        %p384 = pneg %p209
        %p385 = pneg %p206
        %s386 = sand.u32 %s196, 1
        %s387 = scalar_lea.sflag [#allocation5], %s386
        %s388 = sand.u32 %s196, 1
        %s389 = smul.addr %s388, 16
        %s390 = scalar_lea.vmem [#allocation14], %s389
        %v391 = vld [vmem:[%s330] sm:$0x3]
        %v392 = vld [vmem:[%s330 + $0x2] sm:$0x3]
        %v393 = vld [vmem:[%s330 + $0x4] sm:$0x3]
        %v394 = vld [vmem:[%s330 + $0x6] sm:$0x3]
        %v395 = vunpack.c.l.bf16 %v391
        %v396 = vunpack.c.l.bf16 %v392
        %v397 = vunpack.c.l.bf16 %v393
        %v398 = vunpack.c.l.bf16 %v394
        %v399 = vld [vmem:[%s339] sm:$0x3]
        %v400 = vld [vmem:[%s339 + $0x2] sm:$0x3]
        %v401 = vld [vmem:[%s339 + $0x4] sm:$0x3]
        %v402 = vld [vmem:[%s339 + $0x6] sm:$0x3]
        %v403 = vunpack.c.l.bf16 %v399
        %v404 = vunpack.c.l.bf16 %v400
        %v405 = vunpack.c.l.bf16 %v401
        %v406 = vunpack.c.l.bf16 %v402
        %v407 = vld [vmem:[#allocation8] sm:$0x1]
        %v408 = vld [vmem:[#allocation9] sm:$0x1]
        %v410 = vlaneseq
        %v411 = vshrl.u32 %v410, 7
        %v412 = vsub.s32 0, %v411
        %v413 = vrot.slane %v407, %v412
        %v415 = vmul.f32 %v395, %v413
        %v416 = vmul.f32 %v396, %v413
        %v417 = vmul.f32 %v397, %v413
        %v418 = vmul.f32 %v398, %v413
        %vm419 = vcmask 19456
        %v420 = vsel %vm419, %v415, 0.0
        %421 = vadd.xlane.f32.xlu0 %v420
        %v422 = vpop.xlane.xlu0 %421
        %v423 = vsel %vm419, %v416, 0.0
        %424 = vadd.xlane.f32.xlu0 %v423
        %v425 = vpop.xlane.xlu0 %424
        %v426 = vsel %vm419, %v417, 0.0
        %427 = vadd.xlane.f32.xlu0 %v426
        %v428 = vpop.xlane.xlu0 %427
        %v429 = vsel %vm419, %v418, 0.0
        %430 = vadd.xlane.f32.xlu0 %v429
        %v431 = vpop.xlane.xlu0 %430
        %v433 = vlaneseq
        %v434 = vshrl.u32 %v433, 7
        %v435 = vsub.s32 0, %v434
        %v436 = vrot.slane %v408, %v435
        %v438 = vmul.f32 %v403, %v436
        %v439 = vmul.f32 %v404, %v436
        %v440 = vmul.f32 %v405, %v436
        %v441 = vmul.f32 %v406, %v436
        %vm442 = vcmask 519168
        %v443 = vsel %vm442, %v438, 0.0
        %444 = vadd.xlane.f32.xlu0 %v443
        %v445 = vpop.xlane.xlu0 %444
        %v446 = vsel %vm442, %v439, 0.0
        %447 = vadd.xlane.f32.xlu0 %v446
        %v448 = vpop.xlane.xlu0 %447
        %v449 = vsel %vm442, %v440, 0.0
        %450 = vadd.xlane.f32.xlu0 %v449
        %v451 = vpop.xlane.xlu0 %450
        %v452 = vsel %vm442, %v441, 0.0
        %453 = vadd.xlane.f32.xlu0 %v452
        %v454 = vpop.xlane.xlu0 %453
        %v455 = vadd.f32 %v422, %v445
        %v456 = vadd.f32 %v425, %v448
        %v457 = vadd.f32 %v428, %v451
        %v458 = vadd.f32 %v431, %v454
        %v459 = vld [vmem:[#allocation2] sm:$0x1]
        %v461 = vlaneseq
        %v462 = vshrl.u32 %v461, 7
        %v463 = vsub.s32 0, %v462
        %v464 = vrot.slane %v459, %v463
        %465 = vset.pattern.permute.xlu0 0
        %466 = vperm.xlu0 %465, %v464
        %v467 = vpop.permute.xlu0 %466
        %v469 = vadd.f32 %v455, %v467
        %v470 = vadd.f32 %v456, %v467
        %v471 = vadd.f32 %v457, %v467
        %v472 = vadd.f32 %v458, %v467
        %v473 = vld [vmem:[#allocation11] sm:$0xff]
        %v474 = vld [vmem:[#allocation11 + $0x8] sm:$0xff]
        %v479 = vlaneseq
        %v480 = vand.u32 %v479, 127
        %v481 = vlaneseq
        %v482 = vshrl.u32 %v481, 7
        %v483 = vsub.s32 %v480, %v482
        %v484 = vrot.slane %v469, %v483
        %v485 = vlaneseq
        %v486 = vshrl.u32 %v485, 7
        %v487 = vsub.s32 %v480, %v486
        %v488 = vrot.slane %v470, %v487
        %v489 = vlaneseq
        %v490 = vshrl.u32 %v489, 7
        %v491 = vsub.s32 %v480, %v490
        %v492 = vrot.slane %v471, %v491
        %v493 = vlaneseq
        %v494 = vshrl.u32 %v493, 7
        %v495 = vsub.s32 %v480, %v494
        %v496 = vrot.slane %v472, %v495
        %vm497 = vcmask 1041409
        %v498 = vsel %vm497, %v488, %v484
        %vm499 = vcmask 1042434
        %v500 = vsel %vm499, %v492, %v498
        %vm501 = vcmask 1043459
        %v502 = vsel %vm501, %v496, %v500
        %vm503 = vcmask 31744
        %v505 = vsel %vm503, %v473, 0
        %v508 = vsel %vm503, %v474, 0
        %vm510 = vcmask 1043456
        %v511 = vsel %vm510, %v502, 0
        %513 = vmatprep.subr.mxu0 0.0
        %514 = vmatpush1.msra.mxu0 %v511
        %515 = vmatprep.subr.mxu0 0.0
        %516 = vmatpush1.msra.mxu0 0.0
        %517 = vmatprep.subr.mxu0 0.0
        %518 = vmatpush1.msra.mxu0 0.0
        %519 = vmatprep.subr.mxu0 0.0
        %520 = vmatpush1.msra.mxu0 0.0
        %521 = vmatprep.subr.mxu0 0.0
        %522 = vmatpush1.msra.mxu0 0.0
        %523 = vmatprep.subr.mxu0 0.0
        %524 = vmatpush1.msra.mxu0 0.0
        %525 = vmatprep.subr.mxu0 0.0
        %526 = vmatpush1.msra.mxu0 0.0
        %527 = vmatprep.subr.mxu0 0.0
        %528 = vmatpush1.msra.mxu0 0.0
        %529 = vmatprep.subr.mxu0 0.0
        %530 = vmatpush1.msra.mxu0 0.0
        %531 = vmatprep.subr.mxu0 0.0
        %532 = vmatpush1.msra.mxu0 0.0
        %533 = vmatprep.subr.mxu0 0.0
        %534 = vmatpush1.msra.mxu0 0.0
        %535 = vmatprep.subr.mxu0 0.0
        %536 = vmatpush1.msra.mxu0 0.0
        %537 = vmatprep.subr.mxu0 0.0
        %538 = vmatpush1.msra.mxu0 0.0
        %539 = vmatprep.subr.mxu0 0.0
        %540 = vmatpush1.msra.mxu0 0.0
        %541 = vmatprep.subr.mxu0 0.0
        %542 = vmatpush1.msra.mxu0 0.0
        %543 = vmatprep.subr.mxu0 0.0
        %544 = vmatpush1.msra.mxu0 0.0
        %545 = vmatprep.subr.mxu0 0.0
        %546 = vmatpush1.msra.mxu0 0.0
        %547 = vmatprep.subr.mxu0 0.0
        %548 = vmatpush1.msra.mxu0 0.0
        %549 = vmatprep.subr.mxu0 0.0
        %550 = vmatpush1.msra.mxu0 0.0
        %551 = vmatprep.subr.mxu0 0.0
        %552 = vmatpush1.msra.mxu0 0.0
        %553 = vmatprep.subr.mxu0 0.0
        %554 = vmatpush1.msra.mxu0 0.0
        %555 = vmatprep.subr.mxu0 0.0
        %556 = vmatpush1.msra.mxu0 0.0
        %557 = vmatprep.subr.mxu0 0.0
        %558 = vmatpush1.msra.mxu0 0.0
        %559 = vmatprep.subr.mxu0 0.0
        %560 = vmatpush1.msra.mxu0 0.0
        %561 = vmatprep.subr.mxu0 0.0
        %562 = vmatpush1.msra.mxu0 0.0
        %563 = vmatprep.subr.mxu0 0.0
        %564 = vmatpush1.msra.mxu0 0.0
        %565 = vmatprep.subr.mxu0 0.0
        %566 = vmatpush1.msra.mxu0 0.0
        %567 = vmatprep.subr.mxu0 0.0
        %568 = vmatpush1.msra.mxu0 0.0
        %569 = vmatprep.subr.mxu0 0.0
        %570 = vmatpush1.msra.mxu0 0.0
        %571 = vmatprep.subr.mxu0 0.0
        %572 = vmatpush1.msra.mxu0 0.0
        %573 = vmatprep.subr.mxu0 0.0
        %574 = vmatpush1.msra.mxu0 0.0
        %575 = vmatprep.subr.mxu0 0.0
        %576 = vmatpush1.msra.mxu0 0.0
        %577 = vmatprep.mubr.f32.mxu0 0.0
        %578 = vmatmul.mubr.f32.gmra.mrb[0].mxu0 %v505
        %v579 = vpop.f32.mrb[0].mxu0
        %v580 = vadd.f32 0.0, %v579
        %v581 = vpop.f32.mrb[0].mxu0
        %582 = vmatprep.mubr.f32.mxu0 0.0
        %583 = vmatmul.mubr.f32.gmra.mrb[0].mxu0 %v508
        %v584 = vpop.f32.mrb[0].mxu0
        %v585 = vadd.f32 0.0, %v584
        %v586 = vpop.f32.mrb[0].mxu0
        %587 = vdwg.mxu0
        %v588 = vld [vmem:[#allocation12] sm:$0xf]
        %v590 = vsel %vm503, %v580, 0
        %v593 = vsel %vm503, %v585, 0
        %v596 = vsel %vm510, %v588, 0
        %598 = vmatprep.subr.mxu0 0.0
        %599 = vmatpush1.msra.mxu0 %v596
        %600 = vmatprep.subr.mxu0 0.0
        %601 = vmatpush1.msra.mxu0 0.0
        %602 = vmatprep.subr.mxu0 0.0
        %603 = vmatpush1.msra.mxu0 0.0
        %604 = vmatprep.subr.mxu0 0.0
        %605 = vmatpush1.msra.mxu0 0.0
        %606 = vmatprep.subr.mxu0 0.0
        %607 = vmatpush1.msra.mxu0 0.0
        %608 = vmatprep.subr.mxu0 0.0
        %609 = vmatpush1.msra.mxu0 0.0
        %610 = vmatprep.subr.mxu0 0.0
        %611 = vmatpush1.msra.mxu0 0.0
        %612 = vmatprep.subr.mxu0 0.0
        %613 = vmatpush1.msra.mxu0 0.0
        %614 = vmatprep.subr.mxu0 0.0
        %615 = vmatpush1.msra.mxu0 0.0
        %616 = vmatprep.subr.mxu0 0.0
        %617 = vmatpush1.msra.mxu0 0.0
        %618 = vmatprep.subr.mxu0 0.0
        %619 = vmatpush1.msra.mxu0 0.0
        %620 = vmatprep.subr.mxu0 0.0
        %621 = vmatpush1.msra.mxu0 0.0
        %622 = vmatprep.subr.mxu0 0.0
        %623 = vmatpush1.msra.mxu0 0.0
        %624 = vmatprep.subr.mxu0 0.0
        %625 = vmatpush1.msra.mxu0 0.0
        %626 = vmatprep.subr.mxu0 0.0
        %627 = vmatpush1.msra.mxu0 0.0
        %628 = vmatprep.subr.mxu0 0.0
        %629 = vmatpush1.msra.mxu0 0.0
        %630 = vmatprep.subr.mxu0 0.0
        %631 = vmatpush1.msra.mxu0 0.0
        %632 = vmatprep.subr.mxu0 0.0
        %633 = vmatpush1.msra.mxu0 0.0
        %634 = vmatprep.subr.mxu0 0.0
        %635 = vmatpush1.msra.mxu0 0.0
        %636 = vmatprep.subr.mxu0 0.0
        %637 = vmatpush1.msra.mxu0 0.0
        %638 = vmatprep.subr.mxu0 0.0
        %639 = vmatpush1.msra.mxu0 0.0
        %640 = vmatprep.subr.mxu0 0.0
        %641 = vmatpush1.msra.mxu0 0.0
        %642 = vmatprep.subr.mxu0 0.0
        %643 = vmatpush1.msra.mxu0 0.0
        %644 = vmatprep.subr.mxu0 0.0
        %645 = vmatpush1.msra.mxu0 0.0
        %646 = vmatprep.subr.mxu0 0.0
        %647 = vmatpush1.msra.mxu0 0.0
        %648 = vmatprep.subr.mxu0 0.0
        %649 = vmatpush1.msra.mxu0 0.0
        %650 = vmatprep.subr.mxu0 0.0
        %651 = vmatpush1.msra.mxu0 0.0
        %652 = vmatprep.subr.mxu0 0.0
        %653 = vmatpush1.msra.mxu0 0.0
        %654 = vmatprep.subr.mxu0 0.0
        %655 = vmatpush1.msra.mxu0 0.0
        %656 = vmatprep.subr.mxu0 0.0
        %657 = vmatpush1.msra.mxu0 0.0
        %658 = vmatprep.subr.mxu0 0.0
        %659 = vmatpush1.msra.mxu0 0.0
        %660 = vmatprep.subr.mxu0 0.0
        %661 = vmatpush1.msra.mxu0 0.0
        %662 = vmatprep.mubr.f32.mxu0 0.0
        %663 = vmatmul.mubr.f32.gmra.mrb[0].mxu0 %v590
        %v664 = vpop.f32.mrb[0].mxu0
        %v665 = vadd.f32 0.0, %v664
        %v666 = vpop.f32.mrb[0].mxu0
        %667 = vmatprep.mubr.f32.mxu0 0.0
        %668 = vmatmul.mubr.f32.gmra.mrb[0].mxu0 %v593
        %v669 = vpop.f32.mrb[0].mxu0
        %v670 = vadd.f32 0.0, %v669
        %v671 = vpop.f32.mrb[0].mxu0
        %672 = vdwg.mxu0
        %vm673 = vcmask 130048
        %v674 = vsel %vm673, %v665, inf
        %v675 = vsel %vm673, %v670, inf
        %v676 = vmin.f32 %v674, %v675
        %677 = vmin.xlane.f32.xlu0 %v676
        %v678 = vpop.xlane.xlu0 %677
        %v679 = vrot.slane %v678, 4
        %v680 = vmin.f32 %v678, %v679
        %v681 = vrot.slane %v680, 2
        %v682 = vmin.f32 %v680, %v681
        %v683 = vrot.slane %v682, 1
        %v684 = vmin.f32 %v682, %v683
        %s685 = vtos %v684
        %v686 = vstv %s685
        %v687 = vsel %vm673, %v665, -inf
        %v688 = vsel %vm673, %v670, -inf
        %v689 = vmax.f32 %v687, %v688
        %690 = vmax.xlane.f32.xlu0 %v689
        %v691 = vpop.xlane.xlu0 %690
        %v692 = vrot.slane %v691, 4
        %v693 = vmax.f32 %v691, %v692
        %v694 = vrot.slane %v693, 2
        %v695 = vmax.f32 %v693, %v694
        %v696 = vrot.slane %v695, 1
        %v697 = vmax.f32 %v695, %v696
        %s698 = vtos %v697
        %v699 = vstv %s698
        %v700 = vsub.f32 %v699, %v686
        %v701 = vadd.f32 %v700, 1e-09
        %v702 = vrcp.pop %v701
        %v703 = vsub.f32 %v665, %v686
        %v704 = vsub.f32 %v670, %v686
        %v705 = vmul.f32 %v703, %v702
        %v706 = vmul.f32 %v704, %v702
        %707 = vst.msk [vmem:[%s390] sm:$0xff] %vm673, %v705
        %708 = vst.msk [vmem:[%s390 + $0x8] sm:$0xff] %vm673, %v706
        %s709 = sand.u32 %s196, 1
        %s710 = scalar_lea.sflag [#allocation5], %s709
        %s711 = sand.u32 %s196, 1
        %s712 = smul.addr %s711, 16
        %s713 = scalar_lea.vmem [#allocation14], %s712
        // Predicated region
        $region73: #{_lambda_.5} parent=47 // pred_check
          %p714 = pneg %p206
        $region74: #{_lambda_.5} parent=47 // pred_check_branch
          %716 = sbr.rel (%p714) target = $region76
        $region75: #{_lambda_.5} parent=47 // pred_region
          %s718 = ssub.s32 256, 256
          %719 = vsyncadd %s710, %s718
          %s720 = smul.addr %s31, 2
          %s721 = smul.addr %s720, 128
          %s722 = scalar_lea.hbm %s7, %s721
          %s723 = sshll.u32 %s713, 4
          %s724 = int_to_ptr.vmem [resolvable:$true] %s723
          %729 = dma.vmem_to_hbm [thread:$0]  %s724, 256, %s722, %s710, 128, 128, 8
        $region76: #{_lambda_.5} parent=47 // pred_fallthru
          _
      $region48: #{_lambda_.5} parent=5 // pred_fallthru
        _
      %p730 = scmp.le.s32.totalorder 2, %s26
      // Predicated region
      $region77: #{_lambda_.5} parent=5 // pred_check
        %p731 = pneg %p730
      $region78: #{_lambda_.5} parent=5 // pred_check_branch
        %733 = sbr.rel (%p731) target = $region80
      $region79: #{_lambda_.5} parent=5 // pred_region
        %s734 = ssub.s32 %s26, 2
        // Predicated region
        $region81: #{_lambda_.5} parent=79 // pred_check
          %p735 = pneg %p212
        $region82: #{_lambda_.5} parent=79 // pred_check_branch
          %737 = sbr.rel (%p735) target = $region84
        $region83: #{_lambda_.5} parent=79 // pred_region
          %s738 = sand.u32 %s197, 1
          %s739 = scalar_lea.sflag [#allocation5], %s738
          %s740 = sand.u32 %s197, 1
          %s741 = smul.addr %s740, 16
          %s742 = scalar_lea.vmem [#allocation14], %s741
          %743 = dma.done %s739, 256
        $region84: #{_lambda_.5} parent=79 // pred_fallthru
          _
      $region80: #{_lambda_.5} parent=5 // pred_fallthru
        _
    $region6: #{_lambda_.5} parent=1 // loop_footer
      %s30 = sadd.s32 1, %s26
    $region7: #{_lambda_.5} parent=1 // loop_footer_branch
      %25 = sbr.rel target = $region3
    $region8: #{_lambda_.5} parent=1 // loop_exit
      _
    %744 = vsyncpa [#allocation4], 1
    %s745 = scalar_lea.sflag [#allocation4], 1
    %746 = vsyncpa %s745, 1
    %747 = vsyncpa [#allocation7], 1
    %s748 = scalar_lea.sflag [#allocation7], 1
    %749 = vsyncpa %s748, 1
    %750 = vsyncpa [#allocation10], 1
    %751 = vsyncpa [#allocation13], 1
    %752 = vsyncpa [#allocation5], 1
    %s753 = scalar_lea.sflag [#allocation5], 1
    %754 = vsyncpa %s753, 1

</llo_original>
